<compile_context>
chip_gen: v6e
topology: v6e:2x2x1
jax: 0.10.0
libtpu: 0.0.40
codegen_flags: <defaults>
</compile_context>

<pallas_src>
import functools

import jax
import jax.numpy as jnp
from jax import lax
from jax.experimental import pallas as pl
from jax.experimental.pallas import tpu as pltpu

KSIZE = 7
PAD = (KSIZE - 1) // 2  # 3

_STATIC_CHUNKS = 16     # above this many channel chunks, switch to fori_loop


def _round_up(v, m):
    return ((v + m - 1) // m) * m


def _spatial_gate_kernel(w_ref, b_ref, x_ref, o_ref,
                         pflat_ref, p2d_ref, sdj_ref, *, C, H, W, CB):
    HW = H * W
    Hp = H + 2 * PAD
    Wp = p2d_ref.shape[2]
    nfull = C // CB
    rem = C - nfull * CB

    # ---- 0. zero the padded 2-D pooled scratch -------------------------------
    # The pad ring (and the columns >= PAD+W) must be zero every grid step:
    # it implements the conv's 'same' padding and is also re-used as staging
    # for the scale relayout of the previous step.
    p2d_ref[...] = jnp.zeros((2, Hp, Wp), jnp.float32)

    # ---- 1. ChannelPool: running max / sum over C on lane-dense (CB, HW) chunks
    first = x_ref[0, 0:CB, :]
    vmax = first                              # max reduces exactly in any dtype
    vsum = first.astype(jnp.float32)          # sum accumulates in f32
    if nfull - 1 <= _STATIC_CHUNKS:
        for i in range(1, nfull):
            blk = x_ref[0, i * CB:(i + 1) * CB, :]
            vmax = jnp.maximum(vmax, blk)
            vsum = vsum + blk.astype(jnp.float32)
    else:
        def pool_body(i, carry):
            m, s = carry
            start = pl.multiple_of(i * CB, CB)
            blk = x_ref[0, pl.ds(start, CB), :]
            return jnp.maximum(m, blk), s + blk.astype(jnp.float32)
        vmax, vsum = lax.fori_loop(1, nfull, pool_body, (vmax, vsum), unroll=4)

    # single sublane reduction at the end (not one per chunk)
    vmax_r = jnp.max(vmax, axis=0, keepdims=True).astype(jnp.float32)   # (1, HW)
    vsum_r = jnp.sum(vsum, axis=0, keepdims=True)                       # (1, HW)
    if rem:
        tail = x_ref[0, nfull * CB:C, :]                                # (rem, HW)
        vmax_r = jnp.maximum(
            vmax_r, jnp.max(tail, axis=0, keepdims=True).astype(jnp.float32))
        vsum_r = vsum_r + jnp.sum(tail.astype(jnp.float32), axis=0, keepdims=True)
    vmean_r = vsum_r * (1.0 / C)

    # ---- 2. relayout pooled maps (1, HW) -> zero-padded 2-D (Hp, Wp) tiles ----
    pflat_ref[0:1, :] = vmax_r
    pflat_ref[1:2, :] = vmean_r
    for i in range(H):
        p2d_ref[0, PAD + i:PAD + i + 1, PAD:PAD + W] = \
            pflat_ref[0:1, i * W:(i + 1) * W]
        p2d_ref[1, PAD + i:PAD + i + 1, PAD:PAD + W] = \
            pflat_ref[1:2, i * W:(i + 1) * W]

    # ---- 3. 7x7 conv (2 -> 1 channels) on dense 2-D tiles ---------------------
    # Vertical taps are aligned, lane-dense row-slab reads (sublane offset di).
    # The horizontal shift is applied once per dj through the sdj scratch
    # (7 aligned stores + 7 lane-offset reads, vs 98 misaligned slices in v2).
    acc = None                                            # (H, W) f32
    for dj in range(KSIZE):
        s_dj = None                                       # (H, Wp) f32
        for di in range(KSIZE):
            t0 = p2d_ref[0, di:di + H, :]                 # max-pool channel
            t1 = p2d_ref[1, di:di + H, :]                 # mean-pool channel
            w0 = w_ref[di * KSIZE + dj]                   # OIHW flat, c=0
            w1 = w_ref[KSIZE * KSIZE + di * KSIZE + dj]   # OIHW flat, c=1
            term = t0 * w0 + t1 * w1
            s_dj = term if s_dj is None else s_dj + term
        sdj_ref[...] = s_dj                               # aligned (H, Wp) store
        shifted = sdj_ref[:, dj:dj + W]                   # columns j+dj -> (H, W)
        acc = shifted if acc is None else acc + shifted

    scale2d = jax.nn.sigmoid(acc + b_ref[0])              # (H, W) f32

    # ---- 4. relayout scale (H, W) -> flat (1, HW) ------------------------------
    # Stage rows through p2d channel 0 (pooled data is no longer needed) so the
    # per-row extraction is a plain strided load rather than a value sublane pick.
    p2d_ref[0, 0:H, 0:W] = scale2d
    for i in range(H):
        pflat_ref[0:1, i * W:(i + 1) * W] = p2d_ref[0, i:i + 1, 0:W]
    scale = pflat_ref[0:1, :].astype(o_ref.dtype)         # (1, HW)

    # ---- 5. gate: out = x * sigmoid(s), streamed per channel chunk ------------
    scale_b = jnp.broadcast_to(scale, (CB, HW))           # hoisted broadcast
    if nfull <= _STATIC_CHUNKS:
        for i in range(nfull):
            o_ref[0, i * CB:(i + 1) * CB, :] = \
                x_ref[0, i * CB:(i + 1) * CB, :] * scale_b
    else:
        def gate_body(i, carry):
            start = pl.multiple_of(i * CB, CB)
            o_ref[0, pl.ds(start, CB), :] = x_ref[0, pl.ds(start, CB), :] * scale_b
            return carry
        lax.fori_loop(0, nfull, gate_body, 0, unroll=4)
    if rem:
        o_ref[0, nfull * CB:C, :] = \
            x_ref[0, nfull * CB:C, :] * jnp.broadcast_to(scale, (rem, HW))


def spatial_gate(x, conv_w, conv_b):
    """x: (N, C, H, W); conv_w: (1, 2, 7, 7) OIHW; conv_b: (1,)."""
    N, C, H, W = x.shape
    HW = H * W
    Hp = H + 2 * PAD
    Wp = _round_up(W + 2 * PAD, 128)

    # dtype-aware channel chunk: 8 rows for f32, 16 for bf16 (one packed vreg group)
    CB = min(C, max(8, 32 // x.dtype.itemsize))

    x_flat = x.reshape(N, C, HW)
    w_flat = conv_w.reshape(-1).astype(jnp.float32)            # (98,)
    b = conv_b.astype(jnp.float32)                             # (1,)

    kernel = functools.partial(_spatial_gate_kernel, C=C, H=H, W=W, CB=CB)

    # VMEM budget: double-buffered in + out blocks + scratch + slack; cap at
    # ~80% of the physical per-core VMEM (generation-aware).
    block_bytes = C * HW * x.dtype.itemsize
    scratch_bytes = (2 * HW + 2 * Hp * Wp + H * Wp) * 4
    est = 4 * block_bytes + scratch_bytes + (2 << 20)
    try:
        cap = int(0.8 * pltpu.get_tpu_info().vmem_capacity_bytes)
    except Exception:
        cap = int(0.8 * (128 << 20))
    vmem_limit = int(min(max(est, 32 << 20), cap))

    cost = pl.CostEstimate(
        flops=int(N * HW * (3 * C + 4 * KSIZE * KSIZE + 8)),
        transcendentals=int(N * HW),
        bytes_accessed=int(2 * N * C * HW * x.dtype.itemsize + w_flat.size * 4 + 4),
    )

    out_flat = pl.pallas_call(
        kernel,
        out_shape=jax.ShapeDtypeStruct((N, C, HW), x.dtype),
        grid_spec=pltpu.PrefetchScalarGridSpec(
            num_scalar_prefetch=0,
            grid=(N,),
            in_specs=[
                pl.BlockSpec(memory_space=pltpu.SMEM),              # conv weights
                pl.BlockSpec(memory_space=pltpu.SMEM),              # bias
                pl.BlockSpec((1, C, HW), lambda n: (n, 0, 0)),      # x (lane-dense)
            ],
            out_specs=pl.BlockSpec((1, C, HW), lambda n: (n, 0, 0)),
            scratch_shapes=[
                pltpu.VMEM((2, HW), jnp.float32),                   # flat pooled / scale
                pltpu.VMEM((2, Hp, Wp), jnp.float32),               # padded 2-D pooled maps
                pltpu.VMEM((H, Wp), jnp.float32),                   # per-dj conv partial
            ],
        ),
        compiler_params=pltpu.CompilerParams(
            dimension_semantics=("parallel",),
            vmem_limit_bytes=vmem_limit,
        ),
        cost_estimate=cost,
    )(w_flat, b, x_flat)

    return out_flat.reshape(N, C, H, W)


def spatial_gate_reference(x, conv_w, conv_b):
    """Pure-JAX reference (mirrors the PyTorch forward)."""
    x_max = jnp.max(x, axis=1, keepdims=True)
    x_mean = jnp.mean(x, axis=1, keepdims=True)
    pooled = jnp.concatenate([x_max, x_mean], axis=1)            # (N, 2, H, W)
    s = jax.lax.conv_general_dilated(
        pooled, conv_w,
        window_strides=(1, 1),
        padding=[(PAD, PAD), (PAD, PAD)],
        dimension_numbers=("NCHW", "OIHW", "NCHW"),
    ) + conv_b[None, :, None, None]                              # (N, 1, H, W)
    return x * jax.nn.sigmoid(s)


if __name__ == "__main__":
    key = jax.random.PRNGKey(0)
    k_x, k_w, k_b = jax.random.split(key, 3)

    N, C, H, W = 2, 4, 16, 16
    x = jax.random.normal(k_x, (N, C, H, W), dtype=jnp.float32)

    # Deterministic synthetic parameters for Conv2d(2, 1, kernel_size=7, bias=True).
    fan_in = 2 * KSIZE * KSIZE
    bound = 1.0 / (fan_in ** 0.5)
    conv_w = jax.random.uniform(k_w, (1, 2, KSIZE, KSIZE), jnp.float32,
                                minval=-bound, maxval=bound)
    conv_b = jax.random.uniform(k_b, (1,), jnp.float32, minval=-bound, maxval=bound)

    out = spatial_gate(x, conv_w, conv_b)
    out = jax.block_until_ready(out)

    ref = spatial_gate_reference(x, conv_w, conv_b)
    assert out.shape == (N, C, H, W)
    assert jnp.allclose(out, ref, atol=1e-5, rtol=1e-5), (
        f"max abs err = {jnp.max(jnp.abs(out - ref))}")

    print("KERNEL_OK")
</pallas_src>

<mosaic_0001>
module attributes {stable_mosaic.version = 11 : i64} {
  func.func @_spatial_gate_kernel(%arg0: i32, %arg1: memref<98xf32, #tpu.memory_space<smem>>, %arg2: memref<1xf32, #tpu.memory_space<smem>>, %arg3: memref<1x4x256xf32, #tpu.memory_space<vmem>>, %arg4: memref<1x4x256xf32, #tpu.memory_space<vmem>>, %arg5: memref<2x256xf32, #tpu.memory_space<vmem>>, %arg6: memref<2x22x128xf32, #tpu.memory_space<vmem>>, %arg7: memref<16x128xf32, #tpu.memory_space<vmem>>) attributes {dimension_semantics = [#tpu.dimension_semantics<parallel>], iteration_bounds = array<i64: 2>, scalar_prefetch = 0 : i64, scratch_operands = 3 : i64, tpu.core_type = #tpu.core_type<tc>, window_params = [{transform_indices = @transform_0, window_bounds = array<i64: 98>}, {transform_indices = @transform_1, window_bounds = array<i64: 1>}, {transform_indices = @transform_2, window_bounds = array<i64: 1, 4, 256>}, {transform_indices = @transform_3, window_bounds = array<i64: 1, 4, 256>}]} {
    %cst = arith.constant 0.000000e+00 : f32
    %0 = vector.broadcast %cst : f32 to vector<2x22x128xf32>
    %c0 = arith.constant 0 : index
    %c0_0 = arith.constant 0 : index
    %c0_1 = arith.constant 0 : index
    %1 = vector.load %arg6[%c0, %c0_0, %c0_1] : memref<2x22x128xf32, #tpu.memory_space<vmem>>, vector<2x22x128xf32>
    tpu.vector_store %arg6[%c0, %c0_0, %c0_1], %0 {strides = array<i32>} : memref<2x22x128xf32, #tpu.memory_space<vmem>>, vector<2x22x128xf32>,
    %c0_2 = arith.constant 0 : index
    %c0_3 = arith.constant 0 : index
    %c0_4 = arith.constant 0 : index
    %2 = vector.load %arg3[%c0_2, %c0_3, %c0_4] : memref<1x4x256xf32, #tpu.memory_space<vmem>>, vector<1x4x256xf32>
    %3 = vector.shape_cast %2 : vector<1x4x256xf32> to vector<4x256xf32>
    %cst_5 = arith.constant dense<0xFF800000> : vector<256xf32>
    %4 = vector.multi_reduction <maximumf>, %3, %cst_5 [0] : vector<4x256xf32> to vector<256xf32>
    %5 = vector.shape_cast %4 : vector<256xf32> to vector<1x256xf32>
    %cst_6 = arith.constant dense<0.000000e+00> : vector<256xf32>
    %6 = vector.multi_reduction <add>, %3, %cst_6 [0] : vector<4x256xf32> to vector<256xf32>
    %7 = vector.shape_cast %6 : vector<256xf32> to vector<1x256xf32>
    %cst_7 = arith.constant 2.500000e-01 : f32
    %8 = vector.broadcast %cst_7 : f32 to vector<1x256xf32>
    %9 = arith.mulf %7, %8 : vector<1x256xf32>
    %c0_8 = arith.constant 0 : index
    %c0_9 = arith.constant 0 : index
    %10 = vector.load %arg5[%c0_8, %c0_9] : memref<2x256xf32, #tpu.memory_space<vmem>>, vector<1x256xf32>
    tpu.vector_store %arg5[%c0_8, %c0_9], %5 {strides = array<i32>} : memref<2x256xf32, #tpu.memory_space<vmem>>, vector<1x256xf32>,
    %c1 = arith.constant 1 : index
    %c0_10 = arith.constant 0 : index
    %11 = vector.load %arg5[%c1, %c0_10] : memref<2x256xf32, #tpu.memory_space<vmem>>, vector<1x256xf32>
    tpu.vector_store %arg5[%c1, %c0_10], %9 {strides = array<i32>} : memref<2x256xf32, #tpu.memory_space<vmem>>, vector<1x256xf32>,
    %c0_11 = arith.constant 0 : index
    %c0_12 = arith.constant 0 : index
    %12 = vector.load %arg5[%c0_11, %c0_12] : memref<2x256xf32, #tpu.memory_space<vmem>>, vector<1x16xf32>
    %c0_13 = arith.constant 0 : index
    %c3 = arith.constant 3 : index
    %c3_14 = arith.constant 3 : index
    %13 = vector.load %arg6[%c0_13, %c3, %c3_14] : memref<2x22x128xf32, #tpu.memory_space<vmem>>, vector<1x1x16xf32>
    %14 = vector.shape_cast %13 : vector<1x1x16xf32> to vector<1x16xf32>
    %15 = vector.shape_cast %12 : vector<1x16xf32> to vector<1x1x16xf32>
    tpu.vector_store %arg6[%c0_13, %c3, %c3_14], %15 {strides = array<i32>} : memref<2x22x128xf32, #tpu.memory_space<vmem>>, vector<1x1x16xf32>,
    %c1_15 = arith.constant 1 : index
    %c0_16 = arith.constant 0 : index
    %16 = vector.load %arg5[%c1_15, %c0_16] : memref<2x256xf32, #tpu.memory_space<vmem>>, vector<1x16xf32>
    %c1_17 = arith.constant 1 : index
    %c3_18 = arith.constant 3 : index
    %c3_19 = arith.constant 3 : index
    %17 = vector.load %arg6[%c1_17, %c3_18, %c3_19] : memref<2x22x128xf32, #tpu.memory_space<vmem>>, vector<1x1x16xf32>
    %18 = vector.shape_cast %17 : vector<1x1x16xf32> to vector<1x16xf32>
    %19 = vector.shape_cast %16 : vector<1x16xf32> to vector<1x1x16xf32>
    tpu.vector_store %arg6[%c1_17, %c3_18, %c3_19], %19 {strides = array<i32>} : memref<2x22x128xf32, #tpu.memory_space<vmem>>, vector<1x1x16xf32>,
    %c0_20 = arith.constant 0 : index
    %c16 = arith.constant 16 : index
    %20 = vector.load %arg5[%c0_20, %c16] : memref<2x256xf32, #tpu.memory_space<vmem>>, vector<1x16xf32>
    %c0_21 = arith.constant 0 : index
    %c4 = arith.constant 4 : index
    %c3_22 = arith.constant 3 : index
    %21 = vector.load %arg6[%c0_21, %c4, %c3_22] : memref<2x22x128xf32, #tpu.memory_space<vmem>>, vector<1x1x16xf32>
    %22 = vector.shape_cast %21 : vector<1x1x16xf32> to vector<1x16xf32>
    %23 = vector.shape_cast %20 : vector<1x16xf32> to vector<1x1x16xf32>
    tpu.vector_store %arg6[%c0_21, %c4, %c3_22], %23 {strides = array<i32>} : memref<2x22x128xf32, #tpu.memory_space<vmem>>, vector<1x1x16xf32>,
    %c1_23 = arith.constant 1 : index
    %c16_24 = arith.constant 16 : index
    %24 = vector.load %arg5[%c1_23, %c16_24] : memref<2x256xf32, #tpu.memory_space<vmem>>, vector<1x16xf32>
    %c1_25 = arith.constant 1 : index
    %c4_26 = arith.constant 4 : index
    %c3_27 = arith.constant 3 : index
    %25 = vector.load %arg6[%c1_25, %c4_26, %c3_27] : memref<2x22x128xf32, #tpu.memory_space<vmem>>, vector<1x1x16xf32>
    %26 = vector.shape_cast %25 : vector<1x1x16xf32> to vector<1x16xf32>
    %27 = vector.shape_cast %24 : vector<1x16xf32> to vector<1x1x16xf32>
    tpu.vector_store %arg6[%c1_25, %c4_26, %c3_27], %27 {strides = array<i32>} : memref<2x22x128xf32, #tpu.memory_space<vmem>>, vector<1x1x16xf32>,
    %c0_28 = arith.constant 0 : index
    %c32 = arith.constant 32 : index
    %28 = vector.load %arg5[%c0_28, %c32] : memref<2x256xf32, #tpu.memory_space<vmem>>, vector<1x16xf32>
    %c0_29 = arith.constant 0 : index
    %c5 = arith.constant 5 : index
    %c3_30 = arith.constant 3 : index
    %29 = vector.load %arg6[%c0_29, %c5, %c3_30] : memref<2x22x128xf32, #tpu.memory_space<vmem>>, vector<1x1x16xf32>
    %30 = vector.shape_cast %29 : vector<1x1x16xf32> to vector<1x16xf32>
    %31 = vector.shape_cast %28 : vector<1x16xf32> to vector<1x1x16xf32>
    tpu.vector_store %arg6[%c0_29, %c5, %c3_30], %31 {strides = array<i32>} : memref<2x22x128xf32, #tpu.memory_space<vmem>>, vector<1x1x16xf32>,
    %c1_31 = arith.constant 1 : index
    %c32_32 = arith.constant 32 : index
    %32 = vector.load %arg5[%c1_31, %c32_32] : memref<2x256xf32, #tpu.memory_space<vmem>>, vector<1x16xf32>
    %c1_33 = arith.constant 1 : index
    %c5_34 = arith.constant 5 : index
    %c3_35 = arith.constant 3 : index
    %33 = vector.load %arg6[%c1_33, %c5_34, %c3_35] : memref<2x22x128xf32, #tpu.memory_space<vmem>>, vector<1x1x16xf32>
    %34 = vector.shape_cast %33 : vector<1x1x16xf32> to vector<1x16xf32>
    %35 = vector.shape_cast %32 : vector<1x16xf32> to vector<1x1x16xf32>
    tpu.vector_store %arg6[%c1_33, %c5_34, %c3_35], %35 {strides = array<i32>} : memref<2x22x128xf32, #tpu.memory_space<vmem>>, vector<1x1x16xf32>,
    %c0_36 = arith.constant 0 : index
    %c48 = arith.constant 48 : index
    %36 = vector.load %arg5[%c0_36, %c48] : memref<2x256xf32, #tpu.memory_space<vmem>>, vector<1x16xf32>
    %c0_37 = arith.constant 0 : index
    %c6 = arith.constant 6 : index
    %c3_38 = arith.constant 3 : index
    %37 = vector.load %arg6[%c0_37, %c6, %c3_38] : memref<2x22x128xf32, #tpu.memory_space<vmem>>, vector<1x1x16xf32>
    %38 = vector.shape_cast %37 : vector<1x1x16xf32> to vector<1x16xf32>
    %39 = vector.shape_cast %36 : vector<1x16xf32> to vector<1x1x16xf32>
    tpu.vector_store %arg6[%c0_37, %c6, %c3_38], %39 {strides = array<i32>} : memref<2x22x128xf32, #tpu.memory_space<vmem>>, vector<1x1x16xf32>,
    %c1_39 = arith.constant 1 : index
    %c48_40 = arith.constant 48 : index
    %40 = vector.load %arg5[%c1_39, %c48_40] : memref<2x256xf32, #tpu.memory_space<vmem>>, vector<1x16xf32>
    %c1_41 = arith.constant 1 : index
    %c6_42 = arith.constant 6 : index
    %c3_43 = arith.constant 3 : index
    %41 = vector.load %arg6[%c1_41, %c6_42, %c3_43] : memref<2x22x128xf32, #tpu.memory_space<vmem>>, vector<1x1x16xf32>
    %42 = vector.shape_cast %41 : vector<1x1x16xf32> to vector<1x16xf32>
    %43 = vector.shape_cast %40 : vector<1x16xf32> to vector<1x1x16xf32>
    tpu.vector_store %arg6[%c1_41, %c6_42, %c3_43], %43 {strides = array<i32>} : memref<2x22x128xf32, #tpu.memory_space<vmem>>, vector<1x1x16xf32>,
    %c0_44 = arith.constant 0 : index
    %c64 = arith.constant 64 : index
    %44 = vector.load %arg5[%c0_44, %c64] : memref<2x256xf32, #tpu.memory_space<vmem>>, vector<1x16xf32>
    %c0_45 = arith.constant 0 : index
    %c7 = arith.constant 7 : index
    %c3_46 = arith.constant 3 : index
    %45 = vector.load %arg6[%c0_45, %c7, %c3_46] : memref<2x22x128xf32, #tpu.memory_space<vmem>>, vector<1x1x16xf32>
    %46 = vector.shape_cast %45 : vector<1x1x16xf32> to vector<1x16xf32>
    %47 = vector.shape_cast %44 : vector<1x16xf32> to vector<1x1x16xf32>
    tpu.vector_store %arg6[%c0_45, %c7, %c3_46], %47 {strides = array<i32>} : memref<2x22x128xf32, #tpu.memory_space<vmem>>, vector<1x1x16xf32>,
    %c1_47 = arith.constant 1 : index
    %c64_48 = arith.constant 64 : index
    %48 = vector.load %arg5[%c1_47, %c64_48] : memref<2x256xf32, #tpu.memory_space<vmem>>, vector<1x16xf32>
    %c1_49 = arith.constant 1 : index
    %c7_50 = arith.constant 7 : index
    %c3_51 = arith.constant 3 : index
    %49 = vector.load %arg6[%c1_49, %c7_50, %c3_51] : memref<2x22x128xf32, #tpu.memory_space<vmem>>, vector<1x1x16xf32>
    %50 = vector.shape_cast %49 : vector<1x1x16xf32> to vector<1x16xf32>
    %51 = vector.shape_cast %48 : vector<1x16xf32> to vector<1x1x16xf32>
    tpu.vector_store %arg6[%c1_49, %c7_50, %c3_51], %51 {strides = array<i32>} : memref<2x22x128xf32, #tpu.memory_space<vmem>>, vector<1x1x16xf32>,
    %c0_52 = arith.constant 0 : index
    %c80 = arith.constant 80 : index
    %52 = vector.load %arg5[%c0_52, %c80] : memref<2x256xf32, #tpu.memory_space<vmem>>, vector<1x16xf32>
    %c0_53 = arith.constant 0 : index
    %c8 = arith.constant 8 : index
    %c3_54 = arith.constant 3 : index
    %53 = vector.load %arg6[%c0_53, %c8, %c3_54] : memref<2x22x128xf32, #tpu.memory_space<vmem>>, vector<1x1x16xf32>
    %54 = vector.shape_cast %53 : vector<1x1x16xf32> to vector<1x16xf32>
    %55 = vector.shape_cast %52 : vector<1x16xf32> to vector<1x1x16xf32>
    tpu.vector_store %arg6[%c0_53, %c8, %c3_54], %55 {strides = array<i32>} : memref<2x22x128xf32, #tpu.memory_space<vmem>>, vector<1x1x16xf32>,
    %c1_55 = arith.constant 1 : index
    %c80_56 = arith.constant 80 : index
    %56 = vector.load %arg5[%c1_55, %c80_56] : memref<2x256xf32, #tpu.memory_space<vmem>>, vector<1x16xf32>
    %c1_57 = arith.constant 1 : index
    %c8_58 = arith.constant 8 : index
    %c3_59 = arith.constant 3 : index
    %57 = vector.load %arg6[%c1_57, %c8_58, %c3_59] : memref<2x22x128xf32, #tpu.memory_space<vmem>>, vector<1x1x16xf32>
    %58 = vector.shape_cast %57 : vector<1x1x16xf32> to vector<1x16xf32>
    %59 = vector.shape_cast %56 : vector<1x16xf32> to vector<1x1x16xf32>
    tpu.vector_store %arg6[%c1_57, %c8_58, %c3_59], %59 {strides = array<i32>} : memref<2x22x128xf32, #tpu.memory_space<vmem>>, vector<1x1x16xf32>,
    %c0_60 = arith.constant 0 : index
    %c96 = arith.constant 96 : index
    %60 = vector.load %arg5[%c0_60, %c96] : memref<2x256xf32, #tpu.memory_space<vmem>>, vector<1x16xf32>
    %c0_61 = arith.constant 0 : index
    %c9 = arith.constant 9 : index
    %c3_62 = arith.constant 3 : index
    %61 = vector.load %arg6[%c0_61, %c9, %c3_62] : memref<2x22x128xf32, #tpu.memory_space<vmem>>, vector<1x1x16xf32>
    %62 = vector.shape_cast %61 : vector<1x1x16xf32> to vector<1x16xf32>
    %63 = vector.shape_cast %60 : vector<1x16xf32> to vector<1x1x16xf32>
    tpu.vector_store %arg6[%c0_61, %c9, %c3_62], %63 {strides = array<i32>} : memref<2x22x128xf32, #tpu.memory_space<vmem>>, vector<1x1x16xf32>,
    %c1_63 = arith.constant 1 : index
    %c96_64 = arith.constant 96 : index
    %64 = vector.load %arg5[%c1_63, %c96_64] : memref<2x256xf32, #tpu.memory_space<vmem>>, vector<1x16xf32>
    %c1_65 = arith.constant 1 : index
    %c9_66 = arith.constant 9 : index
    %c3_67 = arith.constant 3 : index
    %65 = vector.load %arg6[%c1_65, %c9_66, %c3_67] : memref<2x22x128xf32, #tpu.memory_space<vmem>>, vector<1x1x16xf32>
    %66 = vector.shape_cast %65 : vector<1x1x16xf32> to vector<1x16xf32>
    %67 = vector.shape_cast %64 : vector<1x16xf32> to vector<1x1x16xf32>
    tpu.vector_store %arg6[%c1_65, %c9_66, %c3_67], %67 {strides = array<i32>} : memref<2x22x128xf32, #tpu.memory_space<vmem>>, vector<1x1x16xf32>,
    %c0_68 = arith.constant 0 : index
    %c112 = arith.constant 112 : index
    %68 = vector.load %arg5[%c0_68, %c112] : memref<2x256xf32, #tpu.memory_space<vmem>>, vector<1x16xf32>
    %c0_69 = arith.constant 0 : index
    %c10 = arith.constant 10 : index
    %c3_70 = arith.constant 3 : index
    %69 = vector.load %arg6[%c0_69, %c10, %c3_70] : memref<2x22x128xf32, #tpu.memory_space<vmem>>, vector<1x1x16xf32>
    %70 = vector.shape_cast %69 : vector<1x1x16xf32> to vector<1x16xf32>
    %71 = vector.shape_cast %68 : vector<1x16xf32> to vector<1x1x16xf32>
    tpu.vector_store %arg6[%c0_69, %c10, %c3_70], %71 {strides = array<i32>} : memref<2x22x128xf32, #tpu.memory_space<vmem>>, vector<1x1x16xf32>,
    %c1_71 = arith.constant 1 : index
    %c112_72 = arith.constant 112 : index
    %72 = vector.load %arg5[%c1_71, %c112_72] : memref<2x256xf32, #tpu.memory_space<vmem>>, vector<1x16xf32>
    %c1_73 = arith.constant 1 : index
    %c10_74 = arith.constant 10 : index
    %c3_75 = arith.constant 3 : index
    %73 = vector.load %arg6[%c1_73, %c10_74, %c3_75] : memref<2x22x128xf32, #tpu.memory_space<vmem>>, vector<1x1x16xf32>
    %74 = vector.shape_cast %73 : vector<1x1x16xf32> to vector<1x16xf32>
    %75 = vector.shape_cast %72 : vector<1x16xf32> to vector<1x1x16xf32>
    tpu.vector_store %arg6[%c1_73, %c10_74, %c3_75], %75 {strides = array<i32>} : memref<2x22x128xf32, #tpu.memory_space<vmem>>, vector<1x1x16xf32>,
    %c0_76 = arith.constant 0 : index
    %c128 = arith.constant 128 : index
    %76 = vector.load %arg5[%c0_76, %c128] : memref<2x256xf32, #tpu.memory_space<vmem>>, vector<1x16xf32>
    %c0_77 = arith.constant 0 : index
    %c11 = arith.constant 11 : index
    %c3_78 = arith.constant 3 : index
    %77 = vector.load %arg6[%c0_77, %c11, %c3_78] : memref<2x22x128xf32, #tpu.memory_space<vmem>>, vector<1x1x16xf32>
    %78 = vector.shape_cast %77 : vector<1x1x16xf32> to vector<1x16xf32>
    %79 = vector.shape_cast %76 : vector<1x16xf32> to vector<1x1x16xf32>
    tpu.vector_store %arg6[%c0_77, %c11, %c3_78], %79 {strides = array<i32>} : memref<2x22x128xf32, #tpu.memory_space<vmem>>, vector<1x1x16xf32>,
    %c1_79 = arith.constant 1 : index
    %c128_80 = arith.constant 128 : index
    %80 = vector.load %arg5[%c1_79, %c128_80] : memref<2x256xf32, #tpu.memory_space<vmem>>, vector<1x16xf32>
    %c1_81 = arith.constant 1 : index
    %c11_82 = arith.constant 11 : index
    %c3_83 = arith.constant 3 : index
    %81 = vector.load %arg6[%c1_81, %c11_82, %c3_83] : memref<2x22x128xf32, #tpu.memory_space<vmem>>, vector<1x1x16xf32>
    %82 = vector.shape_cast %81 : vector<1x1x16xf32> to vector<1x16xf32>
    %83 = vector.shape_cast %80 : vector<1x16xf32> to vector<1x1x16xf32>
    tpu.vector_store %arg6[%c1_81, %c11_82, %c3_83], %83 {strides = array<i32>} : memref<2x22x128xf32, #tpu.memory_space<vmem>>, vector<1x1x16xf32>,
    %c0_84 = arith.constant 0 : index
    %c144 = arith.constant 144 : index
    %84 = vector.load %arg5[%c0_84, %c144] : memref<2x256xf32, #tpu.memory_space<vmem>>, vector<1x16xf32>
    %c0_85 = arith.constant 0 : index
    %c12 = arith.constant 12 : index
    %c3_86 = arith.constant 3 : index
    %85 = vector.load %arg6[%c0_85, %c12, %c3_86] : memref<2x22x128xf32, #tpu.memory_space<vmem>>, vector<1x1x16xf32>
    %86 = vector.shape_cast %85 : vector<1x1x16xf32> to vector<1x16xf32>
    %87 = vector.shape_cast %84 : vector<1x16xf32> to vector<1x1x16xf32>
    tpu.vector_store %arg6[%c0_85, %c12, %c3_86], %87 {strides = array<i32>} : memref<2x22x128xf32, #tpu.memory_space<vmem>>, vector<1x1x16xf32>,
    %c1_87 = arith.constant 1 : index
    %c144_88 = arith.constant 144 : index
    %88 = vector.load %arg5[%c1_87, %c144_88] : memref<2x256xf32, #tpu.memory_space<vmem>>, vector<1x16xf32>
    %c1_89 = arith.constant 1 : index
    %c12_90 = arith.constant 12 : index
    %c3_91 = arith.constant 3 : index
    %89 = vector.load %arg6[%c1_89, %c12_90, %c3_91] : memref<2x22x128xf32, #tpu.memory_space<vmem>>, vector<1x1x16xf32>
    %90 = vector.shape_cast %89 : vector<1x1x16xf32> to vector<1x16xf32>
    %91 = vector.shape_cast %88 : vector<1x16xf32> to vector<1x1x16xf32>
    tpu.vector_store %arg6[%c1_89, %c12_90, %c3_91], %91 {strides = array<i32>} : memref<2x22x128xf32, #tpu.memory_space<vmem>>, vector<1x1x16xf32>,
    %c0_92 = arith.constant 0 : index
    %c160 = arith.constant 160 : index
    %92 = vector.load %arg5[%c0_92, %c160] : memref<2x256xf32, #tpu.memory_space<vmem>>, vector<1x16xf32>
    %c0_93 = arith.constant 0 : index
    %c13 = arith.constant 13 : index
    %c3_94 = arith.constant 3 : index
    %93 = vector.load %arg6[%c0_93, %c13, %c3_94] : memref<2x22x128xf32, #tpu.memory_space<vmem>>, vector<1x1x16xf32>
    %94 = vector.shape_cast %93 : vector<1x1x16xf32> to vector<1x16xf32>
    %95 = vector.shape_cast %92 : vector<1x16xf32> to vector<1x1x16xf32>
    tpu.vector_store %arg6[%c0_93, %c13, %c3_94], %95 {strides = array<i32>} : memref<2x22x128xf32, #tpu.memory_space<vmem>>, vector<1x1x16xf32>,
    %c1_95 = arith.constant 1 : index
    %c160_96 = arith.constant 160 : index
    %96 = vector.load %arg5[%c1_95, %c160_96] : memref<2x256xf32, #tpu.memory_space<vmem>>, vector<1x16xf32>
    %c1_97 = arith.constant 1 : index
    %c13_98 = arith.constant 13 : index
    %c3_99 = arith.constant 3 : index
    %97 = vector.load %arg6[%c1_97, %c13_98, %c3_99] : memref<2x22x128xf32, #tpu.memory_space<vmem>>, vector<1x1x16xf32>
    %98 = vector.shape_cast %97 : vector<1x1x16xf32> to vector<1x16xf32>
    %99 = vector.shape_cast %96 : vector<1x16xf32> to vector<1x1x16xf32>
    tpu.vector_store %arg6[%c1_97, %c13_98, %c3_99], %99 {strides = array<i32>} : memref<2x22x128xf32, #tpu.memory_space<vmem>>, vector<1x1x16xf32>,
    %c0_100 = arith.constant 0 : index
    %c176 = arith.constant 176 : index
    %100 = vector.load %arg5[%c0_100, %c176] : memref<2x256xf32, #tpu.memory_space<vmem>>, vector<1x16xf32>
    %c0_101 = arith.constant 0 : index
    %c14 = arith.constant 14 : index
    %c3_102 = arith.constant 3 : index
    %101 = vector.load %arg6[%c0_101, %c14, %c3_102] : memref<2x22x128xf32, #tpu.memory_space<vmem>>, vector<1x1x16xf32>
    %102 = vector.shape_cast %101 : vector<1x1x16xf32> to vector<1x16xf32>
    %103 = vector.shape_cast %100 : vector<1x16xf32> to vector<1x1x16xf32>
    tpu.vector_store %arg6[%c0_101, %c14, %c3_102], %103 {strides = array<i32>} : memref<2x22x128xf32, #tpu.memory_space<vmem>>, vector<1x1x16xf32>,
    %c1_103 = arith.constant 1 : index
    %c176_104 = arith.constant 176 : index
    %104 = vector.load %arg5[%c1_103, %c176_104] : memref<2x256xf32, #tpu.memory_space<vmem>>, vector<1x16xf32>
    %c1_105 = arith.constant 1 : index
    %c14_106 = arith.constant 14 : index
    %c3_107 = arith.constant 3 : index
    %105 = vector.load %arg6[%c1_105, %c14_106, %c3_107] : memref<2x22x128xf32, #tpu.memory_space<vmem>>, vector<1x1x16xf32>
    %106 = vector.shape_cast %105 : vector<1x1x16xf32> to vector<1x16xf32>
    %107 = vector.shape_cast %104 : vector<1x16xf32> to vector<1x1x16xf32>
    tpu.vector_store %arg6[%c1_105, %c14_106, %c3_107], %107 {strides = array<i32>} : memref<2x22x128xf32, #tpu.memory_space<vmem>>, vector<1x1x16xf32>,
    %c0_108 = arith.constant 0 : index
    %c192 = arith.constant 192 : index
    %108 = vector.load %arg5[%c0_108, %c192] : memref<2x256xf32, #tpu.memory_space<vmem>>, vector<1x16xf32>
    %c0_109 = arith.constant 0 : index
    %c15 = arith.constant 15 : index
    %c3_110 = arith.constant 3 : index
    %109 = vector.load %arg6[%c0_109, %c15, %c3_110] : memref<2x22x128xf32, #tpu.memory_space<vmem>>, vector<1x1x16xf32>
    %110 = vector.shape_cast %109 : vector<1x1x16xf32> to vector<1x16xf32>
    %111 = vector.shape_cast %108 : vector<1x16xf32> to vector<1x1x16xf32>
    tpu.vector_store %arg6[%c0_109, %c15, %c3_110], %111 {strides = array<i32>} : memref<2x22x128xf32, #tpu.memory_space<vmem>>, vector<1x1x16xf32>,
    %c1_111 = arith.constant 1 : index
    %c192_112 = arith.constant 192 : index
    %112 = vector.load %arg5[%c1_111, %c192_112] : memref<2x256xf32, #tpu.memory_space<vmem>>, vector<1x16xf32>
    %c1_113 = arith.constant 1 : index
    %c15_114 = arith.constant 15 : index
    %c3_115 = arith.constant 3 : index
    %113 = vector.load %arg6[%c1_113, %c15_114, %c3_115] : memref<2x22x128xf32, #tpu.memory_space<vmem>>, vector<1x1x16xf32>
    %114 = vector.shape_cast %113 : vector<1x1x16xf32> to vector<1x16xf32>
    %115 = vector.shape_cast %112 : vector<1x16xf32> to vector<1x1x16xf32>
    tpu.vector_store %arg6[%c1_113, %c15_114, %c3_115], %115 {strides = array<i32>} : memref<2x22x128xf32, #tpu.memory_space<vmem>>, vector<1x1x16xf32>,
    %c0_116 = arith.constant 0 : index
    %c208 = arith.constant 208 : index
    %116 = vector.load %arg5[%c0_116, %c208] : memref<2x256xf32, #tpu.memory_space<vmem>>, vector<1x16xf32>
    %c0_117 = arith.constant 0 : index
    %c16_118 = arith.constant 16 : index
    %c3_119 = arith.constant 3 : index
    %117 = vector.load %arg6[%c0_117, %c16_118, %c3_119] : memref<2x22x128xf32, #tpu.memory_space<vmem>>, vector<1x1x16xf32>
    %118 = vector.shape_cast %117 : vector<1x1x16xf32> to vector<1x16xf32>
    %119 = vector.shape_cast %116 : vector<1x16xf32> to vector<1x1x16xf32>
    tpu.vector_store %arg6[%c0_117, %c16_118, %c3_119], %119 {strides = array<i32>} : memref<2x22x128xf32, #tpu.memory_space<vmem>>, vector<1x1x16xf32>,
    %c1_120 = arith.constant 1 : index
    %c208_121 = arith.constant 208 : index
    %120 = vector.load %arg5[%c1_120, %c208_121] : memref<2x256xf32, #tpu.memory_space<vmem>>, vector<1x16xf32>
    %c1_122 = arith.constant 1 : index
    %c16_123 = arith.constant 16 : index
    %c3_124 = arith.constant 3 : index
    %121 = vector.load %arg6[%c1_122, %c16_123, %c3_124] : memref<2x22x128xf32, #tpu.memory_space<vmem>>, vector<1x1x16xf32>
    %122 = vector.shape_cast %121 : vector<1x1x16xf32> to vector<1x16xf32>
    %123 = vector.shape_cast %120 : vector<1x16xf32> to vector<1x1x16xf32>
    tpu.vector_store %arg6[%c1_122, %c16_123, %c3_124], %123 {strides = array<i32>} : memref<2x22x128xf32, #tpu.memory_space<vmem>>, vector<1x1x16xf32>,
    %c0_125 = arith.constant 0 : index
    %c224 = arith.constant 224 : index
    %124 = vector.load %arg5[%c0_125, %c224] : memref<2x256xf32, #tpu.memory_space<vmem>>, vector<1x16xf32>
    %c0_126 = arith.constant 0 : index
    %c17 = arith.constant 17 : index
    %c3_127 = arith.constant 3 : index
    %125 = vector.load %arg6[%c0_126, %c17, %c3_127] : memref<2x22x128xf32, #tpu.memory_space<vmem>>, vector<1x1x16xf32>
    %126 = vector.shape_cast %125 : vector<1x1x16xf32> to vector<1x16xf32>
    %127 = vector.shape_cast %124 : vector<1x16xf32> to vector<1x1x16xf32>
    tpu.vector_store %arg6[%c0_126, %c17, %c3_127], %127 {strides = array<i32>} : memref<2x22x128xf32, #tpu.memory_space<vmem>>, vector<1x1x16xf32>,
    %c1_128 = arith.constant 1 : index
    %c224_129 = arith.constant 224 : index
    %128 = vector.load %arg5[%c1_128, %c224_129] : memref<2x256xf32, #tpu.memory_space<vmem>>, vector<1x16xf32>
    %c1_130 = arith.constant 1 : index
    %c17_131 = arith.constant 17 : index
    %c3_132 = arith.constant 3 : index
    %129 = vector.load %arg6[%c1_130, %c17_131, %c3_132] : memref<2x22x128xf32, #tpu.memory_space<vmem>>, vector<1x1x16xf32>
    %130 = vector.shape_cast %129 : vector<1x1x16xf32> to vector<1x16xf32>
    %131 = vector.shape_cast %128 : vector<1x16xf32> to vector<1x1x16xf32>
    tpu.vector_store %arg6[%c1_130, %c17_131, %c3_132], %131 {strides = array<i32>} : memref<2x22x128xf32, #tpu.memory_space<vmem>>, vector<1x1x16xf32>,
    %c0_133 = arith.constant 0 : index
    %c240 = arith.constant 240 : index
    %132 = vector.load %arg5[%c0_133, %c240] : memref<2x256xf32, #tpu.memory_space<vmem>>, vector<1x16xf32>
    %c0_134 = arith.constant 0 : index
    %c18 = arith.constant 18 : index
    %c3_135 = arith.constant 3 : index
    %133 = vector.load %arg6[%c0_134, %c18, %c3_135] : memref<2x22x128xf32, #tpu.memory_space<vmem>>, vector<1x1x16xf32>
    %134 = vector.shape_cast %133 : vector<1x1x16xf32> to vector<1x16xf32>
    %135 = vector.shape_cast %132 : vector<1x16xf32> to vector<1x1x16xf32>
    tpu.vector_store %arg6[%c0_134, %c18, %c3_135], %135 {strides = array<i32>} : memref<2x22x128xf32, #tpu.memory_space<vmem>>, vector<1x1x16xf32>,
    %c1_136 = arith.constant 1 : index
    %c240_137 = arith.constant 240 : index
    %136 = vector.load %arg5[%c1_136, %c240_137] : memref<2x256xf32, #tpu.memory_space<vmem>>, vector<1x16xf32>
    %c1_138 = arith.constant 1 : index
    %c18_139 = arith.constant 18 : index
    %c3_140 = arith.constant 3 : index
    %137 = vector.load %arg6[%c1_138, %c18_139, %c3_140] : memref<2x22x128xf32, #tpu.memory_space<vmem>>, vector<1x1x16xf32>
    %138 = vector.shape_cast %137 : vector<1x1x16xf32> to vector<1x16xf32>
    %139 = vector.shape_cast %136 : vector<1x16xf32> to vector<1x1x16xf32>
    tpu.vector_store %arg6[%c1_138, %c18_139, %c3_140], %139 {strides = array<i32>} : memref<2x22x128xf32, #tpu.memory_space<vmem>>, vector<1x1x16xf32>,
    %c0_141 = arith.constant 0 : index
    %c0_142 = arith.constant 0 : index
    %c0_143 = arith.constant 0 : index
    %140 = vector.load %arg6[%c0_141, %c0_142, %c0_143] : memref<2x22x128xf32, #tpu.memory_space<vmem>>, vector<1x16x128xf32>
    %141 = vector.shape_cast %140 : vector<1x16x128xf32> to vector<16x128xf32>
    %c1_144 = arith.constant 1 : index
    %c0_145 = arith.constant 0 : index
    %c0_146 = arith.constant 0 : index
    %142 = vector.load %arg6[%c1_144, %c0_145, %c0_146] : memref<2x22x128xf32, #tpu.memory_space<vmem>>, vector<1x16x128xf32>
    %143 = vector.shape_cast %142 : vector<1x16x128xf32> to vector<16x128xf32>
    %c0_147 = arith.constant 0 : index
    %144 = memref.load %arg1[%c0_147] : memref<98xf32, #tpu.memory_space<smem>>
    %c49 = arith.constant 49 : index
    %145 = memref.load %arg1[%c49] : memref<98xf32, #tpu.memory_space<smem>>
    %146 = vector.broadcast %144 : f32 to vector<16x128xf32>
    %147 = arith.mulf %141, %146 : vector<16x128xf32>
    %148 = vector.broadcast %145 : f32 to vector<16x128xf32>
    %149 = arith.mulf %143, %148 : vector<16x128xf32>
    %150 = arith.addf %147, %149 : vector<16x128xf32>
    %c0_148 = arith.constant 0 : index
    %c1_149 = arith.constant 1 : index
    %c0_150 = arith.constant 0 : index
    %151 = vector.load %arg6[%c0_148, %c1_149, %c0_150] : memref<2x22x128xf32, #tpu.memory_space<vmem>>, vector<1x16x128xf32>
    %152 = vector.shape_cast %151 : vector<1x16x128xf32> to vector<16x128xf32>
    %c1_151 = arith.constant 1 : index
    %c1_152 = arith.constant 1 : index
    %c0_153 = arith.constant 0 : index
    %153 = vector.load %arg6[%c1_151, %c1_152, %c0_153] : memref<2x22x128xf32, #tpu.memory_space<vmem>>, vector<1x16x128xf32>
    %154 = vector.shape_cast %153 : vector<1x16x128xf32> to vector<16x128xf32>
    %c7_154 = arith.constant 7 : index
    %155 = memref.load %arg1[%c7_154] : memref<98xf32, #tpu.memory_space<smem>>
    %c56 = arith.constant 56 : index
    %156 = memref.load %arg1[%c56] : memref<98xf32, #tpu.memory_space<smem>>
    %157 = vector.broadcast %155 : f32 to vector<16x128xf32>
    %158 = arith.mulf %152, %157 : vector<16x128xf32>
    %159 = vector.broadcast %156 : f32 to vector<16x128xf32>
    %160 = arith.mulf %154, %159 : vector<16x128xf32>
    %161 = arith.addf %158, %160 : vector<16x128xf32>
    %162 = arith.addf %150, %161 : vector<16x128xf32>
    %c0_155 = arith.constant 0 : index
    %c2 = arith.constant 2 : index
    %c0_156 = arith.constant 0 : index
    %163 = vector.load %arg6[%c0_155, %c2, %c0_156] : memref<2x22x128xf32, #tpu.memory_space<vmem>>, vector<1x16x128xf32>
    %164 = vector.shape_cast %163 : vector<1x16x128xf32> to vector<16x128xf32>
    %c1_157 = arith.constant 1 : index
    %c2_158 = arith.constant 2 : index
    %c0_159 = arith.constant 0 : index
    %165 = vector.load %arg6[%c1_157, %c2_158, %c0_159] : memref<2x22x128xf32, #tpu.memory_space<vmem>>, vector<1x16x128xf32>
    %166 = vector.shape_cast %165 : vector<1x16x128xf32> to vector<16x128xf32>
    %c14_160 = arith.constant 14 : index
    %167 = memref.load %arg1[%c14_160] : memref<98xf32, #tpu.memory_space<smem>>
    %c63 = arith.constant 63 : index
    %168 = memref.load %arg1[%c63] : memref<98xf32, #tpu.memory_space<smem>>
    %169 = vector.broadcast %167 : f32 to vector<16x128xf32>
    %170 = arith.mulf %164, %169 : vector<16x128xf32>
    %171 = vector.broadcast %168 : f32 to vector<16x128xf32>
    %172 = arith.mulf %166, %171 : vector<16x128xf32>
    %173 = arith.addf %170, %172 : vector<16x128xf32>
    %174 = arith.addf %162, %173 : vector<16x128xf32>
    %c0_161 = arith.constant 0 : index
    %c3_162 = arith.constant 3 : index
    %c0_163 = arith.constant 0 : index
    %175 = vector.load %arg6[%c0_161, %c3_162, %c0_163] : memref<2x22x128xf32, #tpu.memory_space<vmem>>, vector<1x16x128xf32>
    %176 = vector.shape_cast %175 : vector<1x16x128xf32> to vector<16x128xf32>
    %c1_164 = arith.constant 1 : index
    %c3_165 = arith.constant 3 : index
    %c0_166 = arith.constant 0 : index
    %177 = vector.load %arg6[%c1_164, %c3_165, %c0_166] : memref<2x22x128xf32, #tpu.memory_space<vmem>>, vector<1x16x128xf32>
    %178 = vector.shape_cast %177 : vector<1x16x128xf32> to vector<16x128xf32>
    %c21 = arith.constant 21 : index
    %179 = memref.load %arg1[%c21] : memref<98xf32, #tpu.memory_space<smem>>
    %c70 = arith.constant 70 : index
    %180 = memref.load %arg1[%c70] : memref<98xf32, #tpu.memory_space<smem>>
    %181 = vector.broadcast %179 : f32 to vector<16x128xf32>
    %182 = arith.mulf %176, %181 : vector<16x128xf32>
    %183 = vector.broadcast %180 : f32 to vector<16x128xf32>
    %184 = arith.mulf %178, %183 : vector<16x128xf32>
    %185 = arith.addf %182, %184 : vector<16x128xf32>
    %186 = arith.addf %174, %185 : vector<16x128xf32>
    %c0_167 = arith.constant 0 : index
    %c4_168 = arith.constant 4 : index
    %c0_169 = arith.constant 0 : index
    %187 = vector.load %arg6[%c0_167, %c4_168, %c0_169] : memref<2x22x128xf32, #tpu.memory_space<vmem>>, vector<1x16x128xf32>
    %188 = vector.shape_cast %187 : vector<1x16x128xf32> to vector<16x128xf32>
    %c1_170 = arith.constant 1 : index
    %c4_171 = arith.constant 4 : index
    %c0_172 = arith.constant 0 : index
    %189 = vector.load %arg6[%c1_170, %c4_171, %c0_172] : memref<2x22x128xf32, #tpu.memory_space<vmem>>, vector<1x16x128xf32>
    %190 = vector.shape_cast %189 : vector<1x16x128xf32> to vector<16x128xf32>
    %c28 = arith.constant 28 : index
    %191 = memref.load %arg1[%c28] : memref<98xf32, #tpu.memory_space<smem>>
    %c77 = arith.constant 77 : index
    %192 = memref.load %arg1[%c77] : memref<98xf32, #tpu.memory_space<smem>>
    %193 = vector.broadcast %191 : f32 to vector<16x128xf32>
    %194 = arith.mulf %188, %193 : vector<16x128xf32>
    %195 = vector.broadcast %192 : f32 to vector<16x128xf32>
    %196 = arith.mulf %190, %195 : vector<16x128xf32>
    %197 = arith.addf %194, %196 : vector<16x128xf32>
    %198 = arith.addf %186, %197 : vector<16x128xf32>
    %c0_173 = arith.constant 0 : index
    %c5_174 = arith.constant 5 : index
    %c0_175 = arith.constant 0 : index
    %199 = vector.load %arg6[%c0_173, %c5_174, %c0_175] : memref<2x22x128xf32, #tpu.memory_space<vmem>>, vector<1x16x128xf32>
    %200 = vector.shape_cast %199 : vector<1x16x128xf32> to vector<16x128xf32>
    %c1_176 = arith.constant 1 : index
    %c5_177 = arith.constant 5 : index
    %c0_178 = arith.constant 0 : index
    %201 = vector.load %arg6[%c1_176, %c5_177, %c0_178] : memref<2x22x128xf32, #tpu.memory_space<vmem>>, vector<1x16x128xf32>
    %202 = vector.shape_cast %201 : vector<1x16x128xf32> to vector<16x128xf32>
    %c35 = arith.constant 35 : index
    %203 = memref.load %arg1[%c35] : memref<98xf32, #tpu.memory_space<smem>>
    %c84 = arith.constant 84 : index
    %204 = memref.load %arg1[%c84] : memref<98xf32, #tpu.memory_space<smem>>
    %205 = vector.broadcast %203 : f32 to vector<16x128xf32>
    %206 = arith.mulf %200, %205 : vector<16x128xf32>
    %207 = vector.broadcast %204 : f32 to vector<16x128xf32>
    %208 = arith.mulf %202, %207 : vector<16x128xf32>
    %209 = arith.addf %206, %208 : vector<16x128xf32>
    %210 = arith.addf %198, %209 : vector<16x128xf32>
    %c0_179 = arith.constant 0 : index
    %c6_180 = arith.constant 6 : index
    %c0_181 = arith.constant 0 : index
    %211 = vector.load %arg6[%c0_179, %c6_180, %c0_181] : memref<2x22x128xf32, #tpu.memory_space<vmem>>, vector<1x16x128xf32>
    %212 = vector.shape_cast %211 : vector<1x16x128xf32> to vector<16x128xf32>
    %c1_182 = arith.constant 1 : index
    %c6_183 = arith.constant 6 : index
    %c0_184 = arith.constant 0 : index
    %213 = vector.load %arg6[%c1_182, %c6_183, %c0_184] : memref<2x22x128xf32, #tpu.memory_space<vmem>>, vector<1x16x128xf32>
    %214 = vector.shape_cast %213 : vector<1x16x128xf32> to vector<16x128xf32>
    %c42 = arith.constant 42 : index
    %215 = memref.load %arg1[%c42] : memref<98xf32, #tpu.memory_space<smem>>
    %c91 = arith.constant 91 : index
    %216 = memref.load %arg1[%c91] : memref<98xf32, #tpu.memory_space<smem>>
    %217 = vector.broadcast %215 : f32 to vector<16x128xf32>
    %218 = arith.mulf %212, %217 : vector<16x128xf32>
    %219 = vector.broadcast %216 : f32 to vector<16x128xf32>
    %220 = arith.mulf %214, %219 : vector<16x128xf32>
    %221 = arith.addf %218, %220 : vector<16x128xf32>
    %222 = arith.addf %210, %221 : vector<16x128xf32>
    %c0_185 = arith.constant 0 : index
    %c0_186 = arith.constant 0 : index
    %223 = vector.load %arg7[%c0_185, %c0_186] : memref<16x128xf32, #tpu.memory_space<vmem>>, vector<16x128xf32>
    tpu.vector_store %arg7[%c0_185, %c0_186], %222 {strides = array<i32>} : memref<16x128xf32, #tpu.memory_space<vmem>>, vector<16x128xf32>,
    %c0_187 = arith.constant 0 : index
    %c0_188 = arith.constant 0 : index
    %224 = vector.load %arg7[%c0_187, %c0_188] : memref<16x128xf32, #tpu.memory_space<vmem>>, vector<16x16xf32>
    %c0_189 = arith.constant 0 : index
    %c0_190 = arith.constant 0 : index
    %c0_191 = arith.constant 0 : index
    %225 = vector.load %arg6[%c0_189, %c0_190, %c0_191] : memref<2x22x128xf32, #tpu.memory_space<vmem>>, vector<1x16x128xf32>
    %226 = vector.shape_cast %225 : vector<1x16x128xf32> to vector<16x128xf32>
    %c1_192 = arith.constant 1 : index
    %c0_193 = arith.constant 0 : index
    %c0_194 = arith.constant 0 : index
    %227 = vector.load %arg6[%c1_192, %c0_193, %c0_194] : memref<2x22x128xf32, #tpu.memory_space<vmem>>, vector<1x16x128xf32>
    %228 = vector.shape_cast %227 : vector<1x16x128xf32> to vector<16x128xf32>
    %c1_195 = arith.constant 1 : index
    %229 = memref.load %arg1[%c1_195] : memref<98xf32, #tpu.memory_space<smem>>
    %c50 = arith.constant 50 : index
    %230 = memref.load %arg1[%c50] : memref<98xf32, #tpu.memory_space<smem>>
    %231 = vector.broadcast %229 : f32 to vector<16x128xf32>
    %232 = arith.mulf %226, %231 : vector<16x128xf32>
    %233 = vector.broadcast %230 : f32 to vector<16x128xf32>
    %234 = arith.mulf %228, %233 : vector<16x128xf32>
    %235 = arith.addf %232, %234 : vector<16x128xf32>
    %c0_196 = arith.constant 0 : index
    %c1_197 = arith.constant 1 : index
    %c0_198 = arith.constant 0 : index
    %236 = vector.load %arg6[%c0_196, %c1_197, %c0_198] : memref<2x22x128xf32, #tpu.memory_space<vmem>>, vector<1x16x128xf32>
    %237 = vector.shape_cast %236 : vector<1x16x128xf32> to vector<16x128xf32>
    %c1_199 = arith.constant 1 : index
    %c1_200 = arith.constant 1 : index
    %c0_201 = arith.constant 0 : index
    %238 = vector.load %arg6[%c1_199, %c1_200, %c0_201] : memref<2x22x128xf32, #tpu.memory_space<vmem>>, vector<1x16x128xf32>
    %239 = vector.shape_cast %238 : vector<1x16x128xf32> to vector<16x128xf32>
    %c8_202 = arith.constant 8 : index
    %240 = memref.load %arg1[%c8_202] : memref<98xf32, #tpu.memory_space<smem>>
    %c57 = arith.constant 57 : index
    %241 = memref.load %arg1[%c57] : memref<98xf32, #tpu.memory_space<smem>>
    %242 = vector.broadcast %240 : f32 to vector<16x128xf32>
    %243 = arith.mulf %237, %242 : vector<16x128xf32>
    %244 = vector.broadcast %241 : f32 to vector<16x128xf32>
    %245 = arith.mulf %239, %244 : vector<16x128xf32>
    %246 = arith.addf %243, %245 : vector<16x128xf32>
    %247 = arith.addf %235, %246 : vector<16x128xf32>
    %c0_203 = arith.constant 0 : index
    %c2_204 = arith.constant 2 : index
    %c0_205 = arith.constant 0 : index
    %248 = vector.load %arg6[%c0_203, %c2_204, %c0_205] : memref<2x22x128xf32, #tpu.memory_space<vmem>>, vector<1x16x128xf32>
    %249 = vector.shape_cast %248 : vector<1x16x128xf32> to vector<16x128xf32>
    %c1_206 = arith.constant 1 : index
    %c2_207 = arith.constant 2 : index
    %c0_208 = arith.constant 0 : index
    %250 = vector.load %arg6[%c1_206, %c2_207, %c0_208] : memref<2x22x128xf32, #tpu.memory_space<vmem>>, vector<1x16x128xf32>
    %251 = vector.shape_cast %250 : vector<1x16x128xf32> to vector<16x128xf32>
    %c15_209 = arith.constant 15 : index
    %252 = memref.load %arg1[%c15_209] : memref<98xf32, #tpu.memory_space<smem>>
    %c64_210 = arith.constant 64 : index
    %253 = memref.load %arg1[%c64_210] : memref<98xf32, #tpu.memory_space<smem>>
    %254 = vector.broadcast %252 : f32 to vector<16x128xf32>
    %255 = arith.mulf %249, %254 : vector<16x128xf32>
    %256 = vector.broadcast %253 : f32 to vector<16x128xf32>
    %257 = arith.mulf %251, %256 : vector<16x128xf32>
    %258 = arith.addf %255, %257 : vector<16x128xf32>
    %259 = arith.addf %247, %258 : vector<16x128xf32>
    %c0_211 = arith.constant 0 : index
    %c3_212 = arith.constant 3 : index
    %c0_213 = arith.constant 0 : index
    %260 = vector.load %arg6[%c0_211, %c3_212, %c0_213] : memref<2x22x128xf32, #tpu.memory_space<vmem>>, vector<1x16x128xf32>
    %261 = vector.shape_cast %260 : vector<1x16x128xf32> to vector<16x128xf32>
    %c1_214 = arith.constant 1 : index
    %c3_215 = arith.constant 3 : index
    %c0_216 = arith.constant 0 : index
    %262 = vector.load %arg6[%c1_214, %c3_215, %c0_216] : memref<2x22x128xf32, #tpu.memory_space<vmem>>, vector<1x16x128xf32>
    %263 = vector.shape_cast %262 : vector<1x16x128xf32> to vector<16x128xf32>
    %c22 = arith.constant 22 : index
    %264 = memref.load %arg1[%c22] : memref<98xf32, #tpu.memory_space<smem>>
    %c71 = arith.constant 71 : index
    %265 = memref.load %arg1[%c71] : memref<98xf32, #tpu.memory_space<smem>>
    %266 = vector.broadcast %264 : f32 to vector<16x128xf32>
    %267 = arith.mulf %261, %266 : vector<16x128xf32>
    %268 = vector.broadcast %265 : f32 to vector<16x128xf32>
    %269 = arith.mulf %263, %268 : vector<16x128xf32>
    %270 = arith.addf %267, %269 : vector<16x128xf32>
    %271 = arith.addf %259, %270 : vector<16x128xf32>
    %c0_217 = arith.constant 0 : index
    %c4_218 = arith.constant 4 : index
    %c0_219 = arith.constant 0 : index
    %272 = vector.load %arg6[%c0_217, %c4_218, %c0_219] : memref<2x22x128xf32, #tpu.memory_space<vmem>>, vector<1x16x128xf32>
    %273 = vector.shape_cast %272 : vector<1x16x128xf32> to vector<16x128xf32>
    %c1_220 = arith.constant 1 : index
    %c4_221 = arith.constant 4 : index
    %c0_222 = arith.constant 0 : index
    %274 = vector.load %arg6[%c1_220, %c4_221, %c0_222] : memref<2x22x128xf32, #tpu.memory_space<vmem>>, vector<1x16x128xf32>
    %275 = vector.shape_cast %274 : vector<1x16x128xf32> to vector<16x128xf32>
    %c29 = arith.constant 29 : index
    %276 = memref.load %arg1[%c29] : memref<98xf32, #tpu.memory_space<smem>>
    %c78 = arith.constant 78 : index
    %277 = memref.load %arg1[%c78] : memref<98xf32, #tpu.memory_space<smem>>
    %278 = vector.broadcast %276 : f32 to vector<16x128xf32>
    %279 = arith.mulf %273, %278 : vector<16x128xf32>
    %280 = vector.broadcast %277 : f32 to vector<16x128xf32>
    %281 = arith.mulf %275, %280 : vector<16x128xf32>
    %282 = arith.addf %279, %281 : vector<16x128xf32>
    %283 = arith.addf %271, %282 : vector<16x128xf32>
    %c0_223 = arith.constant 0 : index
    %c5_224 = arith.constant 5 : index
    %c0_225 = arith.constant 0 : index
    %284 = vector.load %arg6[%c0_223, %c5_224, %c0_225] : memref<2x22x128xf32, #tpu.memory_space<vmem>>, vector<1x16x128xf32>
    %285 = vector.shape_cast %284 : vector<1x16x128xf32> to vector<16x128xf32>
    %c1_226 = arith.constant 1 : index
    %c5_227 = arith.constant 5 : index
    %c0_228 = arith.constant 0 : index
    %286 = vector.load %arg6[%c1_226, %c5_227, %c0_228] : memref<2x22x128xf32, #tpu.memory_space<vmem>>, vector<1x16x128xf32>
    %287 = vector.shape_cast %286 : vector<1x16x128xf32> to vector<16x128xf32>
    %c36 = arith.constant 36 : index
    %288 = memref.load %arg1[%c36] : memref<98xf32, #tpu.memory_space<smem>>
    %c85 = arith.constant 85 : index
    %289 = memref.load %arg1[%c85] : memref<98xf32, #tpu.memory_space<smem>>
    %290 = vector.broadcast %288 : f32 to vector<16x128xf32>
    %291 = arith.mulf %285, %290 : vector<16x128xf32>
    %292 = vector.broadcast %289 : f32 to vector<16x128xf32>
    %293 = arith.mulf %287, %292 : vector<16x128xf32>
    %294 = arith.addf %291, %293 : vector<16x128xf32>
    %295 = arith.addf %283, %294 : vector<16x128xf32>
    %c0_229 = arith.constant 0 : index
    %c6_230 = arith.constant 6 : index
    %c0_231 = arith.constant 0 : index
    %296 = vector.load %arg6[%c0_229, %c6_230, %c0_231] : memref<2x22x128xf32, #tpu.memory_space<vmem>>, vector<1x16x128xf32>
    %297 = vector.shape_cast %296 : vector<1x16x128xf32> to vector<16x128xf32>
    %c1_232 = arith.constant 1 : index
    %c6_233 = arith.constant 6 : index
    %c0_234 = arith.constant 0 : index
    %298 = vector.load %arg6[%c1_232, %c6_233, %c0_234] : memref<2x22x128xf32, #tpu.memory_space<vmem>>, vector<1x16x128xf32>
    %299 = vector.shape_cast %298 : vector<1x16x128xf32> to vector<16x128xf32>
    %c43 = arith.constant 43 : index
    %300 = memref.load %arg1[%c43] : memref<98xf32, #tpu.memory_space<smem>>
    %c92 = arith.constant 92 : index
    %301 = memref.load %arg1[%c92] : memref<98xf32, #tpu.memory_space<smem>>
    %302 = vector.broadcast %300 : f32 to vector<16x128xf32>
    %303 = arith.mulf %297, %302 : vector<16x128xf32>
    %304 = vector.broadcast %301 : f32 to vector<16x128xf32>
    %305 = arith.mulf %299, %304 : vector<16x128xf32>
    %306 = arith.addf %303, %305 : vector<16x128xf32>
    %307 = arith.addf %295, %306 : vector<16x128xf32>
    %c0_235 = arith.constant 0 : index
    %c0_236 = arith.constant 0 : index
    %308 = vector.load %arg7[%c0_235, %c0_236] : memref<16x128xf32, #tpu.memory_space<vmem>>, vector<16x128xf32>
    tpu.vector_store %arg7[%c0_235, %c0_236], %307 {strides = array<i32>} : memref<16x128xf32, #tpu.memory_space<vmem>>, vector<16x128xf32>,
    %c0_237 = arith.constant 0 : index
    %c1_238 = arith.constant 1 : index
    %309 = vector.load %arg7[%c0_237, %c1_238] : memref<16x128xf32, #tpu.memory_space<vmem>>, vector<16x16xf32>
    %310 = arith.addf %224, %309 : vector<16x16xf32>
    %c0_239 = arith.constant 0 : index
    %c0_240 = arith.constant 0 : index
    %c0_241 = arith.constant 0 : index
    %311 = vector.load %arg6[%c0_239, %c0_240, %c0_241] : memref<2x22x128xf32, #tpu.memory_space<vmem>>, vector<1x16x128xf32>
    %312 = vector.shape_cast %311 : vector<1x16x128xf32> to vector<16x128xf32>
    %c1_242 = arith.constant 1 : index
    %c0_243 = arith.constant 0 : index
    %c0_244 = arith.constant 0 : index
    %313 = vector.load %arg6[%c1_242, %c0_243, %c0_244] : memref<2x22x128xf32, #tpu.memory_space<vmem>>, vector<1x16x128xf32>
    %314 = vector.shape_cast %313 : vector<1x16x128xf32> to vector<16x128xf32>
    %c2_245 = arith.constant 2 : index
    %315 = memref.load %arg1[%c2_245] : memref<98xf32, #tpu.memory_space<smem>>
    %c51 = arith.constant 51 : index
    %316 = memref.load %arg1[%c51] : memref<98xf32, #tpu.memory_space<smem>>
    %317 = vector.broadcast %315 : f32 to vector<16x128xf32>
    %318 = arith.mulf %312, %317 : vector<16x128xf32>
    %319 = vector.broadcast %316 : f32 to vector<16x128xf32>
    %320 = arith.mulf %314, %319 : vector<16x128xf32>
    %321 = arith.addf %318, %320 : vector<16x128xf32>
    %c0_246 = arith.constant 0 : index
    %c1_247 = arith.constant 1 : index
    %c0_248 = arith.constant 0 : index
    %322 = vector.load %arg6[%c0_246, %c1_247, %c0_248] : memref<2x22x128xf32, #tpu.memory_space<vmem>>, vector<1x16x128xf32>
    %323 = vector.shape_cast %322 : vector<1x16x128xf32> to vector<16x128xf32>
    %c1_249 = arith.constant 1 : index
    %c1_250 = arith.constant 1 : index
    %c0_251 = arith.constant 0 : index
    %324 = vector.load %arg6[%c1_249, %c1_250, %c0_251] : memref<2x22x128xf32, #tpu.memory_space<vmem>>, vector<1x16x128xf32>
    %325 = vector.shape_cast %324 : vector<1x16x128xf32> to vector<16x128xf32>
    %c9_252 = arith.constant 9 : index
    %326 = memref.load %arg1[%c9_252] : memref<98xf32, #tpu.memory_space<smem>>
    %c58 = arith.constant 58 : index
    %327 = memref.load %arg1[%c58] : memref<98xf32, #tpu.memory_space<smem>>
    %328 = vector.broadcast %326 : f32 to vector<16x128xf32>
    %329 = arith.mulf %323, %328 : vector<16x128xf32>
    %330 = vector.broadcast %327 : f32 to vector<16x128xf32>
    %331 = arith.mulf %325, %330 : vector<16x128xf32>
    %332 = arith.addf %329, %331 : vector<16x128xf32>
    %333 = arith.addf %321, %332 : vector<16x128xf32>
    %c0_253 = arith.constant 0 : index
    %c2_254 = arith.constant 2 : index
    %c0_255 = arith.constant 0 : index
    %334 = vector.load %arg6[%c0_253, %c2_254, %c0_255] : memref<2x22x128xf32, #tpu.memory_space<vmem>>, vector<1x16x128xf32>
    %335 = vector.shape_cast %334 : vector<1x16x128xf32> to vector<16x128xf32>
    %c1_256 = arith.constant 1 : index
    %c2_257 = arith.constant 2 : index
    %c0_258 = arith.constant 0 : index
    %336 = vector.load %arg6[%c1_256, %c2_257, %c0_258] : memref<2x22x128xf32, #tpu.memory_space<vmem>>, vector<1x16x128xf32>
    %337 = vector.shape_cast %336 : vector<1x16x128xf32> to vector<16x128xf32>
    %c16_259 = arith.constant 16 : index
    %338 = memref.load %arg1[%c16_259] : memref<98xf32, #tpu.memory_space<smem>>
    %c65 = arith.constant 65 : index
    %339 = memref.load %arg1[%c65] : memref<98xf32, #tpu.memory_space<smem>>
    %340 = vector.broadcast %338 : f32 to vector<16x128xf32>
    %341 = arith.mulf %335, %340 : vector<16x128xf32>
    %342 = vector.broadcast %339 : f32 to vector<16x128xf32>
    %343 = arith.mulf %337, %342 : vector<16x128xf32>
    %344 = arith.addf %341, %343 : vector<16x128xf32>
    %345 = arith.addf %333, %344 : vector<16x128xf32>
    %c0_260 = arith.constant 0 : index
    %c3_261 = arith.constant 3 : index
    %c0_262 = arith.constant 0 : index
    %346 = vector.load %arg6[%c0_260, %c3_261, %c0_262] : memref<2x22x128xf32, #tpu.memory_space<vmem>>, vector<1x16x128xf32>
    %347 = vector.shape_cast %346 : vector<1x16x128xf32> to vector<16x128xf32>
    %c1_263 = arith.constant 1 : index
    %c3_264 = arith.constant 3 : index
    %c0_265 = arith.constant 0 : index
    %348 = vector.load %arg6[%c1_263, %c3_264, %c0_265] : memref<2x22x128xf32, #tpu.memory_space<vmem>>, vector<1x16x128xf32>
    %349 = vector.shape_cast %348 : vector<1x16x128xf32> to vector<16x128xf32>
    %c23 = arith.constant 23 : index
    %350 = memref.load %arg1[%c23] : memref<98xf32, #tpu.memory_space<smem>>
    %c72 = arith.constant 72 : index
    %351 = memref.load %arg1[%c72] : memref<98xf32, #tpu.memory_space<smem>>
    %352 = vector.broadcast %350 : f32 to vector<16x128xf32>
    %353 = arith.mulf %347, %352 : vector<16x128xf32>
    %354 = vector.broadcast %351 : f32 to vector<16x128xf32>
    %355 = arith.mulf %349, %354 : vector<16x128xf32>
    %356 = arith.addf %353, %355 : vector<16x128xf32>
    %357 = arith.addf %345, %356 : vector<16x128xf32>
    %c0_266 = arith.constant 0 : index
    %c4_267 = arith.constant 4 : index
    %c0_268 = arith.constant 0 : index
    %358 = vector.load %arg6[%c0_266, %c4_267, %c0_268] : memref<2x22x128xf32, #tpu.memory_space<vmem>>, vector<1x16x128xf32>
    %359 = vector.shape_cast %358 : vector<1x16x128xf32> to vector<16x128xf32>
    %c1_269 = arith.constant 1 : index
    %c4_270 = arith.constant 4 : index
    %c0_271 = arith.constant 0 : index
    %360 = vector.load %arg6[%c1_269, %c4_270, %c0_271] : memref<2x22x128xf32, #tpu.memory_space<vmem>>, vector<1x16x128xf32>
    %361 = vector.shape_cast %360 : vector<1x16x128xf32> to vector<16x128xf32>
    %c30 = arith.constant 30 : index
    %362 = memref.load %arg1[%c30] : memref<98xf32, #tpu.memory_space<smem>>
    %c79 = arith.constant 79 : index
    %363 = memref.load %arg1[%c79] : memref<98xf32, #tpu.memory_space<smem>>
    %364 = vector.broadcast %362 : f32 to vector<16x128xf32>
    %365 = arith.mulf %359, %364 : vector<16x128xf32>
    %366 = vector.broadcast %363 : f32 to vector<16x128xf32>
    %367 = arith.mulf %361, %366 : vector<16x128xf32>
    %368 = arith.addf %365, %367 : vector<16x128xf32>
    %369 = arith.addf %357, %368 : vector<16x128xf32>
    %c0_272 = arith.constant 0 : index
    %c5_273 = arith.constant 5 : index
    %c0_274 = arith.constant 0 : index
    %370 = vector.load %arg6[%c0_272, %c5_273, %c0_274] : memref<2x22x128xf32, #tpu.memory_space<vmem>>, vector<1x16x128xf32>
    %371 = vector.shape_cast %370 : vector<1x16x128xf32> to vector<16x128xf32>
    %c1_275 = arith.constant 1 : index
    %c5_276 = arith.constant 5 : index
    %c0_277 = arith.constant 0 : index
    %372 = vector.load %arg6[%c1_275, %c5_276, %c0_277] : memref<2x22x128xf32, #tpu.memory_space<vmem>>, vector<1x16x128xf32>
    %373 = vector.shape_cast %372 : vector<1x16x128xf32> to vector<16x128xf32>
    %c37 = arith.constant 37 : index
    %374 = memref.load %arg1[%c37] : memref<98xf32, #tpu.memory_space<smem>>
    %c86 = arith.constant 86 : index
    %375 = memref.load %arg1[%c86] : memref<98xf32, #tpu.memory_space<smem>>
    %376 = vector.broadcast %374 : f32 to vector<16x128xf32>
    %377 = arith.mulf %371, %376 : vector<16x128xf32>
    %378 = vector.broadcast %375 : f32 to vector<16x128xf32>
    %379 = arith.mulf %373, %378 : vector<16x128xf32>
    %380 = arith.addf %377, %379 : vector<16x128xf32>
    %381 = arith.addf %369, %380 : vector<16x128xf32>
    %c0_278 = arith.constant 0 : index
    %c6_279 = arith.constant 6 : index
    %c0_280 = arith.constant 0 : index
    %382 = vector.load %arg6[%c0_278, %c6_279, %c0_280] : memref<2x22x128xf32, #tpu.memory_space<vmem>>, vector<1x16x128xf32>
    %383 = vector.shape_cast %382 : vector<1x16x128xf32> to vector<16x128xf32>
    %c1_281 = arith.constant 1 : index
    %c6_282 = arith.constant 6 : index
    %c0_283 = arith.constant 0 : index
    %384 = vector.load %arg6[%c1_281, %c6_282, %c0_283] : memref<2x22x128xf32, #tpu.memory_space<vmem>>, vector<1x16x128xf32>
    %385 = vector.shape_cast %384 : vector<1x16x128xf32> to vector<16x128xf32>
    %c44 = arith.constant 44 : index
    %386 = memref.load %arg1[%c44] : memref<98xf32, #tpu.memory_space<smem>>
    %c93 = arith.constant 93 : index
    %387 = memref.load %arg1[%c93] : memref<98xf32, #tpu.memory_space<smem>>
    %388 = vector.broadcast %386 : f32 to vector<16x128xf32>
    %389 = arith.mulf %383, %388 : vector<16x128xf32>
    %390 = vector.broadcast %387 : f32 to vector<16x128xf32>
    %391 = arith.mulf %385, %390 : vector<16x128xf32>
    %392 = arith.addf %389, %391 : vector<16x128xf32>
    %393 = arith.addf %381, %392 : vector<16x128xf32>
    %c0_284 = arith.constant 0 : index
    %c0_285 = arith.constant 0 : index
    %394 = vector.load %arg7[%c0_284, %c0_285] : memref<16x128xf32, #tpu.memory_space<vmem>>, vector<16x128xf32>
    tpu.vector_store %arg7[%c0_284, %c0_285], %393 {strides = array<i32>} : memref<16x128xf32, #tpu.memory_space<vmem>>, vector<16x128xf32>,
    %c0_286 = arith.constant 0 : index
    %c2_287 = arith.constant 2 : index
    %395 = vector.load %arg7[%c0_286, %c2_287] : memref<16x128xf32, #tpu.memory_space<vmem>>, vector<16x16xf32>
    %396 = arith.addf %310, %395 : vector<16x16xf32>
    %c0_288 = arith.constant 0 : index
    %c0_289 = arith.constant 0 : index
    %c0_290 = arith.constant 0 : index
    %397 = vector.load %arg6[%c0_288, %c0_289, %c0_290] : memref<2x22x128xf32, #tpu.memory_space<vmem>>, vector<1x16x128xf32>
    %398 = vector.shape_cast %397 : vector<1x16x128xf32> to vector<16x128xf32>
    %c1_291 = arith.constant 1 : index
    %c0_292 = arith.constant 0 : index
    %c0_293 = arith.constant 0 : index
    %399 = vector.load %arg6[%c1_291, %c0_292, %c0_293] : memref<2x22x128xf32, #tpu.memory_space<vmem>>, vector<1x16x128xf32>
    %400 = vector.shape_cast %399 : vector<1x16x128xf32> to vector<16x128xf32>
    %c3_294 = arith.constant 3 : index
    %401 = memref.load %arg1[%c3_294] : memref<98xf32, #tpu.memory_space<smem>>
    %c52 = arith.constant 52 : index
    %402 = memref.load %arg1[%c52] : memref<98xf32, #tpu.memory_space<smem>>
    %403 = vector.broadcast %401 : f32 to vector<16x128xf32>
    %404 = arith.mulf %398, %403 : vector<16x128xf32>
    %405 = vector.broadcast %402 : f32 to vector<16x128xf32>
    %406 = arith.mulf %400, %405 : vector<16x128xf32>
    %407 = arith.addf %404, %406 : vector<16x128xf32>
    %c0_295 = arith.constant 0 : index
    %c1_296 = arith.constant 1 : index
    %c0_297 = arith.constant 0 : index
    %408 = vector.load %arg6[%c0_295, %c1_296, %c0_297] : memref<2x22x128xf32, #tpu.memory_space<vmem>>, vector<1x16x128xf32>
    %409 = vector.shape_cast %408 : vector<1x16x128xf32> to vector<16x128xf32>
    %c1_298 = arith.constant 1 : index
    %c1_299 = arith.constant 1 : index
    %c0_300 = arith.constant 0 : index
    %410 = vector.load %arg6[%c1_298, %c1_299, %c0_300] : memref<2x22x128xf32, #tpu.memory_space<vmem>>, vector<1x16x128xf32>
    %411 = vector.shape_cast %410 : vector<1x16x128xf32> to vector<16x128xf32>
    %c10_301 = arith.constant 10 : index
    %412 = memref.load %arg1[%c10_301] : memref<98xf32, #tpu.memory_space<smem>>
    %c59 = arith.constant 59 : index
    %413 = memref.load %arg1[%c59] : memref<98xf32, #tpu.memory_space<smem>>
    %414 = vector.broadcast %412 : f32 to vector<16x128xf32>
    %415 = arith.mulf %409, %414 : vector<16x128xf32>
    %416 = vector.broadcast %413 : f32 to vector<16x128xf32>
    %417 = arith.mulf %411, %416 : vector<16x128xf32>
    %418 = arith.addf %415, %417 : vector<16x128xf32>
    %419 = arith.addf %407, %418 : vector<16x128xf32>
    %c0_302 = arith.constant 0 : index
    %c2_303 = arith.constant 2 : index
    %c0_304 = arith.constant 0 : index
    %420 = vector.load %arg6[%c0_302, %c2_303, %c0_304] : memref<2x22x128xf32, #tpu.memory_space<vmem>>, vector<1x16x128xf32>
    %421 = vector.shape_cast %420 : vector<1x16x128xf32> to vector<16x128xf32>
    %c1_305 = arith.constant 1 : index
    %c2_306 = arith.constant 2 : index
    %c0_307 = arith.constant 0 : index
    %422 = vector.load %arg6[%c1_305, %c2_306, %c0_307] : memref<2x22x128xf32, #tpu.memory_space<vmem>>, vector<1x16x128xf32>
    %423 = vector.shape_cast %422 : vector<1x16x128xf32> to vector<16x128xf32>
    %c17_308 = arith.constant 17 : index
    %424 = memref.load %arg1[%c17_308] : memref<98xf32, #tpu.memory_space<smem>>
    %c66 = arith.constant 66 : index
    %425 = memref.load %arg1[%c66] : memref<98xf32, #tpu.memory_space<smem>>
    %426 = vector.broadcast %424 : f32 to vector<16x128xf32>
    %427 = arith.mulf %421, %426 : vector<16x128xf32>
    %428 = vector.broadcast %425 : f32 to vector<16x128xf32>
    %429 = arith.mulf %423, %428 : vector<16x128xf32>
    %430 = arith.addf %427, %429 : vector<16x128xf32>
    %431 = arith.addf %419, %430 : vector<16x128xf32>
    %c0_309 = arith.constant 0 : index
    %c3_310 = arith.constant 3 : index
    %c0_311 = arith.constant 0 : index
    %432 = vector.load %arg6[%c0_309, %c3_310, %c0_311] : memref<2x22x128xf32, #tpu.memory_space<vmem>>, vector<1x16x128xf32>
    %433 = vector.shape_cast %432 : vector<1x16x128xf32> to vector<16x128xf32>
    %c1_312 = arith.constant 1 : index
    %c3_313 = arith.constant 3 : index
    %c0_314 = arith.constant 0 : index
    %434 = vector.load %arg6[%c1_312, %c3_313, %c0_314] : memref<2x22x128xf32, #tpu.memory_space<vmem>>, vector<1x16x128xf32>
    %435 = vector.shape_cast %434 : vector<1x16x128xf32> to vector<16x128xf32>
    %c24 = arith.constant 24 : index
    %436 = memref.load %arg1[%c24] : memref<98xf32, #tpu.memory_space<smem>>
    %c73 = arith.constant 73 : index
    %437 = memref.load %arg1[%c73] : memref<98xf32, #tpu.memory_space<smem>>
    %438 = vector.broadcast %436 : f32 to vector<16x128xf32>
    %439 = arith.mulf %433, %438 : vector<16x128xf32>
    %440 = vector.broadcast %437 : f32 to vector<16x128xf32>
    %441 = arith.mulf %435, %440 : vector<16x128xf32>
    %442 = arith.addf %439, %441 : vector<16x128xf32>
    %443 = arith.addf %431, %442 : vector<16x128xf32>
    %c0_315 = arith.constant 0 : index
    %c4_316 = arith.constant 4 : index
    %c0_317 = arith.constant 0 : index
    %444 = vector.load %arg6[%c0_315, %c4_316, %c0_317] : memref<2x22x128xf32, #tpu.memory_space<vmem>>, vector<1x16x128xf32>
    %445 = vector.shape_cast %444 : vector<1x16x128xf32> to vector<16x128xf32>
    %c1_318 = arith.constant 1 : index
    %c4_319 = arith.constant 4 : index
    %c0_320 = arith.constant 0 : index
    %446 = vector.load %arg6[%c1_318, %c4_319, %c0_320] : memref<2x22x128xf32, #tpu.memory_space<vmem>>, vector<1x16x128xf32>
    %447 = vector.shape_cast %446 : vector<1x16x128xf32> to vector<16x128xf32>
    %c31 = arith.constant 31 : index
    %448 = memref.load %arg1[%c31] : memref<98xf32, #tpu.memory_space<smem>>
    %c80_321 = arith.constant 80 : index
    %449 = memref.load %arg1[%c80_321] : memref<98xf32, #tpu.memory_space<smem>>
    %450 = vector.broadcast %448 : f32 to vector<16x128xf32>
    %451 = arith.mulf %445, %450 : vector<16x128xf32>
    %452 = vector.broadcast %449 : f32 to vector<16x128xf32>
    %453 = arith.mulf %447, %452 : vector<16x128xf32>
    %454 = arith.addf %451, %453 : vector<16x128xf32>
    %455 = arith.addf %443, %454 : vector<16x128xf32>
    %c0_322 = arith.constant 0 : index
    %c5_323 = arith.constant 5 : index
    %c0_324 = arith.constant 0 : index
    %456 = vector.load %arg6[%c0_322, %c5_323, %c0_324] : memref<2x22x128xf32, #tpu.memory_space<vmem>>, vector<1x16x128xf32>
    %457 = vector.shape_cast %456 : vector<1x16x128xf32> to vector<16x128xf32>
    %c1_325 = arith.constant 1 : index
    %c5_326 = arith.constant 5 : index
    %c0_327 = arith.constant 0 : index
    %458 = vector.load %arg6[%c1_325, %c5_326, %c0_327] : memref<2x22x128xf32, #tpu.memory_space<vmem>>, vector<1x16x128xf32>
    %459 = vector.shape_cast %458 : vector<1x16x128xf32> to vector<16x128xf32>
    %c38 = arith.constant 38 : index
    %460 = memref.load %arg1[%c38] : memref<98xf32, #tpu.memory_space<smem>>
    %c87 = arith.constant 87 : index
    %461 = memref.load %arg1[%c87] : memref<98xf32, #tpu.memory_space<smem>>
    %462 = vector.broadcast %460 : f32 to vector<16x128xf32>
    %463 = arith.mulf %457, %462 : vector<16x128xf32>
    %464 = vector.broadcast %461 : f32 to vector<16x128xf32>
    %465 = arith.mulf %459, %464 : vector<16x128xf32>
    %466 = arith.addf %463, %465 : vector<16x128xf32>
    %467 = arith.addf %455, %466 : vector<16x128xf32>
    %c0_328 = arith.constant 0 : index
    %c6_329 = arith.constant 6 : index
    %c0_330 = arith.constant 0 : index
    %468 = vector.load %arg6[%c0_328, %c6_329, %c0_330] : memref<2x22x128xf32, #tpu.memory_space<vmem>>, vector<1x16x128xf32>
    %469 = vector.shape_cast %468 : vector<1x16x128xf32> to vector<16x128xf32>
    %c1_331 = arith.constant 1 : index
    %c6_332 = arith.constant 6 : index
    %c0_333 = arith.constant 0 : index
    %470 = vector.load %arg6[%c1_331, %c6_332, %c0_333] : memref<2x22x128xf32, #tpu.memory_space<vmem>>, vector<1x16x128xf32>
    %471 = vector.shape_cast %470 : vector<1x16x128xf32> to vector<16x128xf32>
    %c45 = arith.constant 45 : index
    %472 = memref.load %arg1[%c45] : memref<98xf32, #tpu.memory_space<smem>>
    %c94 = arith.constant 94 : index
    %473 = memref.load %arg1[%c94] : memref<98xf32, #tpu.memory_space<smem>>
    %474 = vector.broadcast %472 : f32 to vector<16x128xf32>
    %475 = arith.mulf %469, %474 : vector<16x128xf32>
    %476 = vector.broadcast %473 : f32 to vector<16x128xf32>
    %477 = arith.mulf %471, %476 : vector<16x128xf32>
    %478 = arith.addf %475, %477 : vector<16x128xf32>
    %479 = arith.addf %467, %478 : vector<16x128xf32>
    %c0_334 = arith.constant 0 : index
    %c0_335 = arith.constant 0 : index
    %480 = vector.load %arg7[%c0_334, %c0_335] : memref<16x128xf32, #tpu.memory_space<vmem>>, vector<16x128xf32>
    tpu.vector_store %arg7[%c0_334, %c0_335], %479 {strides = array<i32>} : memref<16x128xf32, #tpu.memory_space<vmem>>, vector<16x128xf32>,
    %c0_336 = arith.constant 0 : index
    %c3_337 = arith.constant 3 : index
    %481 = vector.load %arg7[%c0_336, %c3_337] : memref<16x128xf32, #tpu.memory_space<vmem>>, vector<16x16xf32>
    %482 = arith.addf %396, %481 : vector<16x16xf32>
    %c0_338 = arith.constant 0 : index
    %c0_339 = arith.constant 0 : index
    %c0_340 = arith.constant 0 : index
    %483 = vector.load %arg6[%c0_338, %c0_339, %c0_340] : memref<2x22x128xf32, #tpu.memory_space<vmem>>, vector<1x16x128xf32>
    %484 = vector.shape_cast %483 : vector<1x16x128xf32> to vector<16x128xf32>
    %c1_341 = arith.constant 1 : index
    %c0_342 = arith.constant 0 : index
    %c0_343 = arith.constant 0 : index
    %485 = vector.load %arg6[%c1_341, %c0_342, %c0_343] : memref<2x22x128xf32, #tpu.memory_space<vmem>>, vector<1x16x128xf32>
    %486 = vector.shape_cast %485 : vector<1x16x128xf32> to vector<16x128xf32>
    %c4_344 = arith.constant 4 : index
    %487 = memref.load %arg1[%c4_344] : memref<98xf32, #tpu.memory_space<smem>>
    %c53 = arith.constant 53 : index
    %488 = memref.load %arg1[%c53] : memref<98xf32, #tpu.memory_space<smem>>
    %489 = vector.broadcast %487 : f32 to vector<16x128xf32>
    %490 = arith.mulf %484, %489 : vector<16x128xf32>
    %491 = vector.broadcast %488 : f32 to vector<16x128xf32>
    %492 = arith.mulf %486, %491 : vector<16x128xf32>
    %493 = arith.addf %490, %492 : vector<16x128xf32>
    %c0_345 = arith.constant 0 : index
    %c1_346 = arith.constant 1 : index
    %c0_347 = arith.constant 0 : index
    %494 = vector.load %arg6[%c0_345, %c1_346, %c0_347] : memref<2x22x128xf32, #tpu.memory_space<vmem>>, vector<1x16x128xf32>
    %495 = vector.shape_cast %494 : vector<1x16x128xf32> to vector<16x128xf32>
    %c1_348 = arith.constant 1 : index
    %c1_349 = arith.constant 1 : index
    %c0_350 = arith.constant 0 : index
    %496 = vector.load %arg6[%c1_348, %c1_349, %c0_350] : memref<2x22x128xf32, #tpu.memory_space<vmem>>, vector<1x16x128xf32>
    %497 = vector.shape_cast %496 : vector<1x16x128xf32> to vector<16x128xf32>
    %c11_351 = arith.constant 11 : index
    %498 = memref.load %arg1[%c11_351] : memref<98xf32, #tpu.memory_space<smem>>
    %c60 = arith.constant 60 : index
    %499 = memref.load %arg1[%c60] : memref<98xf32, #tpu.memory_space<smem>>
    %500 = vector.broadcast %498 : f32 to vector<16x128xf32>
    %501 = arith.mulf %495, %500 : vector<16x128xf32>
    %502 = vector.broadcast %499 : f32 to vector<16x128xf32>
    %503 = arith.mulf %497, %502 : vector<16x128xf32>
    %504 = arith.addf %501, %503 : vector<16x128xf32>
    %505 = arith.addf %493, %504 : vector<16x128xf32>
    %c0_352 = arith.constant 0 : index
    %c2_353 = arith.constant 2 : index
    %c0_354 = arith.constant 0 : index
    %506 = vector.load %arg6[%c0_352, %c2_353, %c0_354] : memref<2x22x128xf32, #tpu.memory_space<vmem>>, vector<1x16x128xf32>
    %507 = vector.shape_cast %506 : vector<1x16x128xf32> to vector<16x128xf32>
    %c1_355 = arith.constant 1 : index
    %c2_356 = arith.constant 2 : index
    %c0_357 = arith.constant 0 : index
    %508 = vector.load %arg6[%c1_355, %c2_356, %c0_357] : memref<2x22x128xf32, #tpu.memory_space<vmem>>, vector<1x16x128xf32>
    %509 = vector.shape_cast %508 : vector<1x16x128xf32> to vector<16x128xf32>
    %c18_358 = arith.constant 18 : index
    %510 = memref.load %arg1[%c18_358] : memref<98xf32, #tpu.memory_space<smem>>
    %c67 = arith.constant 67 : index
    %511 = memref.load %arg1[%c67] : memref<98xf32, #tpu.memory_space<smem>>
    %512 = vector.broadcast %510 : f32 to vector<16x128xf32>
    %513 = arith.mulf %507, %512 : vector<16x128xf32>
    %514 = vector.broadcast %511 : f32 to vector<16x128xf32>
    %515 = arith.mulf %509, %514 : vector<16x128xf32>
    %516 = arith.addf %513, %515 : vector<16x128xf32>
    %517 = arith.addf %505, %516 : vector<16x128xf32>
    %c0_359 = arith.constant 0 : index
    %c3_360 = arith.constant 3 : index
    %c0_361 = arith.constant 0 : index
    %518 = vector.load %arg6[%c0_359, %c3_360, %c0_361] : memref<2x22x128xf32, #tpu.memory_space<vmem>>, vector<1x16x128xf32>
    %519 = vector.shape_cast %518 : vector<1x16x128xf32> to vector<16x128xf32>
    %c1_362 = arith.constant 1 : index
    %c3_363 = arith.constant 3 : index
    %c0_364 = arith.constant 0 : index
    %520 = vector.load %arg6[%c1_362, %c3_363, %c0_364] : memref<2x22x128xf32, #tpu.memory_space<vmem>>, vector<1x16x128xf32>
    %521 = vector.shape_cast %520 : vector<1x16x128xf32> to vector<16x128xf32>
    %c25 = arith.constant 25 : index
    %522 = memref.load %arg1[%c25] : memref<98xf32, #tpu.memory_space<smem>>
    %c74 = arith.constant 74 : index
    %523 = memref.load %arg1[%c74] : memref<98xf32, #tpu.memory_space<smem>>
    %524 = vector.broadcast %522 : f32 to vector<16x128xf32>
    %525 = arith.mulf %519, %524 : vector<16x128xf32>
    %526 = vector.broadcast %523 : f32 to vector<16x128xf32>
    %527 = arith.mulf %521, %526 : vector<16x128xf32>
    %528 = arith.addf %525, %527 : vector<16x128xf32>
    %529 = arith.addf %517, %528 : vector<16x128xf32>
    %c0_365 = arith.constant 0 : index
    %c4_366 = arith.constant 4 : index
    %c0_367 = arith.constant 0 : index
    %530 = vector.load %arg6[%c0_365, %c4_366, %c0_367] : memref<2x22x128xf32, #tpu.memory_space<vmem>>, vector<1x16x128xf32>
    %531 = vector.shape_cast %530 : vector<1x16x128xf32> to vector<16x128xf32>
    %c1_368 = arith.constant 1 : index
    %c4_369 = arith.constant 4 : index
    %c0_370 = arith.constant 0 : index
    %532 = vector.load %arg6[%c1_368, %c4_369, %c0_370] : memref<2x22x128xf32, #tpu.memory_space<vmem>>, vector<1x16x128xf32>
    %533 = vector.shape_cast %532 : vector<1x16x128xf32> to vector<16x128xf32>
    %c32_371 = arith.constant 32 : index
    %534 = memref.load %arg1[%c32_371] : memref<98xf32, #tpu.memory_space<smem>>
    %c81 = arith.constant 81 : index
    %535 = memref.load %arg1[%c81] : memref<98xf32, #tpu.memory_space<smem>>
    %536 = vector.broadcast %534 : f32 to vector<16x128xf32>
    %537 = arith.mulf %531, %536 : vector<16x128xf32>
    %538 = vector.broadcast %535 : f32 to vector<16x128xf32>
    %539 = arith.mulf %533, %538 : vector<16x128xf32>
    %540 = arith.addf %537, %539 : vector<16x128xf32>
    %541 = arith.addf %529, %540 : vector<16x128xf32>
    %c0_372 = arith.constant 0 : index
    %c5_373 = arith.constant 5 : index
    %c0_374 = arith.constant 0 : index
    %542 = vector.load %arg6[%c0_372, %c5_373, %c0_374] : memref<2x22x128xf32, #tpu.memory_space<vmem>>, vector<1x16x128xf32>
    %543 = vector.shape_cast %542 : vector<1x16x128xf32> to vector<16x128xf32>
    %c1_375 = arith.constant 1 : index
    %c5_376 = arith.constant 5 : index
    %c0_377 = arith.constant 0 : index
    %544 = vector.load %arg6[%c1_375, %c5_376, %c0_377] : memref<2x22x128xf32, #tpu.memory_space<vmem>>, vector<1x16x128xf32>
    %545 = vector.shape_cast %544 : vector<1x16x128xf32> to vector<16x128xf32>
    %c39 = arith.constant 39 : index
    %546 = memref.load %arg1[%c39] : memref<98xf32, #tpu.memory_space<smem>>
    %c88 = arith.constant 88 : index
    %547 = memref.load %arg1[%c88] : memref<98xf32, #tpu.memory_space<smem>>
    %548 = vector.broadcast %546 : f32 to vector<16x128xf32>
    %549 = arith.mulf %543, %548 : vector<16x128xf32>
    %550 = vector.broadcast %547 : f32 to vector<16x128xf32>
    %551 = arith.mulf %545, %550 : vector<16x128xf32>
    %552 = arith.addf %549, %551 : vector<16x128xf32>
    %553 = arith.addf %541, %552 : vector<16x128xf32>
    %c0_378 = arith.constant 0 : index
    %c6_379 = arith.constant 6 : index
    %c0_380 = arith.constant 0 : index
    %554 = vector.load %arg6[%c0_378, %c6_379, %c0_380] : memref<2x22x128xf32, #tpu.memory_space<vmem>>, vector<1x16x128xf32>
    %555 = vector.shape_cast %554 : vector<1x16x128xf32> to vector<16x128xf32>
    %c1_381 = arith.constant 1 : index
    %c6_382 = arith.constant 6 : index
    %c0_383 = arith.constant 0 : index
    %556 = vector.load %arg6[%c1_381, %c6_382, %c0_383] : memref<2x22x128xf32, #tpu.memory_space<vmem>>, vector<1x16x128xf32>
    %557 = vector.shape_cast %556 : vector<1x16x128xf32> to vector<16x128xf32>
    %c46 = arith.constant 46 : index
    %558 = memref.load %arg1[%c46] : memref<98xf32, #tpu.memory_space<smem>>
    %c95 = arith.constant 95 : index
    %559 = memref.load %arg1[%c95] : memref<98xf32, #tpu.memory_space<smem>>
    %560 = vector.broadcast %558 : f32 to vector<16x128xf32>
    %561 = arith.mulf %555, %560 : vector<16x128xf32>
    %562 = vector.broadcast %559 : f32 to vector<16x128xf32>
    %563 = arith.mulf %557, %562 : vector<16x128xf32>
    %564 = arith.addf %561, %563 : vector<16x128xf32>
    %565 = arith.addf %553, %564 : vector<16x128xf32>
    %c0_384 = arith.constant 0 : index
    %c0_385 = arith.constant 0 : index
    %566 = vector.load %arg7[%c0_384, %c0_385] : memref<16x128xf32, #tpu.memory_space<vmem>>, vector<16x128xf32>
    tpu.vector_store %arg7[%c0_384, %c0_385], %565 {strides = array<i32>} : memref<16x128xf32, #tpu.memory_space<vmem>>, vector<16x128xf32>,
    %c0_386 = arith.constant 0 : index
    %c4_387 = arith.constant 4 : index
    %567 = vector.load %arg7[%c0_386, %c4_387] : memref<16x128xf32, #tpu.memory_space<vmem>>, vector<16x16xf32>
    %568 = arith.addf %482, %567 : vector<16x16xf32>
    %c0_388 = arith.constant 0 : index
    %c0_389 = arith.constant 0 : index
    %c0_390 = arith.constant 0 : index
    %569 = vector.load %arg6[%c0_388, %c0_389, %c0_390] : memref<2x22x128xf32, #tpu.memory_space<vmem>>, vector<1x16x128xf32>
    %570 = vector.shape_cast %569 : vector<1x16x128xf32> to vector<16x128xf32>
    %c1_391 = arith.constant 1 : index
    %c0_392 = arith.constant 0 : index
    %c0_393 = arith.constant 0 : index
    %571 = vector.load %arg6[%c1_391, %c0_392, %c0_393] : memref<2x22x128xf32, #tpu.memory_space<vmem>>, vector<1x16x128xf32>
    %572 = vector.shape_cast %571 : vector<1x16x128xf32> to vector<16x128xf32>
    %c5_394 = arith.constant 5 : index
    %573 = memref.load %arg1[%c5_394] : memref<98xf32, #tpu.memory_space<smem>>
    %c54 = arith.constant 54 : index
    %574 = memref.load %arg1[%c54] : memref<98xf32, #tpu.memory_space<smem>>
    %575 = vector.broadcast %573 : f32 to vector<16x128xf32>
    %576 = arith.mulf %570, %575 : vector<16x128xf32>
    %577 = vector.broadcast %574 : f32 to vector<16x128xf32>
    %578 = arith.mulf %572, %577 : vector<16x128xf32>
    %579 = arith.addf %576, %578 : vector<16x128xf32>
    %c0_395 = arith.constant 0 : index
    %c1_396 = arith.constant 1 : index
    %c0_397 = arith.constant 0 : index
    %580 = vector.load %arg6[%c0_395, %c1_396, %c0_397] : memref<2x22x128xf32, #tpu.memory_space<vmem>>, vector<1x16x128xf32>
    %581 = vector.shape_cast %580 : vector<1x16x128xf32> to vector<16x128xf32>
    %c1_398 = arith.constant 1 : index
    %c1_399 = arith.constant 1 : index
    %c0_400 = arith.constant 0 : index
    %582 = vector.load %arg6[%c1_398, %c1_399, %c0_400] : memref<2x22x128xf32, #tpu.memory_space<vmem>>, vector<1x16x128xf32>
    %583 = vector.shape_cast %582 : vector<1x16x128xf32> to vector<16x128xf32>
    %c12_401 = arith.constant 12 : index
    %584 = memref.load %arg1[%c12_401] : memref<98xf32, #tpu.memory_space<smem>>
    %c61 = arith.constant 61 : index
    %585 = memref.load %arg1[%c61] : memref<98xf32, #tpu.memory_space<smem>>
    %586 = vector.broadcast %584 : f32 to vector<16x128xf32>
    %587 = arith.mulf %581, %586 : vector<16x128xf32>
    %588 = vector.broadcast %585 : f32 to vector<16x128xf32>
    %589 = arith.mulf %583, %588 : vector<16x128xf32>
    %590 = arith.addf %587, %589 : vector<16x128xf32>
    %591 = arith.addf %579, %590 : vector<16x128xf32>
    %c0_402 = arith.constant 0 : index
    %c2_403 = arith.constant 2 : index
    %c0_404 = arith.constant 0 : index
    %592 = vector.load %arg6[%c0_402, %c2_403, %c0_404] : memref<2x22x128xf32, #tpu.memory_space<vmem>>, vector<1x16x128xf32>
    %593 = vector.shape_cast %592 : vector<1x16x128xf32> to vector<16x128xf32>
    %c1_405 = arith.constant 1 : index
    %c2_406 = arith.constant 2 : index
    %c0_407 = arith.constant 0 : index
    %594 = vector.load %arg6[%c1_405, %c2_406, %c0_407] : memref<2x22x128xf32, #tpu.memory_space<vmem>>, vector<1x16x128xf32>
    %595 = vector.shape_cast %594 : vector<1x16x128xf32> to vector<16x128xf32>
    %c19 = arith.constant 19 : index
    %596 = memref.load %arg1[%c19] : memref<98xf32, #tpu.memory_space<smem>>
    %c68 = arith.constant 68 : index
    %597 = memref.load %arg1[%c68] : memref<98xf32, #tpu.memory_space<smem>>
    %598 = vector.broadcast %596 : f32 to vector<16x128xf32>
    %599 = arith.mulf %593, %598 : vector<16x128xf32>
    %600 = vector.broadcast %597 : f32 to vector<16x128xf32>
    %601 = arith.mulf %595, %600 : vector<16x128xf32>
    %602 = arith.addf %599, %601 : vector<16x128xf32>
    %603 = arith.addf %591, %602 : vector<16x128xf32>
    %c0_408 = arith.constant 0 : index
    %c3_409 = arith.constant 3 : index
    %c0_410 = arith.constant 0 : index
    %604 = vector.load %arg6[%c0_408, %c3_409, %c0_410] : memref<2x22x128xf32, #tpu.memory_space<vmem>>, vector<1x16x128xf32>
    %605 = vector.shape_cast %604 : vector<1x16x128xf32> to vector<16x128xf32>
    %c1_411 = arith.constant 1 : index
    %c3_412 = arith.constant 3 : index
    %c0_413 = arith.constant 0 : index
    %606 = vector.load %arg6[%c1_411, %c3_412, %c0_413] : memref<2x22x128xf32, #tpu.memory_space<vmem>>, vector<1x16x128xf32>
    %607 = vector.shape_cast %606 : vector<1x16x128xf32> to vector<16x128xf32>
    %c26 = arith.constant 26 : index
    %608 = memref.load %arg1[%c26] : memref<98xf32, #tpu.memory_space<smem>>
    %c75 = arith.constant 75 : index
    %609 = memref.load %arg1[%c75] : memref<98xf32, #tpu.memory_space<smem>>
    %610 = vector.broadcast %608 : f32 to vector<16x128xf32>
    %611 = arith.mulf %605, %610 : vector<16x128xf32>
    %612 = vector.broadcast %609 : f32 to vector<16x128xf32>
    %613 = arith.mulf %607, %612 : vector<16x128xf32>
    %614 = arith.addf %611, %613 : vector<16x128xf32>
    %615 = arith.addf %603, %614 : vector<16x128xf32>
    %c0_414 = arith.constant 0 : index
    %c4_415 = arith.constant 4 : index
    %c0_416 = arith.constant 0 : index
    %616 = vector.load %arg6[%c0_414, %c4_415, %c0_416] : memref<2x22x128xf32, #tpu.memory_space<vmem>>, vector<1x16x128xf32>
    %617 = vector.shape_cast %616 : vector<1x16x128xf32> to vector<16x128xf32>
    %c1_417 = arith.constant 1 : index
    %c4_418 = arith.constant 4 : index
    %c0_419 = arith.constant 0 : index
    %618 = vector.load %arg6[%c1_417, %c4_418, %c0_419] : memref<2x22x128xf32, #tpu.memory_space<vmem>>, vector<1x16x128xf32>
    %619 = vector.shape_cast %618 : vector<1x16x128xf32> to vector<16x128xf32>
    %c33 = arith.constant 33 : index
    %620 = memref.load %arg1[%c33] : memref<98xf32, #tpu.memory_space<smem>>
    %c82 = arith.constant 82 : index
    %621 = memref.load %arg1[%c82] : memref<98xf32, #tpu.memory_space<smem>>
    %622 = vector.broadcast %620 : f32 to vector<16x128xf32>
    %623 = arith.mulf %617, %622 : vector<16x128xf32>
    %624 = vector.broadcast %621 : f32 to vector<16x128xf32>
    %625 = arith.mulf %619, %624 : vector<16x128xf32>
    %626 = arith.addf %623, %625 : vector<16x128xf32>
    %627 = arith.addf %615, %626 : vector<16x128xf32>
    %c0_420 = arith.constant 0 : index
    %c5_421 = arith.constant 5 : index
    %c0_422 = arith.constant 0 : index
    %628 = vector.load %arg6[%c0_420, %c5_421, %c0_422] : memref<2x22x128xf32, #tpu.memory_space<vmem>>, vector<1x16x128xf32>
    %629 = vector.shape_cast %628 : vector<1x16x128xf32> to vector<16x128xf32>
    %c1_423 = arith.constant 1 : index
    %c5_424 = arith.constant 5 : index
    %c0_425 = arith.constant 0 : index
    %630 = vector.load %arg6[%c1_423, %c5_424, %c0_425] : memref<2x22x128xf32, #tpu.memory_space<vmem>>, vector<1x16x128xf32>
    %631 = vector.shape_cast %630 : vector<1x16x128xf32> to vector<16x128xf32>
    %c40 = arith.constant 40 : index
    %632 = memref.load %arg1[%c40] : memref<98xf32, #tpu.memory_space<smem>>
    %c89 = arith.constant 89 : index
    %633 = memref.load %arg1[%c89] : memref<98xf32, #tpu.memory_space<smem>>
    %634 = vector.broadcast %632 : f32 to vector<16x128xf32>
    %635 = arith.mulf %629, %634 : vector<16x128xf32>
    %636 = vector.broadcast %633 : f32 to vector<16x128xf32>
    %637 = arith.mulf %631, %636 : vector<16x128xf32>
    %638 = arith.addf %635, %637 : vector<16x128xf32>
    %639 = arith.addf %627, %638 : vector<16x128xf32>
    %c0_426 = arith.constant 0 : index
    %c6_427 = arith.constant 6 : index
    %c0_428 = arith.constant 0 : index
    %640 = vector.load %arg6[%c0_426, %c6_427, %c0_428] : memref<2x22x128xf32, #tpu.memory_space<vmem>>, vector<1x16x128xf32>
    %641 = vector.shape_cast %640 : vector<1x16x128xf32> to vector<16x128xf32>
    %c1_429 = arith.constant 1 : index
    %c6_430 = arith.constant 6 : index
    %c0_431 = arith.constant 0 : index
    %642 = vector.load %arg6[%c1_429, %c6_430, %c0_431] : memref<2x22x128xf32, #tpu.memory_space<vmem>>, vector<1x16x128xf32>
    %643 = vector.shape_cast %642 : vector<1x16x128xf32> to vector<16x128xf32>
    %c47 = arith.constant 47 : index
    %644 = memref.load %arg1[%c47] : memref<98xf32, #tpu.memory_space<smem>>
    %c96_432 = arith.constant 96 : index
    %645 = memref.load %arg1[%c96_432] : memref<98xf32, #tpu.memory_space<smem>>
    %646 = vector.broadcast %644 : f32 to vector<16x128xf32>
    %647 = arith.mulf %641, %646 : vector<16x128xf32>
    %648 = vector.broadcast %645 : f32 to vector<16x128xf32>
    %649 = arith.mulf %643, %648 : vector<16x128xf32>
    %650 = arith.addf %647, %649 : vector<16x128xf32>
    %651 = arith.addf %639, %650 : vector<16x128xf32>
    %c0_433 = arith.constant 0 : index
    %c0_434 = arith.constant 0 : index
    %652 = vector.load %arg7[%c0_433, %c0_434] : memref<16x128xf32, #tpu.memory_space<vmem>>, vector<16x128xf32>
    tpu.vector_store %arg7[%c0_433, %c0_434], %651 {strides = array<i32>} : memref<16x128xf32, #tpu.memory_space<vmem>>, vector<16x128xf32>,
    %c0_435 = arith.constant 0 : index
    %c5_436 = arith.constant 5 : index
    %653 = vector.load %arg7[%c0_435, %c5_436] : memref<16x128xf32, #tpu.memory_space<vmem>>, vector<16x16xf32>
    %654 = arith.addf %568, %653 : vector<16x16xf32>
    %c0_437 = arith.constant 0 : index
    %c0_438 = arith.constant 0 : index
    %c0_439 = arith.constant 0 : index
    %655 = vector.load %arg6[%c0_437, %c0_438, %c0_439] : memref<2x22x128xf32, #tpu.memory_space<vmem>>, vector<1x16x128xf32>
    %656 = vector.shape_cast %655 : vector<1x16x128xf32> to vector<16x128xf32>
    %c1_440 = arith.constant 1 : index
    %c0_441 = arith.constant 0 : index
    %c0_442 = arith.constant 0 : index
    %657 = vector.load %arg6[%c1_440, %c0_441, %c0_442] : memref<2x22x128xf32, #tpu.memory_space<vmem>>, vector<1x16x128xf32>
    %658 = vector.shape_cast %657 : vector<1x16x128xf32> to vector<16x128xf32>
    %c6_443 = arith.constant 6 : index
    %659 = memref.load %arg1[%c6_443] : memref<98xf32, #tpu.memory_space<smem>>
    %c55 = arith.constant 55 : index
    %660 = memref.load %arg1[%c55] : memref<98xf32, #tpu.memory_space<smem>>
    %661 = vector.broadcast %659 : f32 to vector<16x128xf32>
    %662 = arith.mulf %656, %661 : vector<16x128xf32>
    %663 = vector.broadcast %660 : f32 to vector<16x128xf32>
    %664 = arith.mulf %658, %663 : vector<16x128xf32>
    %665 = arith.addf %662, %664 : vector<16x128xf32>
    %c0_444 = arith.constant 0 : index
    %c1_445 = arith.constant 1 : index
    %c0_446 = arith.constant 0 : index
    %666 = vector.load %arg6[%c0_444, %c1_445, %c0_446] : memref<2x22x128xf32, #tpu.memory_space<vmem>>, vector<1x16x128xf32>
    %667 = vector.shape_cast %666 : vector<1x16x128xf32> to vector<16x128xf32>
    %c1_447 = arith.constant 1 : index
    %c1_448 = arith.constant 1 : index
    %c0_449 = arith.constant 0 : index
    %668 = vector.load %arg6[%c1_447, %c1_448, %c0_449] : memref<2x22x128xf32, #tpu.memory_space<vmem>>, vector<1x16x128xf32>
    %669 = vector.shape_cast %668 : vector<1x16x128xf32> to vector<16x128xf32>
    %c13_450 = arith.constant 13 : index
    %670 = memref.load %arg1[%c13_450] : memref<98xf32, #tpu.memory_space<smem>>
    %c62 = arith.constant 62 : index
    %671 = memref.load %arg1[%c62] : memref<98xf32, #tpu.memory_space<smem>>
    %672 = vector.broadcast %670 : f32 to vector<16x128xf32>
    %673 = arith.mulf %667, %672 : vector<16x128xf32>
    %674 = vector.broadcast %671 : f32 to vector<16x128xf32>
    %675 = arith.mulf %669, %674 : vector<16x128xf32>
    %676 = arith.addf %673, %675 : vector<16x128xf32>
    %677 = arith.addf %665, %676 : vector<16x128xf32>
    %c0_451 = arith.constant 0 : index
    %c2_452 = arith.constant 2 : index
    %c0_453 = arith.constant 0 : index
    %678 = vector.load %arg6[%c0_451, %c2_452, %c0_453] : memref<2x22x128xf32, #tpu.memory_space<vmem>>, vector<1x16x128xf32>
    %679 = vector.shape_cast %678 : vector<1x16x128xf32> to vector<16x128xf32>
    %c1_454 = arith.constant 1 : index
    %c2_455 = arith.constant 2 : index
    %c0_456 = arith.constant 0 : index
    %680 = vector.load %arg6[%c1_454, %c2_455, %c0_456] : memref<2x22x128xf32, #tpu.memory_space<vmem>>, vector<1x16x128xf32>
    %681 = vector.shape_cast %680 : vector<1x16x128xf32> to vector<16x128xf32>
    %c20 = arith.constant 20 : index
    %682 = memref.load %arg1[%c20] : memref<98xf32, #tpu.memory_space<smem>>
    %c69 = arith.constant 69 : index
    %683 = memref.load %arg1[%c69] : memref<98xf32, #tpu.memory_space<smem>>
    %684 = vector.broadcast %682 : f32 to vector<16x128xf32>
    %685 = arith.mulf %679, %684 : vector<16x128xf32>
    %686 = vector.broadcast %683 : f32 to vector<16x128xf32>
    %687 = arith.mulf %681, %686 : vector<16x128xf32>
    %688 = arith.addf %685, %687 : vector<16x128xf32>
    %689 = arith.addf %677, %688 : vector<16x128xf32>
    %c0_457 = arith.constant 0 : index
    %c3_458 = arith.constant 3 : index
    %c0_459 = arith.constant 0 : index
    %690 = vector.load %arg6[%c0_457, %c3_458, %c0_459] : memref<2x22x128xf32, #tpu.memory_space<vmem>>, vector<1x16x128xf32>
    %691 = vector.shape_cast %690 : vector<1x16x128xf32> to vector<16x128xf32>
    %c1_460 = arith.constant 1 : index
    %c3_461 = arith.constant 3 : index
    %c0_462 = arith.constant 0 : index
    %692 = vector.load %arg6[%c1_460, %c3_461, %c0_462] : memref<2x22x128xf32, #tpu.memory_space<vmem>>, vector<1x16x128xf32>
    %693 = vector.shape_cast %692 : vector<1x16x128xf32> to vector<16x128xf32>
    %c27 = arith.constant 27 : index
    %694 = memref.load %arg1[%c27] : memref<98xf32, #tpu.memory_space<smem>>
    %c76 = arith.constant 76 : index
    %695 = memref.load %arg1[%c76] : memref<98xf32, #tpu.memory_space<smem>>
    %696 = vector.broadcast %694 : f32 to vector<16x128xf32>
    %697 = arith.mulf %691, %696 : vector<16x128xf32>
    %698 = vector.broadcast %695 : f32 to vector<16x128xf32>
    %699 = arith.mulf %693, %698 : vector<16x128xf32>
    %700 = arith.addf %697, %699 : vector<16x128xf32>
    %701 = arith.addf %689, %700 : vector<16x128xf32>
    %c0_463 = arith.constant 0 : index
    %c4_464 = arith.constant 4 : index
    %c0_465 = arith.constant 0 : index
    %702 = vector.load %arg6[%c0_463, %c4_464, %c0_465] : memref<2x22x128xf32, #tpu.memory_space<vmem>>, vector<1x16x128xf32>
    %703 = vector.shape_cast %702 : vector<1x16x128xf32> to vector<16x128xf32>
    %c1_466 = arith.constant 1 : index
    %c4_467 = arith.constant 4 : index
    %c0_468 = arith.constant 0 : index
    %704 = vector.load %arg6[%c1_466, %c4_467, %c0_468] : memref<2x22x128xf32, #tpu.memory_space<vmem>>, vector<1x16x128xf32>
    %705 = vector.shape_cast %704 : vector<1x16x128xf32> to vector<16x128xf32>
    %c34 = arith.constant 34 : index
    %706 = memref.load %arg1[%c34] : memref<98xf32, #tpu.memory_space<smem>>
    %c83 = arith.constant 83 : index
    %707 = memref.load %arg1[%c83] : memref<98xf32, #tpu.memory_space<smem>>
    %708 = vector.broadcast %706 : f32 to vector<16x128xf32>
    %709 = arith.mulf %703, %708 : vector<16x128xf32>
    %710 = vector.broadcast %707 : f32 to vector<16x128xf32>
    %711 = arith.mulf %705, %710 : vector<16x128xf32>
    %712 = arith.addf %709, %711 : vector<16x128xf32>
    %713 = arith.addf %701, %712 : vector<16x128xf32>
    %c0_469 = arith.constant 0 : index
    %c5_470 = arith.constant 5 : index
    %c0_471 = arith.constant 0 : index
    %714 = vector.load %arg6[%c0_469, %c5_470, %c0_471] : memref<2x22x128xf32, #tpu.memory_space<vmem>>, vector<1x16x128xf32>
    %715 = vector.shape_cast %714 : vector<1x16x128xf32> to vector<16x128xf32>
    %c1_472 = arith.constant 1 : index
    %c5_473 = arith.constant 5 : index
    %c0_474 = arith.constant 0 : index
    %716 = vector.load %arg6[%c1_472, %c5_473, %c0_474] : memref<2x22x128xf32, #tpu.memory_space<vmem>>, vector<1x16x128xf32>
    %717 = vector.shape_cast %716 : vector<1x16x128xf32> to vector<16x128xf32>
    %c41 = arith.constant 41 : index
    %718 = memref.load %arg1[%c41] : memref<98xf32, #tpu.memory_space<smem>>
    %c90 = arith.constant 90 : index
    %719 = memref.load %arg1[%c90] : memref<98xf32, #tpu.memory_space<smem>>
    %720 = vector.broadcast %718 : f32 to vector<16x128xf32>
    %721 = arith.mulf %715, %720 : vector<16x128xf32>
    %722 = vector.broadcast %719 : f32 to vector<16x128xf32>
    %723 = arith.mulf %717, %722 : vector<16x128xf32>
    %724 = arith.addf %721, %723 : vector<16x128xf32>
    %725 = arith.addf %713, %724 : vector<16x128xf32>
    %c0_475 = arith.constant 0 : index
    %c6_476 = arith.constant 6 : index
    %c0_477 = arith.constant 0 : index
    %726 = vector.load %arg6[%c0_475, %c6_476, %c0_477] : memref<2x22x128xf32, #tpu.memory_space<vmem>>, vector<1x16x128xf32>
    %727 = vector.shape_cast %726 : vector<1x16x128xf32> to vector<16x128xf32>
    %c1_478 = arith.constant 1 : index
    %c6_479 = arith.constant 6 : index
    %c0_480 = arith.constant 0 : index
    %728 = vector.load %arg6[%c1_478, %c6_479, %c0_480] : memref<2x22x128xf32, #tpu.memory_space<vmem>>, vector<1x16x128xf32>
    %729 = vector.shape_cast %728 : vector<1x16x128xf32> to vector<16x128xf32>
    %c48_481 = arith.constant 48 : index
    %730 = memref.load %arg1[%c48_481] : memref<98xf32, #tpu.memory_space<smem>>
    %c97 = arith.constant 97 : index
    %731 = memref.load %arg1[%c97] : memref<98xf32, #tpu.memory_space<smem>>
    %732 = vector.broadcast %730 : f32 to vector<16x128xf32>
    %733 = arith.mulf %727, %732 : vector<16x128xf32>
    %734 = vector.broadcast %731 : f32 to vector<16x128xf32>
    %735 = arith.mulf %729, %734 : vector<16x128xf32>
    %736 = arith.addf %733, %735 : vector<16x128xf32>
    %737 = arith.addf %725, %736 : vector<16x128xf32>
    %c0_482 = arith.constant 0 : index
    %c0_483 = arith.constant 0 : index
    %738 = vector.load %arg7[%c0_482, %c0_483] : memref<16x128xf32, #tpu.memory_space<vmem>>, vector<16x128xf32>
    tpu.vector_store %arg7[%c0_482, %c0_483], %737 {strides = array<i32>} : memref<16x128xf32, #tpu.memory_space<vmem>>, vector<16x128xf32>,
    %c0_484 = arith.constant 0 : index
    %c6_485 = arith.constant 6 : index
    %739 = vector.load %arg7[%c0_484, %c6_485] : memref<16x128xf32, #tpu.memory_space<vmem>>, vector<16x16xf32>
    %740 = arith.addf %654, %739 : vector<16x16xf32>
    %c0_486 = arith.constant 0 : index
    %741 = memref.load %arg2[%c0_486] : memref<1xf32, #tpu.memory_space<smem>>
    %742 = vector.broadcast %741 : f32 to vector<16x16xf32>
    %743 = arith.addf %740, %742 : vector<16x16xf32>
    %744 = arith.negf %743 : vector<16x16xf32>
    %745 = math.exp %744 : vector<16x16xf32>
    %cst_487 = arith.constant 1.000000e+00 : f32
    %746 = vector.broadcast %cst_487 : f32 to vector<16x16xf32>
    %747 = arith.addf %746, %745 : vector<16x16xf32>
    %748 = arith.divf %746, %747 : vector<16x16xf32>
    %c0_488 = arith.constant 0 : index
    %c0_489 = arith.constant 0 : index
    %c0_490 = arith.constant 0 : index
    %749 = vector.load %arg6[%c0_488, %c0_489, %c0_490] : memref<2x22x128xf32, #tpu.memory_space<vmem>>, vector<1x16x16xf32>
    %750 = vector.shape_cast %749 : vector<1x16x16xf32> to vector<16x16xf32>
    %751 = vector.shape_cast %748 : vector<16x16xf32> to vector<1x16x16xf32>
    tpu.vector_store %arg6[%c0_488, %c0_489, %c0_490], %751 {strides = array<i32>} : memref<2x22x128xf32, #tpu.memory_space<vmem>>, vector<1x16x16xf32>,
    %c0_491 = arith.constant 0 : index
    %c0_492 = arith.constant 0 : index
    %c0_493 = arith.constant 0 : index
    %752 = vector.load %arg6[%c0_491, %c0_492, %c0_493] : memref<2x22x128xf32, #tpu.memory_space<vmem>>, vector<1x1x16xf32>
    %753 = vector.shape_cast %752 : vector<1x1x16xf32> to vector<1x16xf32>
    %c0_494 = arith.constant 0 : index
    %c0_495 = arith.constant 0 : index
    %754 = vector.load %arg5[%c0_494, %c0_495] : memref<2x256xf32, #tpu.memory_space<vmem>>, vector<1x16xf32>
    tpu.vector_store %arg5[%c0_494, %c0_495], %753 {strides = array<i32>} : memref<2x256xf32, #tpu.memory_space<vmem>>, vector<1x16xf32>,
    %c0_496 = arith.constant 0 : index
    %c1_497 = arith.constant 1 : index
    %c0_498 = arith.constant 0 : index
    %755 = vector.load %arg6[%c0_496, %c1_497, %c0_498] : memref<2x22x128xf32, #tpu.memory_space<vmem>>, vector<1x1x16xf32>
    %756 = vector.shape_cast %755 : vector<1x1x16xf32> to vector<1x16xf32>
    %c0_499 = arith.constant 0 : index
    %c16_500 = arith.constant 16 : index
    %757 = vector.load %arg5[%c0_499, %c16_500] : memref<2x256xf32, #tpu.memory_space<vmem>>, vector<1x16xf32>
    tpu.vector_store %arg5[%c0_499, %c16_500], %756 {strides = array<i32>} : memref<2x256xf32, #tpu.memory_space<vmem>>, vector<1x16xf32>,
    %c0_501 = arith.constant 0 : index
    %c2_502 = arith.constant 2 : index
    %c0_503 = arith.constant 0 : index
    %758 = vector.load %arg6[%c0_501, %c2_502, %c0_503] : memref<2x22x128xf32, #tpu.memory_space<vmem>>, vector<1x1x16xf32>
    %759 = vector.shape_cast %758 : vector<1x1x16xf32> to vector<1x16xf32>
    %c0_504 = arith.constant 0 : index
    %c32_505 = arith.constant 32 : index
    %760 = vector.load %arg5[%c0_504, %c32_505] : memref<2x256xf32, #tpu.memory_space<vmem>>, vector<1x16xf32>
    tpu.vector_store %arg5[%c0_504, %c32_505], %759 {strides = array<i32>} : memref<2x256xf32, #tpu.memory_space<vmem>>, vector<1x16xf32>,
    %c0_506 = arith.constant 0 : index
    %c3_507 = arith.constant 3 : index
    %c0_508 = arith.constant 0 : index
    %761 = vector.load %arg6[%c0_506, %c3_507, %c0_508] : memref<2x22x128xf32, #tpu.memory_space<vmem>>, vector<1x1x16xf32>
    %762 = vector.shape_cast %761 : vector<1x1x16xf32> to vector<1x16xf32>
    %c0_509 = arith.constant 0 : index
    %c48_510 = arith.constant 48 : index
    %763 = vector.load %arg5[%c0_509, %c48_510] : memref<2x256xf32, #tpu.memory_space<vmem>>, vector<1x16xf32>
    tpu.vector_store %arg5[%c0_509, %c48_510], %762 {strides = array<i32>} : memref<2x256xf32, #tpu.memory_space<vmem>>, vector<1x16xf32>,
    %c0_511 = arith.constant 0 : index
    %c4_512 = arith.constant 4 : index
    %c0_513 = arith.constant 0 : index
    %764 = vector.load %arg6[%c0_511, %c4_512, %c0_513] : memref<2x22x128xf32, #tpu.memory_space<vmem>>, vector<1x1x16xf32>
    %765 = vector.shape_cast %764 : vector<1x1x16xf32> to vector<1x16xf32>
    %c0_514 = arith.constant 0 : index
    %c64_515 = arith.constant 64 : index
    %766 = vector.load %arg5[%c0_514, %c64_515] : memref<2x256xf32, #tpu.memory_space<vmem>>, vector<1x16xf32>
    tpu.vector_store %arg5[%c0_514, %c64_515], %765 {strides = array<i32>} : memref<2x256xf32, #tpu.memory_space<vmem>>, vector<1x16xf32>,
    %c0_516 = arith.constant 0 : index
    %c5_517 = arith.constant 5 : index
    %c0_518 = arith.constant 0 : index
    %767 = vector.load %arg6[%c0_516, %c5_517, %c0_518] : memref<2x22x128xf32, #tpu.memory_space<vmem>>, vector<1x1x16xf32>
    %768 = vector.shape_cast %767 : vector<1x1x16xf32> to vector<1x16xf32>
    %c0_519 = arith.constant 0 : index
    %c80_520 = arith.constant 80 : index
    %769 = vector.load %arg5[%c0_519, %c80_520] : memref<2x256xf32, #tpu.memory_space<vmem>>, vector<1x16xf32>
    tpu.vector_store %arg5[%c0_519, %c80_520], %768 {strides = array<i32>} : memref<2x256xf32, #tpu.memory_space<vmem>>, vector<1x16xf32>,
    %c0_521 = arith.constant 0 : index
    %c6_522 = arith.constant 6 : index
    %c0_523 = arith.constant 0 : index
    %770 = vector.load %arg6[%c0_521, %c6_522, %c0_523] : memref<2x22x128xf32, #tpu.memory_space<vmem>>, vector<1x1x16xf32>
    %771 = vector.shape_cast %770 : vector<1x1x16xf32> to vector<1x16xf32>
    %c0_524 = arith.constant 0 : index
    %c96_525 = arith.constant 96 : index
    %772 = vector.load %arg5[%c0_524, %c96_525] : memref<2x256xf32, #tpu.memory_space<vmem>>, vector<1x16xf32>
    tpu.vector_store %arg5[%c0_524, %c96_525], %771 {strides = array<i32>} : memref<2x256xf32, #tpu.memory_space<vmem>>, vector<1x16xf32>,
    %c0_526 = arith.constant 0 : index
    %c7_527 = arith.constant 7 : index
    %c0_528 = arith.constant 0 : index
    %773 = vector.load %arg6[%c0_526, %c7_527, %c0_528] : memref<2x22x128xf32, #tpu.memory_space<vmem>>, vector<1x1x16xf32>
    %774 = vector.shape_cast %773 : vector<1x1x16xf32> to vector<1x16xf32>
    %c0_529 = arith.constant 0 : index
    %c112_530 = arith.constant 112 : index
    %775 = vector.load %arg5[%c0_529, %c112_530] : memref<2x256xf32, #tpu.memory_space<vmem>>, vector<1x16xf32>
    tpu.vector_store %arg5[%c0_529, %c112_530], %774 {strides = array<i32>} : memref<2x256xf32, #tpu.memory_space<vmem>>, vector<1x16xf32>,
    %c0_531 = arith.constant 0 : index
    %c8_532 = arith.constant 8 : index
    %c0_533 = arith.constant 0 : index
    %776 = vector.load %arg6[%c0_531, %c8_532, %c0_533] : memref<2x22x128xf32, #tpu.memory_space<vmem>>, vector<1x1x16xf32>
    %777 = vector.shape_cast %776 : vector<1x1x16xf32> to vector<1x16xf32>
    %c0_534 = arith.constant 0 : index
    %c128_535 = arith.constant 128 : index
    %778 = vector.load %arg5[%c0_534, %c128_535] : memref<2x256xf32, #tpu.memory_space<vmem>>, vector<1x16xf32>
    tpu.vector_store %arg5[%c0_534, %c128_535], %777 {strides = array<i32>} : memref<2x256xf32, #tpu.memory_space<vmem>>, vector<1x16xf32>,
    %c0_536 = arith.constant 0 : index
    %c9_537 = arith.constant 9 : index
    %c0_538 = arith.constant 0 : index
    %779 = vector.load %arg6[%c0_536, %c9_537, %c0_538] : memref<2x22x128xf32, #tpu.memory_space<vmem>>, vector<1x1x16xf32>
    %780 = vector.shape_cast %779 : vector<1x1x16xf32> to vector<1x16xf32>
    %c0_539 = arith.constant 0 : index
    %c144_540 = arith.constant 144 : index
    %781 = vector.load %arg5[%c0_539, %c144_540] : memref<2x256xf32, #tpu.memory_space<vmem>>, vector<1x16xf32>
    tpu.vector_store %arg5[%c0_539, %c144_540], %780 {strides = array<i32>} : memref<2x256xf32, #tpu.memory_space<vmem>>, vector<1x16xf32>,
    %c0_541 = arith.constant 0 : index
    %c10_542 = arith.constant 10 : index
    %c0_543 = arith.constant 0 : index
    %782 = vector.load %arg6[%c0_541, %c10_542, %c0_543] : memref<2x22x128xf32, #tpu.memory_space<vmem>>, vector<1x1x16xf32>
    %783 = vector.shape_cast %782 : vector<1x1x16xf32> to vector<1x16xf32>
    %c0_544 = arith.constant 0 : index
    %c160_545 = arith.constant 160 : index
    %784 = vector.load %arg5[%c0_544, %c160_545] : memref<2x256xf32, #tpu.memory_space<vmem>>, vector<1x16xf32>
    tpu.vector_store %arg5[%c0_544, %c160_545], %783 {strides = array<i32>} : memref<2x256xf32, #tpu.memory_space<vmem>>, vector<1x16xf32>,
    %c0_546 = arith.constant 0 : index
    %c11_547 = arith.constant 11 : index
    %c0_548 = arith.constant 0 : index
    %785 = vector.load %arg6[%c0_546, %c11_547, %c0_548] : memref<2x22x128xf32, #tpu.memory_space<vmem>>, vector<1x1x16xf32>
    %786 = vector.shape_cast %785 : vector<1x1x16xf32> to vector<1x16xf32>
    %c0_549 = arith.constant 0 : index
    %c176_550 = arith.constant 176 : index
    %787 = vector.load %arg5[%c0_549, %c176_550] : memref<2x256xf32, #tpu.memory_space<vmem>>, vector<1x16xf32>
    tpu.vector_store %arg5[%c0_549, %c176_550], %786 {strides = array<i32>} : memref<2x256xf32, #tpu.memory_space<vmem>>, vector<1x16xf32>,
    %c0_551 = arith.constant 0 : index
    %c12_552 = arith.constant 12 : index
    %c0_553 = arith.constant 0 : index
    %788 = vector.load %arg6[%c0_551, %c12_552, %c0_553] : memref<2x22x128xf32, #tpu.memory_space<vmem>>, vector<1x1x16xf32>
    %789 = vector.shape_cast %788 : vector<1x1x16xf32> to vector<1x16xf32>
    %c0_554 = arith.constant 0 : index
    %c192_555 = arith.constant 192 : index
    %790 = vector.load %arg5[%c0_554, %c192_555] : memref<2x256xf32, #tpu.memory_space<vmem>>, vector<1x16xf32>
    tpu.vector_store %arg5[%c0_554, %c192_555], %789 {strides = array<i32>} : memref<2x256xf32, #tpu.memory_space<vmem>>, vector<1x16xf32>,
    %c0_556 = arith.constant 0 : index
    %c13_557 = arith.constant 13 : index
    %c0_558 = arith.constant 0 : index
    %791 = vector.load %arg6[%c0_556, %c13_557, %c0_558] : memref<2x22x128xf32, #tpu.memory_space<vmem>>, vector<1x1x16xf32>
    %792 = vector.shape_cast %791 : vector<1x1x16xf32> to vector<1x16xf32>
    %c0_559 = arith.constant 0 : index
    %c208_560 = arith.constant 208 : index
    %793 = vector.load %arg5[%c0_559, %c208_560] : memref<2x256xf32, #tpu.memory_space<vmem>>, vector<1x16xf32>
    tpu.vector_store %arg5[%c0_559, %c208_560], %792 {strides = array<i32>} : memref<2x256xf32, #tpu.memory_space<vmem>>, vector<1x16xf32>,
    %c0_561 = arith.constant 0 : index
    %c14_562 = arith.constant 14 : index
    %c0_563 = arith.constant 0 : index
    %794 = vector.load %arg6[%c0_561, %c14_562, %c0_563] : memref<2x22x128xf32, #tpu.memory_space<vmem>>, vector<1x1x16xf32>
    %795 = vector.shape_cast %794 : vector<1x1x16xf32> to vector<1x16xf32>
    %c0_564 = arith.constant 0 : index
    %c224_565 = arith.constant 224 : index
    %796 = vector.load %arg5[%c0_564, %c224_565] : memref<2x256xf32, #tpu.memory_space<vmem>>, vector<1x16xf32>
    tpu.vector_store %arg5[%c0_564, %c224_565], %795 {strides = array<i32>} : memref<2x256xf32, #tpu.memory_space<vmem>>, vector<1x16xf32>,
    %c0_566 = arith.constant 0 : index
    %c15_567 = arith.constant 15 : index
    %c0_568 = arith.constant 0 : index
    %797 = vector.load %arg6[%c0_566, %c15_567, %c0_568] : memref<2x22x128xf32, #tpu.memory_space<vmem>>, vector<1x1x16xf32>
    %798 = vector.shape_cast %797 : vector<1x1x16xf32> to vector<1x16xf32>
    %c0_569 = arith.constant 0 : index
    %c240_570 = arith.constant 240 : index
    %799 = vector.load %arg5[%c0_569, %c240_570] : memref<2x256xf32, #tpu.memory_space<vmem>>, vector<1x16xf32>
    tpu.vector_store %arg5[%c0_569, %c240_570], %798 {strides = array<i32>} : memref<2x256xf32, #tpu.memory_space<vmem>>, vector<1x16xf32>,
    %c0_571 = arith.constant 0 : index
    %c0_572 = arith.constant 0 : index
    %800 = vector.load %arg5[%c0_571, %c0_572] : memref<2x256xf32, #tpu.memory_space<vmem>>, vector<1x256xf32>
    %801 = vector.shape_cast %800 : vector<1x256xf32> to vector<1x256xf32>
    %802 = vector.broadcast %801 : vector<1x256xf32> to vector<4x256xf32>
    %c0_573 = arith.constant 0 : index
    %c0_574 = arith.constant 0 : index
    %c0_575 = arith.constant 0 : index
    %803 = vector.load %arg3[%c0_573, %c0_574, %c0_575] : memref<1x4x256xf32, #tpu.memory_space<vmem>>, vector<1x4x256xf32>
    %804 = vector.shape_cast %803 : vector<1x4x256xf32> to vector<4x256xf32>
    %805 = arith.mulf %804, %802 : vector<4x256xf32>
    %c0_576 = arith.constant 0 : index
    %c0_577 = arith.constant 0 : index
    %c0_578 = arith.constant 0 : index
    %806 = vector.load %arg4[%c0_576, %c0_577, %c0_578] : memref<1x4x256xf32, #tpu.memory_space<vmem>>, vector<1x4x256xf32>
    %807 = vector.shape_cast %806 : vector<1x4x256xf32> to vector<4x256xf32>
    %808 = vector.shape_cast %805 : vector<4x256xf32> to vector<1x4x256xf32>
    tpu.vector_store %arg4[%c0_576, %c0_577, %c0_578], %808 {strides = array<i32>} : memref<1x4x256xf32, #tpu.memory_space<vmem>>, vector<1x4x256xf32>,
    return
  }
  func.func @transform_0(%arg0: i32) -> i32 {
    %c0_i32 = arith.constant 0 : i32
    %c0_i32_0 = arith.constant 0 : i32
    return %c0_i32 : i32
  }
  func.func @transform_1(%arg0: i32) -> i32 {
    %c0_i32 = arith.constant 0 : i32
    %c0_i32_0 = arith.constant 0 : i32
    return %c0_i32 : i32
  }
  func.func @transform_2(%arg0: i32) -> (i32, i32, i32) {
    %c0_i32 = arith.constant 0 : i32
    %c0_i32_0 = arith.constant 0 : i32
    %c0_i32_1 = arith.constant 0 : i32
    return %arg0, %c0_i32, %c0_i32_0 : i32, i32, i32
  }
  func.func @transform_3(%arg0: i32) -> (i32, i32, i32) {
    %c0_i32 = arith.constant 0 : i32
    %c0_i32_0 = arith.constant 0 : i32
    %c0_i32_1 = arith.constant 0 : i32
    return %arg0, %c0_i32, %c0_i32_0 : i32, i32, i32
  }
}

</mosaic_0001>

<llo_original>
// kernel: tpu_custom_call.1
$region0: #{tpu_custom_call.1}
  #allocation0 [shape = 'u32[]', space=smem, size = 0x4, offset = 0x4, fixed_abs, tag = 'smem constant byte address 0x4 - core index']
  #allocation1 [shape = 'u32[144,128]{1,0:T(1,128)}', space=vmem, size = 0x12000, scoped, tag = 'internal scratch']
  #allocation2 [shape = 'f32[2,256]{1,0:T(2,128)}', space=vmem, size = 0x800, scoped, tag = 'scratch operand']
  #allocation3 [shape = 'f32[2,22,128]{2,1,0:T(8,128)}', space=vmem, size = 0x6000, scoped, tag = 'scratch operand']
  #allocation4 [shape = 'f32[16,128]{1,0:T(8,128)}', space=vmem, size = 0x2000, scoped, tag = 'scratch operand']
  #allocation5 [shape = 'f32[1]{0:T(128)S(6)}', space=smem, size = 0x200, scoped, tag = 'scoped memory for tpu_custom_call.1']
  %s0 = inlined_call_operand.vmem [shape: f32[98], index: 0, kind: input, shape index: {}]
  %s1 = inlined_call_operand.<no memory space> [shape: f32[1], index: 1, kind: input, shape index: {}]
  %s2 = inlined_call_operand.hbm [shape: f32[2,4,256], index: 2, kind: input, shape index: {}]
  %s3 = inlined_call_operand.hbm [shape: f32[2,4,256], index: 3, kind: output, shape index: {}]
  %s4 = sld [smem:[#allocation0]]
  $region53: #{tpu_custom_call.1} parent=0
    _
  %s6 = ssub.s32 1, %s4
  %s7 = scalar_select 0, %s6, %s4
  %8 = sst [smem:[#allocation5]] %s1
  $region1: #{tpu_custom_call.1} parent=0
    #allocation6 [shape = 'u8[512]{0}', space=smem, size = 0x200, scoped, tag = 'input window, operand 0, single buffered']
    #allocation7 [shape = 's32[2]{0}', space=sflag, size = 0x8, scoped, tag = 'scoped memory for tpu_custom_call.1']
    #allocation8 [shape = 's32[2]{0}', space=sflag, size = 0x8, scoped, tag = 'scoped memory for tpu_custom_call.1']
    #allocation9 [shape = 's32[2]{0}', space=sflag, size = 0x8, scoped, tag = 'scoped memory for tpu_custom_call.1']
    #allocation10 [shape = 'u8[8192]{0}', space=vmem, size = 0x2000, scoped, tag = 'input window, operand 2']
    #allocation11 [shape = 'u8[8192]{0}', space=vmem, size = 0x2000, scoped, tag = 'output window, operand 0']
    %9 = vsyncpa [#allocation9], 0
    %10 = vsyncpa [#allocation7], 0
    %s11 = scalar_lea.sflag [#allocation7], 1
    %12 = vsyncpa %s11, 0
    %13 = vsyncpa [#allocation8], 0
    %s14 = scalar_lea.sflag [#allocation8], 1
    %15 = vsyncpa %s14, 0
    loop: start=0, step=1, limit=4
    $region2: #{tpu_custom_call.1} parent=1 // loop_pre_header
      _
    $region3: #{tpu_custom_call.1} parent=1 // loop_header
      %s17 = sphi 0, %s21
      %p18 = scmp.ge.s32.totalorder %s17, 4
      %s25 = sphi 0, %s25
      %s27 = sphi 0, %s25
      %s28 = sphi 0, %s27
      %s42 = sphi 0, %s28
      %s46 = sphi 0, %s46
      %s48 = sphi 0, %s46
      %s49 = sphi 0, %s48
      %s63 = sphi 0, %s49
      %s69 = sphi 0, %s71
      %s72 = sphi 0, %s69
      %s73 = sphi 0, %s72
      %s89 = sphi 0, %s73
      %s95 = sphi 0, %s97
      %s98 = sphi 0, %s95
      %s99 = sphi 0, %s98
      %s115 = sphi 0, %s99
    $region4: #{tpu_custom_call.1} parent=1 // loop_header_branch
      %20 = sbr.rel (%p18) target = $region8
    $region5: #{tpu_custom_call.1} parent=1 // loop_body
      %s22 = ssub.s32 %s17, 1
      %s23 = ssub.s32 %s17, 2
      %s24 = sadd.s32 %s17, 1
      %s26 = sadd.s32 %s25, 1
      %p29 = scmp.eq.s32.totalorder %s17, 1
      %p30 = scmp.ne.s32.totalorder %s25, %s27
      %p31 = scmp.eq.s32.totalorder %s17, 0
      %p32 = por %p30, %p31
      %p33 = scmp.ne.s32.totalorder %s25, %s27
      %p34 = scmp.eq.s32.totalorder %s22, 1
      %p35 = por %p33, %p34
      %p36 = scmp.ne.s32.totalorder %s27, %s28
      %p37 = scmp.eq.s32.totalorder %s22, 0
      %p38 = por %p36, %p37
      %p39 = scmp.ne.s32.totalorder %s27, %s28
      %p40 = scmp.eq.s32.totalorder %s23, 1
      %p41 = por %p39, %p40
      %p43 = scmp.ne.s32.totalorder %s28, %s42
      %p44 = scmp.eq.s32.totalorder %s23, 0
      %p45 = por %p43, %p44
      %s47 = sadd.s32 %s46, 1
      %p50 = scmp.eq.s32.totalorder %s17, 1
      %p51 = scmp.ne.s32.totalorder %s46, %s48
      %p52 = scmp.eq.s32.totalorder %s17, 0
      %p53 = por %p51, %p52
      %p54 = scmp.ne.s32.totalorder %s46, %s48
      %p55 = scmp.eq.s32.totalorder %s22, 1
      %p56 = por %p54, %p55
      %p57 = scmp.ne.s32.totalorder %s48, %s49
      %p58 = scmp.eq.s32.totalorder %s22, 0
      %p59 = por %p57, %p58
      %p60 = scmp.ne.s32.totalorder %s48, %s49
      %p61 = scmp.eq.s32.totalorder %s23, 1
      %p62 = por %p60, %p61
      %p64 = scmp.ne.s32.totalorder %s49, %s63
      %p65 = scmp.eq.s32.totalorder %s23, 0
      %p66 = por %p64, %p65
      %s67 = ssub.s32 %s17, %s24
      %p68 = scmp.eq.s32.totalorder %s67, 0
      %s70 = sadd.s32 %s69, 1
      %s71 = scalar_select %p68, %s69, %s70
      %p74 = pneg %p68
      %p75 = scmp.eq.s32.totalorder %s17, 1
      %p76 = por %p74, %p75
      %p77 = scmp.ne.s32.totalorder %s69, %s72
      %p78 = scmp.eq.s32.totalorder %s17, 0
      %p79 = por %p77, %p78
      %p80 = scmp.ne.s32.totalorder %s69, %s72
      %p81 = scmp.eq.s32.totalorder %s22, 1
      %p82 = por %p80, %p81
      %p83 = scmp.ne.s32.totalorder %s72, %s73
      %p84 = scmp.eq.s32.totalorder %s22, 0
      %p85 = por %p83, %p84
      %p86 = scmp.ne.s32.totalorder %s72, %s73
      %p87 = scmp.eq.s32.totalorder %s23, 1
      %p88 = por %p86, %p87
      %p90 = scmp.ne.s32.totalorder %s73, %s89
      %p91 = scmp.eq.s32.totalorder %s23, 0
      %p92 = por %p90, %p91
      %s93 = ssub.s32 %s17, %s24
      %p94 = scmp.eq.s32.totalorder %s93, 0
      %s96 = sadd.s32 %s95, 1
      %s97 = scalar_select %p94, %s95, %s96
      %p100 = pneg %p94
      %p101 = scmp.eq.s32.totalorder %s17, 1
      %p102 = por %p100, %p101
      %p103 = scmp.ne.s32.totalorder %s95, %s98
      %p104 = scmp.eq.s32.totalorder %s17, 0
      %p105 = por %p103, %p104
      %p106 = scmp.ne.s32.totalorder %s95, %s98
      %p107 = scmp.eq.s32.totalorder %s22, 1
      %p108 = por %p106, %p107
      %p109 = scmp.ne.s32.totalorder %s98, %s99
      %p110 = scmp.eq.s32.totalorder %s22, 0
      %p111 = por %p109, %p110
      %p112 = scmp.ne.s32.totalorder %s98, %s99
      %p113 = scmp.eq.s32.totalorder %s23, 1
      %p114 = por %p112, %p113
      %p116 = scmp.ne.s32.totalorder %s99, %s115
      %p117 = scmp.eq.s32.totalorder %s23, 0
      %p118 = por %p116, %p117
      %p119 = scmp.le.s32.totalorder 1, %s17
      %p120 = scmp.lt.s32.totalorder %s17, 3
      %p121 = pnand %p119, %p120
      %p122 = pneg %p121
      // Predicated region
      $region9: #{tpu_custom_call.1} parent=5 // pred_check
        _
      $region10: #{tpu_custom_call.1} parent=5 // pred_check_branch
        %124 = sbr.rel (%p121) target = $region12
      $region11: #{tpu_custom_call.1} parent=5 // pred_region
        %s125 = ssub.s32 %s17, 1
        // Predicated region
        $region13: #{tpu_custom_call.1} parent=11 // pred_check
          %p126 = pneg %p38
        $region14: #{tpu_custom_call.1} parent=11 // pred_check_branch
          %128 = sbr.rel (%p126) target = $region16
        $region15: #{tpu_custom_call.1} parent=11 // pred_region
          %s130 = ssub.s32 16, 16
          %131 = vsyncadd [#allocation9], %s130
          %s133 = sshll.u32 %s0, 4
          %s134 = int_to_ptr.vmem [resolvable:$true] %s133
          %136 = dma.vmem_to_smem %s134, 16, [#allocation6], [#allocation9]
        $region16: #{tpu_custom_call.1} parent=11 // pred_fallthru
          _
        // Predicated region
        $region17: #{tpu_custom_call.1} parent=11 // pred_check
          %p137 = pneg %p59
        $region18: #{tpu_custom_call.1} parent=11 // pred_check_branch
          %139 = sbr.rel (%p137) target = $region20
        $region19: #{tpu_custom_call.1} parent=11 // pred_region
          _
        $region20: #{tpu_custom_call.1} parent=11 // pred_fallthru
          _
      $region12: #{tpu_custom_call.1} parent=5 // pred_fallthru
        _
      %p140 = scmp.lt.s32.totalorder %s17, 2
      // Predicated region
      $region21: #{tpu_custom_call.1} parent=5 // pred_check
        %p141 = pneg %p140
      $region22: #{tpu_custom_call.1} parent=5 // pred_check_branch
        %143 = sbr.rel (%p141) target = $region24
      $region23: #{tpu_custom_call.1} parent=5 // pred_region
        // Predicated region
        $region25: #{tpu_custom_call.1} parent=23 // pred_check
          %p144 = pneg %p79
        $region26: #{tpu_custom_call.1} parent=23 // pred_check_branch
          %146 = sbr.rel (%p144) target = $region28
        $region27: #{tpu_custom_call.1} parent=23 // pred_region
          %s147 = sand.u32 %s69, 1
          %s148 = scalar_lea.sflag [#allocation7], %s147
          %s149 = sand.u32 %s69, 1
          %s150 = smul.addr %s149, 8
          %s151 = scalar_lea.vmem [#allocation10], %s150
          %s153 = ssub.s32 128, 128
          %154 = vsyncadd %s148, %s153
          %s155 = smul.addr %s17, 2
          %s156 = smul.addr %s155, 64
          %s157 = scalar_lea.hbm %s2, %s156
          %s159 = sshll.u32 %s151, 4
          %s160 = int_to_ptr.vmem [resolvable:$true] %s159
          %162 = dma.hbm_to_vmem [thread:$0]  %s157, 128, %s160, %s148
        $region28: #{tpu_custom_call.1} parent=23 // pred_fallthru
          _
      $region24: #{tpu_custom_call.1} parent=5 // pred_fallthru
        _
      %p163 = scmp.le.s32.totalorder 1, %s17
      %p164 = scmp.lt.s32.totalorder %s17, 3
      %p165 = pnand %p163, %p164
      %p166 = pneg %p165
      // Predicated region
      $region29: #{tpu_custom_call.1} parent=5 // pred_check
        _
      $region30: #{tpu_custom_call.1} parent=5 // pred_check_branch
        %168 = sbr.rel (%p165) target = $region32
      $region31: #{tpu_custom_call.1} parent=5 // pred_region
        %s169 = ssub.s32 %s17, 1
        // Predicated region
        $region33: #{tpu_custom_call.1} parent=31 // pred_check
          %p170 = pneg %p38
        $region34: #{tpu_custom_call.1} parent=31 // pred_check_branch
          %172 = sbr.rel (%p170) target = $region36
        $region35: #{tpu_custom_call.1} parent=31 // pred_region
          %173 = dma.done [#allocation9], 16
        $region36: #{tpu_custom_call.1} parent=31 // pred_fallthru
          _
        %s174 = sand.u32 %s72, 1
        %s175 = scalar_lea.sflag [#allocation7], %s174
        %s176 = sand.u32 %s72, 1
        %s177 = smul.addr %s176, 8
        %s178 = scalar_lea.vmem [#allocation10], %s177
        // Predicated region
        $region37: #{tpu_custom_call.1} parent=31 // pred_check
          %p179 = pneg %p85
        $region38: #{tpu_custom_call.1} parent=31 // pred_check_branch
          %181 = sbr.rel (%p179) target = $region40
        $region39: #{tpu_custom_call.1} parent=31 // pred_region
          %182 = dma.done %s175, 128
        $region40: #{tpu_custom_call.1} parent=31 // pred_fallthru
          _
        %183 = sfence
        %p184 = pneg %p38
        %p185 = pneg %p35
        %p186 = pneg %p59
        %p187 = pneg %p56
        %s188 = sand.u32 %s72, 1
        %s189 = scalar_lea.sflag [#allocation7], %s188
        %s190 = sand.u32 %s72, 1
        %s191 = smul.addr %s190, 8
        %s192 = scalar_lea.vmem [#allocation10], %s191
        %p193 = pneg %p85
        %p194 = pneg %p82
        %p195 = pneg %p111
        %p196 = pneg %p108
        %s197 = sand.u32 %s98, 1
        %s198 = scalar_lea.sflag [#allocation8], %s197
        %s199 = sand.u32 %s98, 1
        %s200 = smul.addr %s199, 8
        %s201 = scalar_lea.vmem [#allocation11], %s200
        %202 = vst [vmem:[#allocation3] sm:$0xff] 0.0
        %203 = vst [vmem:[#allocation3 + $0x8] sm:$0xff] 0.0
        %204 = vst [vmem:[#allocation3 + $0x10] sm:$0x3f] 0.0
        %205 = vst [vmem:[#allocation3 + $0x18] sm:$0xff] 0.0
        %206 = vst [vmem:[#allocation3 + $0x20] sm:$0xff] 0.0
        %207 = vst [vmem:[#allocation3 + $0x28] sm:$0x3f] 0.0
        %v208 = vld [vmem:[%s178] sm:$0xff]
        %v210 = vcombine.high %v208, %v208
        %vm212 = vcmask 1043456
        %v213 = vsel %vm212, %v208, -inf
        %v214 = vrot.slane %v213, 4
        %v215 = vmax.f32 %v213, %v214
        %v216 = vrot.slane %v215, 2
        %v217 = vmax.f32 %v215, %v216
        %v218 = vrot.slane %v217, 1
        %v219 = vmax.f32 %v217, %v218
        %v220 = vsel %vm212, %v210, -inf
        %v221 = vrot.slane %v220, 4
        %v222 = vmax.f32 %v220, %v221
        %v223 = vrot.slane %v222, 2
        %v224 = vmax.f32 %v222, %v223
        %v225 = vrot.slane %v224, 1
        %v226 = vmax.f32 %v224, %v225
        %v227 = vsel %vm212, %v208, 0.0
        %v228 = vrot.slane %v227, 4
        %v229 = vadd.f32 %v227, %v228
        %v230 = vrot.slane %v229, 2
        %v231 = vadd.f32 %v229, %v230
        %v232 = vrot.slane %v231, 1
        %v233 = vadd.f32 %v231, %v232
        %v234 = vsel %vm212, %v210, 0.0
        %v235 = vrot.slane %v234, 4
        %v236 = vadd.f32 %v234, %v235
        %v237 = vrot.slane %v236, 2
        %v238 = vadd.f32 %v236, %v237
        %v239 = vrot.slane %v238, 1
        %v240 = vadd.f32 %v238, %v239
        %v241 = vmul.f32 %v233, 0.25
        %v242 = vmul.f32 %v240, 0.25
        %v245 = vcombine.low %v219, %v226
        %v247 = vunpack.c.l.s4 1966171168
        %v248 = vunpack.c.0.s8 %v247
        %v249 = vlaneseq
        %v250 = vshrl.u32 %v249, 7
        %v251 = vsub.s32 %v248, %v250
        %v252 = vrot.slane %v245, %v251
        %v254 = vunpack.c.l.s4 1966171168
        %v255 = vunpack.c.0.s8 %v254
        %v256 = vlaneseq
        %v257 = vshrl.u32 %v256, 7
        %v258 = vsub.s32 %v255, %v257
        %v259 = vrot.slane %v252, %v258
        %v261 = vlaneseq
        %vm262 = vcmp.ge.s32.totalorder %v261, 0
        %vm263 = vcmp.lt.s32.totalorder %v261, 256
        %vm264 = vmand %vm262, %vm263
        %265 = vst.msk [vmem:[#allocation2] ss:$2 sm:$0x3] %vm264, %v259
        %v268 = vcombine.low %v241, %v242
        %v270 = vunpack.c.l.s4 1966171168
        %v271 = vunpack.c.0.s8 %v270
        %v272 = vlaneseq
        %v273 = vshrl.u32 %v272, 7
        %v274 = vsub.s32 %v271, %v273
        %v275 = vrot.slane %v268, %v274
        %v277 = vunpack.c.l.s4 1966171168
        %v278 = vunpack.c.0.s8 %v277
        %v279 = vlaneseq
        %v280 = vshrl.u32 %v279, 7
        %v281 = vsub.s32 %v278, %v280
        %v282 = vrot.slane %v275, %v281
        %s284 = scalar_lea.vmem [#allocation2], 1
        %285 = vst.msk [vmem:[%s284] ss:$2 sm:$0x3] %vm264, %v282
        %v286 = vld [vmem:[#allocation2] sm:$0x1]
        %v288 = vlaneseq
        %v289 = vshrl.u32 %v288, 7
        %v290 = vsub.s32 0, %v289
        %v291 = vrot.slane %v286, %v290
        %292 = vrot.lane.b32.xlu0 %v291, 3
        %v293 = vpop.permute.xlu0 %292
        %vm295 = vcmask 147480
        %296 = vst.msk [vmem:[#allocation3 + $0x3] sm:$0x1] %vm295, %v293
        %v297 = vld [vmem:[#allocation2 + $0x1] sm:$0x1]
        %v299 = vlaneseq
        %v300 = vshrl.u32 %v299, 7
        %v301 = vsub.s32 0, %v300
        %v302 = vrot.slane %v297, %v301
        %303 = vrot.lane.b32.xlu0 %v302, 3
        %v304 = vpop.permute.xlu0 %303
        %s306 = scalar_lea.vmem [#allocation3], 24
        %307 = vst.msk [vmem:[%s306 + $0x3] sm:$0x1] %vm295, %v304
        %v308 = vld [vmem:[#allocation2] sm:$0x1]
        %v310 = vlaneseq
        %v311 = vshrl.u32 %v310, 7
        %v312 = vsub.s32 0, %v311
        %v313 = vrot.slane %v308, %v312
        %314 = vrot.lane.b32.xlu0 %v313, 115
        %v315 = vpop.permute.xlu0 %314
        %317 = vst.msk [vmem:[#allocation3 + $0x4] sm:$0x1] %vm295, %v315
        %v318 = vld [vmem:[#allocation2 + $0x1] sm:$0x1]
        %v320 = vlaneseq
        %v321 = vshrl.u32 %v320, 7
        %v322 = vsub.s32 0, %v321
        %v323 = vrot.slane %v318, %v322
        %324 = vrot.lane.b32.xlu0 %v323, 115
        %v325 = vpop.permute.xlu0 %324
        %327 = vst.msk [vmem:[%s306 + $0x4] sm:$0x1] %vm295, %v325
        %v328 = vld [vmem:[#allocation2] sm:$0x1]
        %v330 = vlaneseq
        %v331 = vshrl.u32 %v330, 7
        %v332 = vsub.s32 0, %v331
        %v333 = vrot.slane %v328, %v332
        %334 = vrot.lane.b32.xlu0 %v333, 99
        %v335 = vpop.permute.xlu0 %334
        %337 = vst.msk [vmem:[#allocation3 + $0x5] sm:$0x1] %vm295, %v335
        %v338 = vld [vmem:[#allocation2 + $0x1] sm:$0x1]
        %v340 = vlaneseq
        %v341 = vshrl.u32 %v340, 7
        %v342 = vsub.s32 0, %v341
        %v343 = vrot.slane %v338, %v342
        %344 = vrot.lane.b32.xlu0 %v343, 99
        %v345 = vpop.permute.xlu0 %344
        %347 = vst.msk [vmem:[%s306 + $0x5] sm:$0x1] %vm295, %v345
        %v348 = vld [vmem:[#allocation2] sm:$0x1]
        %v350 = vlaneseq
        %v351 = vshrl.u32 %v350, 7
        %v352 = vsub.s32 0, %v351
        %v353 = vrot.slane %v348, %v352
        %354 = vrot.lane.b32.xlu0 %v353, 83
        %v355 = vpop.permute.xlu0 %354
        %357 = vst.msk [vmem:[#allocation3 + $0x6] sm:$0x1] %vm295, %v355
        %v358 = vld [vmem:[#allocation2 + $0x1] sm:$0x1]
        %v360 = vlaneseq
        %v361 = vshrl.u32 %v360, 7
        %v362 = vsub.s32 0, %v361
        %v363 = vrot.slane %v358, %v362
        %364 = vrot.lane.b32.xlu0 %v363, 83
        %v365 = vpop.permute.xlu0 %364
        %367 = vst.msk [vmem:[%s306 + $0x6] sm:$0x1] %vm295, %v365
        %v368 = vld [vmem:[#allocation2] sm:$0x1]
        %v370 = vlaneseq
        %v371 = vshrl.u32 %v370, 7
        %v372 = vsub.s32 0, %v371
        %v373 = vrot.slane %v368, %v372
        %374 = vrot.lane.b32.xlu0 %v373, 67
        %v375 = vpop.permute.xlu0 %374
        %377 = vst.msk [vmem:[#allocation3 + $0x7] sm:$0x1] %vm295, %v375
        %v378 = vld [vmem:[#allocation2 + $0x1] sm:$0x1]
        %v380 = vlaneseq
        %v381 = vshrl.u32 %v380, 7
        %v382 = vsub.s32 0, %v381
        %v383 = vrot.slane %v378, %v382
        %384 = vrot.lane.b32.xlu0 %v383, 67
        %v385 = vpop.permute.xlu0 %384
        %387 = vst.msk [vmem:[%s306 + $0x7] sm:$0x1] %vm295, %v385
        %v388 = vld [vmem:[#allocation2] sm:$0x1]
        %v390 = vlaneseq
        %v391 = vshrl.u32 %v390, 7
        %v392 = vsub.s32 0, %v391
        %v393 = vrot.slane %v388, %v392
        %394 = vrot.lane.b32.xlu0 %v393, 51
        %v395 = vpop.permute.xlu0 %394
        %397 = vst.msk [vmem:[#allocation3 + $0x8] sm:$0x1] %vm295, %v395
        %v398 = vld [vmem:[#allocation2 + $0x1] sm:$0x1]
        %v400 = vlaneseq
        %v401 = vshrl.u32 %v400, 7
        %v402 = vsub.s32 0, %v401
        %v403 = vrot.slane %v398, %v402
        %404 = vrot.lane.b32.xlu0 %v403, 51
        %v405 = vpop.permute.xlu0 %404
        %407 = vst.msk [vmem:[%s306 + $0x8] sm:$0x1] %vm295, %v405
        %v408 = vld [vmem:[#allocation2] sm:$0x1]
        %v410 = vlaneseq
        %v411 = vshrl.u32 %v410, 7
        %v412 = vsub.s32 0, %v411
        %v413 = vrot.slane %v408, %v412
        %414 = vrot.lane.b32.xlu0 %v413, 35
        %v415 = vpop.permute.xlu0 %414
        %417 = vst.msk [vmem:[#allocation3 + $0x9] sm:$0x1] %vm295, %v415
        %v418 = vld [vmem:[#allocation2 + $0x1] sm:$0x1]
        %v420 = vlaneseq
        %v421 = vshrl.u32 %v420, 7
        %v422 = vsub.s32 0, %v421
        %v423 = vrot.slane %v418, %v422
        %424 = vrot.lane.b32.xlu0 %v423, 35
        %v425 = vpop.permute.xlu0 %424
        %427 = vst.msk [vmem:[%s306 + $0x9] sm:$0x1] %vm295, %v425
        %v428 = vld [vmem:[#allocation2] sm:$0x1]
        %v430 = vlaneseq
        %v431 = vshrl.u32 %v430, 7
        %v432 = vsub.s32 0, %v431
        %v433 = vrot.slane %v428, %v432
        %434 = vrot.lane.b32.xlu0 %v433, 19
        %v435 = vpop.permute.xlu0 %434
        %437 = vst.msk [vmem:[#allocation3 + $0xa] sm:$0x1] %vm295, %v435
        %v438 = vld [vmem:[#allocation2 + $0x1] sm:$0x1]
        %v440 = vlaneseq
        %v441 = vshrl.u32 %v440, 7
        %v442 = vsub.s32 0, %v441
        %v443 = vrot.slane %v438, %v442
        %444 = vrot.lane.b32.xlu0 %v443, 19
        %v445 = vpop.permute.xlu0 %444
        %447 = vst.msk [vmem:[%s306 + $0xa] sm:$0x1] %vm295, %v445
        %v448 = vld [vmem:[#allocation2 + $0x2] sm:$0x1]
        %v450 = vlaneseq
        %v451 = vshrl.u32 %v450, 7
        %v452 = vsub.s32 0, %v451
        %v453 = vrot.slane %v448, %v452
        %454 = vrot.lane.b32.xlu0 %v453, 3
        %v455 = vpop.permute.xlu0 %454
        %457 = vst.msk [vmem:[#allocation3 + $0xb] sm:$0x1] %vm295, %v455
        %v458 = vld [vmem:[#allocation2 + $0x3] sm:$0x1]
        %v460 = vlaneseq
        %v461 = vshrl.u32 %v460, 7
        %v462 = vsub.s32 0, %v461
        %v463 = vrot.slane %v458, %v462
        %464 = vrot.lane.b32.xlu0 %v463, 3
        %v465 = vpop.permute.xlu0 %464
        %467 = vst.msk [vmem:[%s306 + $0xb] sm:$0x1] %vm295, %v465
        %v468 = vld [vmem:[#allocation2 + $0x2] sm:$0x1]
        %v470 = vlaneseq
        %v471 = vshrl.u32 %v470, 7
        %v472 = vsub.s32 0, %v471
        %v473 = vrot.slane %v468, %v472
        %474 = vrot.lane.b32.xlu0 %v473, 115
        %v475 = vpop.permute.xlu0 %474
        %477 = vst.msk [vmem:[#allocation3 + $0xc] sm:$0x1] %vm295, %v475
        %v478 = vld [vmem:[#allocation2 + $0x3] sm:$0x1]
        %v480 = vlaneseq
        %v481 = vshrl.u32 %v480, 7
        %v482 = vsub.s32 0, %v481
        %v483 = vrot.slane %v478, %v482
        %484 = vrot.lane.b32.xlu0 %v483, 115
        %v485 = vpop.permute.xlu0 %484
        %487 = vst.msk [vmem:[%s306 + $0xc] sm:$0x1] %vm295, %v485
        %v488 = vld [vmem:[#allocation2 + $0x2] sm:$0x1]
        %v490 = vlaneseq
        %v491 = vshrl.u32 %v490, 7
        %v492 = vsub.s32 0, %v491
        %v493 = vrot.slane %v488, %v492
        %494 = vrot.lane.b32.xlu0 %v493, 99
        %v495 = vpop.permute.xlu0 %494
        %497 = vst.msk [vmem:[#allocation3 + $0xd] sm:$0x1] %vm295, %v495
        %v498 = vld [vmem:[#allocation2 + $0x3] sm:$0x1]
        %v500 = vlaneseq
        %v501 = vshrl.u32 %v500, 7
        %v502 = vsub.s32 0, %v501
        %v503 = vrot.slane %v498, %v502
        %504 = vrot.lane.b32.xlu0 %v503, 99
        %v505 = vpop.permute.xlu0 %504
        %507 = vst.msk [vmem:[%s306 + $0xd] sm:$0x1] %vm295, %v505
        %v508 = vld [vmem:[#allocation2 + $0x2] sm:$0x1]
        %v510 = vlaneseq
        %v511 = vshrl.u32 %v510, 7
        %v512 = vsub.s32 0, %v511
        %v513 = vrot.slane %v508, %v512
        %514 = vrot.lane.b32.xlu0 %v513, 83
        %v515 = vpop.permute.xlu0 %514
        %517 = vst.msk [vmem:[#allocation3 + $0xe] sm:$0x1] %vm295, %v515
        %v518 = vld [vmem:[#allocation2 + $0x3] sm:$0x1]
        %v520 = vlaneseq
        %v521 = vshrl.u32 %v520, 7
        %v522 = vsub.s32 0, %v521
        %v523 = vrot.slane %v518, %v522
        %524 = vrot.lane.b32.xlu0 %v523, 83
        %v525 = vpop.permute.xlu0 %524
        %527 = vst.msk [vmem:[%s306 + $0xe] sm:$0x1] %vm295, %v525
        %v528 = vld [vmem:[#allocation2 + $0x2] sm:$0x1]
        %v530 = vlaneseq
        %v531 = vshrl.u32 %v530, 7
        %v532 = vsub.s32 0, %v531
        %v533 = vrot.slane %v528, %v532
        %534 = vrot.lane.b32.xlu0 %v533, 67
        %v535 = vpop.permute.xlu0 %534
        %537 = vst.msk [vmem:[#allocation3 + $0xf] sm:$0x1] %vm295, %v535
        %v538 = vld [vmem:[#allocation2 + $0x3] sm:$0x1]
        %v540 = vlaneseq
        %v541 = vshrl.u32 %v540, 7
        %v542 = vsub.s32 0, %v541
        %v543 = vrot.slane %v538, %v542
        %544 = vrot.lane.b32.xlu0 %v543, 67
        %v545 = vpop.permute.xlu0 %544
        %547 = vst.msk [vmem:[%s306 + $0xf] sm:$0x1] %vm295, %v545
        %v548 = vld [vmem:[#allocation2 + $0x2] sm:$0x1]
        %v550 = vlaneseq
        %v551 = vshrl.u32 %v550, 7
        %v552 = vsub.s32 0, %v551
        %v553 = vrot.slane %v548, %v552
        %554 = vrot.lane.b32.xlu0 %v553, 51
        %v555 = vpop.permute.xlu0 %554
        %557 = vst.msk [vmem:[#allocation3 + $0x10] sm:$0x1] %vm295, %v555
        %v558 = vld [vmem:[#allocation2 + $0x3] sm:$0x1]
        %v560 = vlaneseq
        %v561 = vshrl.u32 %v560, 7
        %v562 = vsub.s32 0, %v561
        %v563 = vrot.slane %v558, %v562
        %564 = vrot.lane.b32.xlu0 %v563, 51
        %v565 = vpop.permute.xlu0 %564
        %567 = vst.msk [vmem:[%s306 + $0x10] sm:$0x1] %vm295, %v565
        %v568 = vld [vmem:[#allocation2 + $0x2] sm:$0x1]
        %v570 = vlaneseq
        %v571 = vshrl.u32 %v570, 7
        %v572 = vsub.s32 0, %v571
        %v573 = vrot.slane %v568, %v572
        %574 = vrot.lane.b32.xlu0 %v573, 35
        %v575 = vpop.permute.xlu0 %574
        %577 = vst.msk [vmem:[#allocation3 + $0x11] sm:$0x1] %vm295, %v575
        %v578 = vld [vmem:[#allocation2 + $0x3] sm:$0x1]
        %v580 = vlaneseq
        %v581 = vshrl.u32 %v580, 7
        %v582 = vsub.s32 0, %v581
        %v583 = vrot.slane %v578, %v582
        %584 = vrot.lane.b32.xlu0 %v583, 35
        %v585 = vpop.permute.xlu0 %584
        %587 = vst.msk [vmem:[%s306 + $0x11] sm:$0x1] %vm295, %v585
        %v588 = vld [vmem:[#allocation2 + $0x2] sm:$0x1]
        %v590 = vlaneseq
        %v591 = vshrl.u32 %v590, 7
        %v592 = vsub.s32 0, %v591
        %v593 = vrot.slane %v588, %v592
        %594 = vrot.lane.b32.xlu0 %v593, 19
        %v595 = vpop.permute.xlu0 %594
        %597 = vst.msk [vmem:[#allocation3 + $0x12] sm:$0x1] %vm295, %v595
        %v598 = vld [vmem:[#allocation2 + $0x3] sm:$0x1]
        %v600 = vlaneseq
        %v601 = vshrl.u32 %v600, 7
        %v602 = vsub.s32 0, %v601
        %v603 = vrot.slane %v598, %v602
        %604 = vrot.lane.b32.xlu0 %v603, 19
        %v605 = vpop.permute.xlu0 %604
        %607 = vst.msk [vmem:[%s306 + $0x12] sm:$0x1] %vm295, %v605
        %v608 = vld [vmem:[#allocation3] sm:$0xff]
        %v609 = vld [vmem:[#allocation3 + $0x8] sm:$0xff]
        %v610 = vld [vmem:[%s306] sm:$0xff]
        %v611 = vld [vmem:[%s306 + $0x8] sm:$0xff]
        %s612 = sld [smem:[#allocation6]]
        %s613 = sld [smem:[#allocation6 + $0x31]]
        %v614 = vstv %s612
        %v615 = vmul.f32 %v608, %v614
        %v616 = vmul.f32 %v609, %v614
        %v617 = vstv %s613
        %v618 = vmul.f32 %v610, %v617
        %v619 = vmul.f32 %v611, %v617
        %v620 = vadd.f32 %v615, %v618
        %v621 = vadd.f32 %v616, %v619
        %v622 = vld [vmem:[#allocation3 + $0x1] sm:$0xff]
        %v623 = vld [vmem:[#allocation3 + $0x9] sm:$0xff]
        %v624 = vld [vmem:[%s306 + $0x1] sm:$0xff]
        %v625 = vld [vmem:[%s306 + $0x9] sm:$0xff]
        %s626 = sld [smem:[#allocation6 + $0x7]]
        %s627 = sld [smem:[#allocation6 + $0x38]]
        %v628 = vstv %s626
        %v629 = vmul.f32 %v622, %v628
        %v630 = vmul.f32 %v623, %v628
        %v631 = vstv %s627
        %v632 = vmul.f32 %v624, %v631
        %v633 = vmul.f32 %v625, %v631
        %v634 = vadd.f32 %v629, %v632
        %v635 = vadd.f32 %v630, %v633
        %v636 = vadd.f32 %v620, %v634
        %v637 = vadd.f32 %v621, %v635
        %v638 = vld [vmem:[#allocation3 + $0x2] sm:$0xff]
        %v639 = vld [vmem:[#allocation3 + $0xa] sm:$0xff]
        %v640 = vld [vmem:[%s306 + $0x2] sm:$0xff]
        %v641 = vld [vmem:[%s306 + $0xa] sm:$0xff]
        %s642 = sld [smem:[#allocation6 + $0xe]]
        %s643 = sld [smem:[#allocation6 + $0x3f]]
        %v644 = vstv %s642
        %v645 = vmul.f32 %v638, %v644
        %v646 = vmul.f32 %v639, %v644
        %v647 = vstv %s643
        %v648 = vmul.f32 %v640, %v647
        %v649 = vmul.f32 %v641, %v647
        %v650 = vadd.f32 %v645, %v648
        %v651 = vadd.f32 %v646, %v649
        %v652 = vadd.f32 %v636, %v650
        %v653 = vadd.f32 %v637, %v651
        %v654 = vld [vmem:[#allocation3 + $0x3] sm:$0xff]
        %v655 = vld [vmem:[#allocation3 + $0xb] sm:$0xff]
        %v656 = vld [vmem:[%s306 + $0x3] sm:$0xff]
        %v657 = vld [vmem:[%s306 + $0xb] sm:$0xff]
        %s658 = sld [smem:[#allocation6 + $0x15]]
        %s659 = sld [smem:[#allocation6 + $0x46]]
        %v660 = vstv %s658
        %v661 = vmul.f32 %v654, %v660
        %v662 = vmul.f32 %v655, %v660
        %v663 = vstv %s659
        %v664 = vmul.f32 %v656, %v663
        %v665 = vmul.f32 %v657, %v663
        %v666 = vadd.f32 %v661, %v664
        %v667 = vadd.f32 %v662, %v665
        %v668 = vadd.f32 %v652, %v666
        %v669 = vadd.f32 %v653, %v667
        %v670 = vld [vmem:[#allocation3 + $0x4] sm:$0xff]
        %v671 = vld [vmem:[#allocation3 + $0xc] sm:$0xff]
        %v672 = vld [vmem:[%s306 + $0x4] sm:$0xff]
        %v673 = vld [vmem:[%s306 + $0xc] sm:$0xff]
        %s674 = sld [smem:[#allocation6 + $0x1c]]
        %s675 = sld [smem:[#allocation6 + $0x4d]]
        %v676 = vstv %s674
        %v677 = vmul.f32 %v670, %v676
        %v678 = vmul.f32 %v671, %v676
        %v679 = vstv %s675
        %v680 = vmul.f32 %v672, %v679
        %v681 = vmul.f32 %v673, %v679
        %v682 = vadd.f32 %v677, %v680
        %v683 = vadd.f32 %v678, %v681
        %v684 = vadd.f32 %v668, %v682
        %v685 = vadd.f32 %v669, %v683
        %v686 = vld [vmem:[#allocation3 + $0x5] sm:$0xff]
        %v687 = vld [vmem:[#allocation3 + $0xd] sm:$0xff]
        %v688 = vld [vmem:[%s306 + $0x5] sm:$0xff]
        %v689 = vld [vmem:[%s306 + $0xd] sm:$0xff]
        %s690 = sld [smem:[#allocation6 + $0x23]]
        %s691 = sld [smem:[#allocation6 + $0x54]]
        %v692 = vstv %s690
        %v693 = vmul.f32 %v686, %v692
        %v694 = vmul.f32 %v687, %v692
        %v695 = vstv %s691
        %v696 = vmul.f32 %v688, %v695
        %v697 = vmul.f32 %v689, %v695
        %v698 = vadd.f32 %v693, %v696
        %v699 = vadd.f32 %v694, %v697
        %v700 = vadd.f32 %v684, %v698
        %v701 = vadd.f32 %v685, %v699
        %v702 = vld [vmem:[#allocation3 + $0x6] sm:$0xff]
        %v703 = vld [vmem:[#allocation3 + $0xe] sm:$0xff]
        %v704 = vld [vmem:[%s306 + $0x6] sm:$0xff]
        %v705 = vld [vmem:[%s306 + $0xe] sm:$0xff]
        %s706 = sld [smem:[#allocation6 + $0x2a]]
        %s707 = sld [smem:[#allocation6 + $0x5b]]
        %v708 = vstv %s706
        %v709 = vmul.f32 %v702, %v708
        %v710 = vmul.f32 %v703, %v708
        %v711 = vstv %s707
        %v712 = vmul.f32 %v704, %v711
        %v713 = vmul.f32 %v705, %v711
        %v714 = vadd.f32 %v709, %v712
        %v715 = vadd.f32 %v710, %v713
        %v716 = vadd.f32 %v700, %v714
        %v717 = vadd.f32 %v701, %v715
        %718 = vst [vmem:[#allocation4] sm:$0xff] %v716
        %719 = vst [vmem:[#allocation4 + $0x8] sm:$0xff] %v717
        %v720 = vld [vmem:[#allocation4] sm:$0xff]
        %v721 = vld [vmem:[#allocation4 + $0x8] sm:$0xff]
        %v722 = vld [vmem:[#allocation3] sm:$0xff]
        %v723 = vld [vmem:[#allocation3 + $0x8] sm:$0xff]
        %v724 = vld [vmem:[%s306] sm:$0xff]
        %v725 = vld [vmem:[%s306 + $0x8] sm:$0xff]
        %s726 = sld [smem:[#allocation6 + $0x1]]
        %s727 = sld [smem:[#allocation6 + $0x32]]
        %v728 = vstv %s726
        %v729 = vmul.f32 %v722, %v728
        %v730 = vmul.f32 %v723, %v728
        %v731 = vstv %s727
        %v732 = vmul.f32 %v724, %v731
        %v733 = vmul.f32 %v725, %v731
        %v734 = vadd.f32 %v729, %v732
        %v735 = vadd.f32 %v730, %v733
        %v736 = vld [vmem:[#allocation3 + $0x1] sm:$0xff]
        %v737 = vld [vmem:[#allocation3 + $0x9] sm:$0xff]
        %v738 = vld [vmem:[%s306 + $0x1] sm:$0xff]
        %v739 = vld [vmem:[%s306 + $0x9] sm:$0xff]
        %s740 = sld [smem:[#allocation6 + $0x8]]
        %s741 = sld [smem:[#allocation6 + $0x39]]
        %v742 = vstv %s740
        %v743 = vmul.f32 %v736, %v742
        %v744 = vmul.f32 %v737, %v742
        %v745 = vstv %s741
        %v746 = vmul.f32 %v738, %v745
        %v747 = vmul.f32 %v739, %v745
        %v748 = vadd.f32 %v743, %v746
        %v749 = vadd.f32 %v744, %v747
        %v750 = vadd.f32 %v734, %v748
        %v751 = vadd.f32 %v735, %v749
        %v752 = vld [vmem:[#allocation3 + $0x2] sm:$0xff]
        %v753 = vld [vmem:[#allocation3 + $0xa] sm:$0xff]
        %v754 = vld [vmem:[%s306 + $0x2] sm:$0xff]
        %v755 = vld [vmem:[%s306 + $0xa] sm:$0xff]
        %s756 = sld [smem:[#allocation6 + $0xf]]
        %s757 = sld [smem:[#allocation6 + $0x40]]
        %v758 = vstv %s756
        %v759 = vmul.f32 %v752, %v758
        %v760 = vmul.f32 %v753, %v758
        %v761 = vstv %s757
        %v762 = vmul.f32 %v754, %v761
        %v763 = vmul.f32 %v755, %v761
        %v764 = vadd.f32 %v759, %v762
        %v765 = vadd.f32 %v760, %v763
        %v766 = vadd.f32 %v750, %v764
        %v767 = vadd.f32 %v751, %v765
        %v768 = vld [vmem:[#allocation3 + $0x3] sm:$0xff]
        %v769 = vld [vmem:[#allocation3 + $0xb] sm:$0xff]
        %v770 = vld [vmem:[%s306 + $0x3] sm:$0xff]
        %v771 = vld [vmem:[%s306 + $0xb] sm:$0xff]
        %s772 = sld [smem:[#allocation6 + $0x16]]
        %s773 = sld [smem:[#allocation6 + $0x47]]
        %v774 = vstv %s772
        %v775 = vmul.f32 %v768, %v774
        %v776 = vmul.f32 %v769, %v774
        %v777 = vstv %s773
        %v778 = vmul.f32 %v770, %v777
        %v779 = vmul.f32 %v771, %v777
        %v780 = vadd.f32 %v775, %v778
        %v781 = vadd.f32 %v776, %v779
        %v782 = vadd.f32 %v766, %v780
        %v783 = vadd.f32 %v767, %v781
        %v784 = vld [vmem:[#allocation3 + $0x4] sm:$0xff]
        %v785 = vld [vmem:[#allocation3 + $0xc] sm:$0xff]
        %v786 = vld [vmem:[%s306 + $0x4] sm:$0xff]
        %v787 = vld [vmem:[%s306 + $0xc] sm:$0xff]
        %s788 = sld [smem:[#allocation6 + $0x1d]]
        %s789 = sld [smem:[#allocation6 + $0x4e]]
        %v790 = vstv %s788
        %v791 = vmul.f32 %v784, %v790
        %v792 = vmul.f32 %v785, %v790
        %v793 = vstv %s789
        %v794 = vmul.f32 %v786, %v793
        %v795 = vmul.f32 %v787, %v793
        %v796 = vadd.f32 %v791, %v794
        %v797 = vadd.f32 %v792, %v795
        %v798 = vadd.f32 %v782, %v796
        %v799 = vadd.f32 %v783, %v797
        %v800 = vld [vmem:[#allocation3 + $0x5] sm:$0xff]
        %v801 = vld [vmem:[#allocation3 + $0xd] sm:$0xff]
        %v802 = vld [vmem:[%s306 + $0x5] sm:$0xff]
        %v803 = vld [vmem:[%s306 + $0xd] sm:$0xff]
        %s804 = sld [smem:[#allocation6 + $0x24]]
        %s805 = sld [smem:[#allocation6 + $0x55]]
        %v806 = vstv %s804
        %v807 = vmul.f32 %v800, %v806
        %v808 = vmul.f32 %v801, %v806
        %v809 = vstv %s805
        %v810 = vmul.f32 %v802, %v809
        %v811 = vmul.f32 %v803, %v809
        %v812 = vadd.f32 %v807, %v810
        %v813 = vadd.f32 %v808, %v811
        %v814 = vadd.f32 %v798, %v812
        %v815 = vadd.f32 %v799, %v813
        %v816 = vld [vmem:[#allocation3 + $0x6] sm:$0xff]
        %v817 = vld [vmem:[#allocation3 + $0xe] sm:$0xff]
        %v818 = vld [vmem:[%s306 + $0x6] sm:$0xff]
        %v819 = vld [vmem:[%s306 + $0xe] sm:$0xff]
        %s820 = sld [smem:[#allocation6 + $0x2b]]
        %s821 = sld [smem:[#allocation6 + $0x5c]]
        %v822 = vstv %s820
        %v823 = vmul.f32 %v816, %v822
        %v824 = vmul.f32 %v817, %v822
        %v825 = vstv %s821
        %v826 = vmul.f32 %v818, %v825
        %v827 = vmul.f32 %v819, %v825
        %v828 = vadd.f32 %v823, %v826
        %v829 = vadd.f32 %v824, %v827
        %v830 = vadd.f32 %v814, %v828
        %v831 = vadd.f32 %v815, %v829
        %832 = vst [vmem:[#allocation4] sm:$0xff] %v830
        %833 = vst [vmem:[#allocation4 + $0x8] sm:$0xff] %v831
        %v834 = vld [vmem:[#allocation4] sm:$0xff]
        %v835 = vld [vmem:[#allocation4 + $0x8] sm:$0xff]
        %838 = vrot.lane.b32.xlu0 %v834, 127
        %v839 = vpop.permute.xlu0 %838
        %840 = vrot.lane.b32.xlu0 %v835, 127
        %v841 = vpop.permute.xlu0 %840
        %v844 = vadd.f32 %v720, %v839
        %v845 = vadd.f32 %v721, %v841
        %v846 = vld [vmem:[#allocation3] sm:$0xff]
        %v847 = vld [vmem:[#allocation3 + $0x8] sm:$0xff]
        %v848 = vld [vmem:[%s306] sm:$0xff]
        %v849 = vld [vmem:[%s306 + $0x8] sm:$0xff]
        %s850 = sld [smem:[#allocation6 + $0x2]]
        %s851 = sld [smem:[#allocation6 + $0x33]]
        %v852 = vstv %s850
        %v853 = vmul.f32 %v846, %v852
        %v854 = vmul.f32 %v847, %v852
        %v855 = vstv %s851
        %v856 = vmul.f32 %v848, %v855
        %v857 = vmul.f32 %v849, %v855
        %v858 = vadd.f32 %v853, %v856
        %v859 = vadd.f32 %v854, %v857
        %v860 = vld [vmem:[#allocation3 + $0x1] sm:$0xff]
        %v861 = vld [vmem:[#allocation3 + $0x9] sm:$0xff]
        %v862 = vld [vmem:[%s306 + $0x1] sm:$0xff]
        %v863 = vld [vmem:[%s306 + $0x9] sm:$0xff]
        %s864 = sld [smem:[#allocation6 + $0x9]]
        %s865 = sld [smem:[#allocation6 + $0x3a]]
        %v866 = vstv %s864
        %v867 = vmul.f32 %v860, %v866
        %v868 = vmul.f32 %v861, %v866
        %v869 = vstv %s865
        %v870 = vmul.f32 %v862, %v869
        %v871 = vmul.f32 %v863, %v869
        %v872 = vadd.f32 %v867, %v870
        %v873 = vadd.f32 %v868, %v871
        %v874 = vadd.f32 %v858, %v872
        %v875 = vadd.f32 %v859, %v873
        %v876 = vld [vmem:[#allocation3 + $0x2] sm:$0xff]
        %v877 = vld [vmem:[#allocation3 + $0xa] sm:$0xff]
        %v878 = vld [vmem:[%s306 + $0x2] sm:$0xff]
        %v879 = vld [vmem:[%s306 + $0xa] sm:$0xff]
        %s880 = sld [smem:[#allocation6 + $0x10]]
        %s881 = sld [smem:[#allocation6 + $0x41]]
        %v882 = vstv %s880
        %v883 = vmul.f32 %v876, %v882
        %v884 = vmul.f32 %v877, %v882
        %v885 = vstv %s881
        %v886 = vmul.f32 %v878, %v885
        %v887 = vmul.f32 %v879, %v885
        %v888 = vadd.f32 %v883, %v886
        %v889 = vadd.f32 %v884, %v887
        %v890 = vadd.f32 %v874, %v888
        %v891 = vadd.f32 %v875, %v889
        %v892 = vld [vmem:[#allocation3 + $0x3] sm:$0xff]
        %v893 = vld [vmem:[#allocation3 + $0xb] sm:$0xff]
        %v894 = vld [vmem:[%s306 + $0x3] sm:$0xff]
        %v895 = vld [vmem:[%s306 + $0xb] sm:$0xff]
        %s896 = sld [smem:[#allocation6 + $0x17]]
        %s897 = sld [smem:[#allocation6 + $0x48]]
        %v898 = vstv %s896
        %v899 = vmul.f32 %v892, %v898
        %v900 = vmul.f32 %v893, %v898
        %v901 = vstv %s897
        %v902 = vmul.f32 %v894, %v901
        %v903 = vmul.f32 %v895, %v901
        %v904 = vadd.f32 %v899, %v902
        %v905 = vadd.f32 %v900, %v903
        %v906 = vadd.f32 %v890, %v904
        %v907 = vadd.f32 %v891, %v905
        %v908 = vld [vmem:[#allocation3 + $0x4] sm:$0xff]
        %v909 = vld [vmem:[#allocation3 + $0xc] sm:$0xff]
        %v910 = vld [vmem:[%s306 + $0x4] sm:$0xff]
        %v911 = vld [vmem:[%s306 + $0xc] sm:$0xff]
        %s912 = sld [smem:[#allocation6 + $0x1e]]
        %s913 = sld [smem:[#allocation6 + $0x4f]]
        %v914 = vstv %s912
        %v915 = vmul.f32 %v908, %v914
        %v916 = vmul.f32 %v909, %v914
        %v917 = vstv %s913
        %v918 = vmul.f32 %v910, %v917
        %v919 = vmul.f32 %v911, %v917
        %v920 = vadd.f32 %v915, %v918
        %v921 = vadd.f32 %v916, %v919
        %v922 = vadd.f32 %v906, %v920
        %v923 = vadd.f32 %v907, %v921
        %v924 = vld [vmem:[#allocation3 + $0x5] sm:$0xff]
        %v925 = vld [vmem:[#allocation3 + $0xd] sm:$0xff]
        %v926 = vld [vmem:[%s306 + $0x5] sm:$0xff]
        %v927 = vld [vmem:[%s306 + $0xd] sm:$0xff]
        %s928 = sld [smem:[#allocation6 + $0x25]]
        %s929 = sld [smem:[#allocation6 + $0x56]]
        %v930 = vstv %s928
        %v931 = vmul.f32 %v924, %v930
        %v932 = vmul.f32 %v925, %v930
        %v933 = vstv %s929
        %v934 = vmul.f32 %v926, %v933
        %v935 = vmul.f32 %v927, %v933
        %v936 = vadd.f32 %v931, %v934
        %v937 = vadd.f32 %v932, %v935
        %v938 = vadd.f32 %v922, %v936
        %v939 = vadd.f32 %v923, %v937
        %v940 = vld [vmem:[#allocation3 + $0x6] sm:$0xff]
        %v941 = vld [vmem:[#allocation3 + $0xe] sm:$0xff]
        %v942 = vld [vmem:[%s306 + $0x6] sm:$0xff]
        %v943 = vld [vmem:[%s306 + $0xe] sm:$0xff]
        %s944 = sld [smem:[#allocation6 + $0x2c]]
        %s945 = sld [smem:[#allocation6 + $0x5d]]
        %v946 = vstv %s944
        %v947 = vmul.f32 %v940, %v946
        %v948 = vmul.f32 %v941, %v946
        %v949 = vstv %s945
        %v950 = vmul.f32 %v942, %v949
        %v951 = vmul.f32 %v943, %v949
        %v952 = vadd.f32 %v947, %v950
        %v953 = vadd.f32 %v948, %v951
        %v954 = vadd.f32 %v938, %v952
        %v955 = vadd.f32 %v939, %v953
        %956 = vst [vmem:[#allocation4] sm:$0xff] %v954
        %957 = vst [vmem:[#allocation4 + $0x8] sm:$0xff] %v955
        %v958 = vld [vmem:[#allocation4] sm:$0xff]
        %v959 = vld [vmem:[#allocation4 + $0x8] sm:$0xff]
        %962 = vrot.lane.b32.xlu0 %v958, 126
        %v963 = vpop.permute.xlu0 %962
        %964 = vrot.lane.b32.xlu0 %v959, 126
        %v965 = vpop.permute.xlu0 %964
        %v968 = vadd.f32 %v844, %v963
        %v969 = vadd.f32 %v845, %v965
        %v970 = vld [vmem:[#allocation3] sm:$0xff]
        %v971 = vld [vmem:[#allocation3 + $0x8] sm:$0xff]
        %v972 = vld [vmem:[%s306] sm:$0xff]
        %v973 = vld [vmem:[%s306 + $0x8] sm:$0xff]
        %s974 = sld [smem:[#allocation6 + $0x3]]
        %s975 = sld [smem:[#allocation6 + $0x34]]
        %v976 = vstv %s974
        %v977 = vmul.f32 %v970, %v976
        %v978 = vmul.f32 %v971, %v976
        %v979 = vstv %s975
        %v980 = vmul.f32 %v972, %v979
        %v981 = vmul.f32 %v973, %v979
        %v982 = vadd.f32 %v977, %v980
        %v983 = vadd.f32 %v978, %v981
        %v984 = vld [vmem:[#allocation3 + $0x1] sm:$0xff]
        %v985 = vld [vmem:[#allocation3 + $0x9] sm:$0xff]
        %v986 = vld [vmem:[%s306 + $0x1] sm:$0xff]
        %v987 = vld [vmem:[%s306 + $0x9] sm:$0xff]
        %s988 = sld [smem:[#allocation6 + $0xa]]
        %s989 = sld [smem:[#allocation6 + $0x3b]]
        %v990 = vstv %s988
        %v991 = vmul.f32 %v984, %v990
        %v992 = vmul.f32 %v985, %v990
        %v993 = vstv %s989
        %v994 = vmul.f32 %v986, %v993
        %v995 = vmul.f32 %v987, %v993
        %v996 = vadd.f32 %v991, %v994
        %v997 = vadd.f32 %v992, %v995
        %v998 = vadd.f32 %v982, %v996
        %v999 = vadd.f32 %v983, %v997
        %v1000 = vld [vmem:[#allocation3 + $0x2] sm:$0xff]
        %v1001 = vld [vmem:[#allocation3 + $0xa] sm:$0xff]
        %v1002 = vld [vmem:[%s306 + $0x2] sm:$0xff]
        %v1003 = vld [vmem:[%s306 + $0xa] sm:$0xff]
        %s1004 = sld [smem:[#allocation6 + $0x11]]
        %s1005 = sld [smem:[#allocation6 + $0x42]]
        %v1006 = vstv %s1004
        %v1007 = vmul.f32 %v1000, %v1006
        %v1008 = vmul.f32 %v1001, %v1006
        %v1009 = vstv %s1005
        %v1010 = vmul.f32 %v1002, %v1009
        %v1011 = vmul.f32 %v1003, %v1009
        %v1012 = vadd.f32 %v1007, %v1010
        %v1013 = vadd.f32 %v1008, %v1011
        %v1014 = vadd.f32 %v998, %v1012
        %v1015 = vadd.f32 %v999, %v1013
        %v1016 = vld [vmem:[#allocation3 + $0x3] sm:$0xff]
        %v1017 = vld [vmem:[#allocation3 + $0xb] sm:$0xff]
        %v1018 = vld [vmem:[%s306 + $0x3] sm:$0xff]
        %v1019 = vld [vmem:[%s306 + $0xb] sm:$0xff]
        %s1020 = sld [smem:[#allocation6 + $0x18]]
        %s1021 = sld [smem:[#allocation6 + $0x49]]
        %v1022 = vstv %s1020
        %v1023 = vmul.f32 %v1016, %v1022
        %v1024 = vmul.f32 %v1017, %v1022
        %v1025 = vstv %s1021
        %v1026 = vmul.f32 %v1018, %v1025
        %v1027 = vmul.f32 %v1019, %v1025
        %v1028 = vadd.f32 %v1023, %v1026
        %v1029 = vadd.f32 %v1024, %v1027
        %v1030 = vadd.f32 %v1014, %v1028
        %v1031 = vadd.f32 %v1015, %v1029
        %v1032 = vld [vmem:[#allocation3 + $0x4] sm:$0xff]
        %v1033 = vld [vmem:[#allocation3 + $0xc] sm:$0xff]
        %v1034 = vld [vmem:[%s306 + $0x4] sm:$0xff]
        %v1035 = vld [vmem:[%s306 + $0xc] sm:$0xff]
        %s1036 = sld [smem:[#allocation6 + $0x1f]]
        %s1037 = sld [smem:[#allocation6 + $0x50]]
        %v1038 = vstv %s1036
        %v1039 = vmul.f32 %v1032, %v1038
        %v1040 = vmul.f32 %v1033, %v1038
        %v1041 = vstv %s1037
        %v1042 = vmul.f32 %v1034, %v1041
        %v1043 = vmul.f32 %v1035, %v1041
        %v1044 = vadd.f32 %v1039, %v1042
        %v1045 = vadd.f32 %v1040, %v1043
        %v1046 = vadd.f32 %v1030, %v1044
        %v1047 = vadd.f32 %v1031, %v1045
        %v1048 = vld [vmem:[#allocation3 + $0x5] sm:$0xff]
        %v1049 = vld [vmem:[#allocation3 + $0xd] sm:$0xff]
        %v1050 = vld [vmem:[%s306 + $0x5] sm:$0xff]
        %v1051 = vld [vmem:[%s306 + $0xd] sm:$0xff]
        %s1052 = sld [smem:[#allocation6 + $0x26]]
        %s1053 = sld [smem:[#allocation6 + $0x57]]
        %v1054 = vstv %s1052
        %v1055 = vmul.f32 %v1048, %v1054
        %v1056 = vmul.f32 %v1049, %v1054
        %v1057 = vstv %s1053
        %v1058 = vmul.f32 %v1050, %v1057
        %v1059 = vmul.f32 %v1051, %v1057
        %v1060 = vadd.f32 %v1055, %v1058
        %v1061 = vadd.f32 %v1056, %v1059
        %v1062 = vadd.f32 %v1046, %v1060
        %v1063 = vadd.f32 %v1047, %v1061
        %v1064 = vld [vmem:[#allocation3 + $0x6] sm:$0xff]
        %v1065 = vld [vmem:[#allocation3 + $0xe] sm:$0xff]
        %v1066 = vld [vmem:[%s306 + $0x6] sm:$0xff]
        %v1067 = vld [vmem:[%s306 + $0xe] sm:$0xff]
        %s1068 = sld [smem:[#allocation6 + $0x2d]]
        %s1069 = sld [smem:[#allocation6 + $0x5e]]
        %v1070 = vstv %s1068
        %v1071 = vmul.f32 %v1064, %v1070
        %v1072 = vmul.f32 %v1065, %v1070
        %v1073 = vstv %s1069
        %v1074 = vmul.f32 %v1066, %v1073
        %v1075 = vmul.f32 %v1067, %v1073
        %v1076 = vadd.f32 %v1071, %v1074
        %v1077 = vadd.f32 %v1072, %v1075
        %v1078 = vadd.f32 %v1062, %v1076
        %v1079 = vadd.f32 %v1063, %v1077
        %1080 = vst [vmem:[#allocation4] sm:$0xff] %v1078
        %1081 = vst [vmem:[#allocation4 + $0x8] sm:$0xff] %v1079
        %v1082 = vld [vmem:[#allocation4] sm:$0xff]
        %v1083 = vld [vmem:[#allocation4 + $0x8] sm:$0xff]
        %1086 = vrot.lane.b32.xlu0 %v1082, 125
        %v1087 = vpop.permute.xlu0 %1086
        %1088 = vrot.lane.b32.xlu0 %v1083, 125
        %v1089 = vpop.permute.xlu0 %1088
        %v1092 = vadd.f32 %v968, %v1087
        %v1093 = vadd.f32 %v969, %v1089
        %v1094 = vld [vmem:[#allocation3] sm:$0xff]
        %v1095 = vld [vmem:[#allocation3 + $0x8] sm:$0xff]
        %v1096 = vld [vmem:[%s306] sm:$0xff]
        %v1097 = vld [vmem:[%s306 + $0x8] sm:$0xff]
        %s1098 = sld [smem:[#allocation6 + $0x4]]
        %s1099 = sld [smem:[#allocation6 + $0x35]]
        %v1100 = vstv %s1098
        %v1101 = vmul.f32 %v1094, %v1100
        %v1102 = vmul.f32 %v1095, %v1100
        %v1103 = vstv %s1099
        %v1104 = vmul.f32 %v1096, %v1103
        %v1105 = vmul.f32 %v1097, %v1103
        %v1106 = vadd.f32 %v1101, %v1104
        %v1107 = vadd.f32 %v1102, %v1105
        %v1108 = vld [vmem:[#allocation3 + $0x1] sm:$0xff]
        %v1109 = vld [vmem:[#allocation3 + $0x9] sm:$0xff]
        %v1110 = vld [vmem:[%s306 + $0x1] sm:$0xff]
        %v1111 = vld [vmem:[%s306 + $0x9] sm:$0xff]
        %s1112 = sld [smem:[#allocation6 + $0xb]]
        %s1113 = sld [smem:[#allocation6 + $0x3c]]
        %v1114 = vstv %s1112
        %v1115 = vmul.f32 %v1108, %v1114
        %v1116 = vmul.f32 %v1109, %v1114
        %v1117 = vstv %s1113
        %v1118 = vmul.f32 %v1110, %v1117
        %v1119 = vmul.f32 %v1111, %v1117
        %v1120 = vadd.f32 %v1115, %v1118
        %v1121 = vadd.f32 %v1116, %v1119
        %v1122 = vadd.f32 %v1106, %v1120
        %v1123 = vadd.f32 %v1107, %v1121
        %v1124 = vld [vmem:[#allocation3 + $0x2] sm:$0xff]
        %v1125 = vld [vmem:[#allocation3 + $0xa] sm:$0xff]
        %v1126 = vld [vmem:[%s306 + $0x2] sm:$0xff]
        %v1127 = vld [vmem:[%s306 + $0xa] sm:$0xff]
        %s1128 = sld [smem:[#allocation6 + $0x12]]
        %s1129 = sld [smem:[#allocation6 + $0x43]]
        %v1130 = vstv %s1128
        %v1131 = vmul.f32 %v1124, %v1130
        %v1132 = vmul.f32 %v1125, %v1130
        %v1133 = vstv %s1129
        %v1134 = vmul.f32 %v1126, %v1133
        %v1135 = vmul.f32 %v1127, %v1133
        %v1136 = vadd.f32 %v1131, %v1134
        %v1137 = vadd.f32 %v1132, %v1135
        %v1138 = vadd.f32 %v1122, %v1136
        %v1139 = vadd.f32 %v1123, %v1137
        %v1140 = vld [vmem:[#allocation3 + $0x3] sm:$0xff]
        %v1141 = vld [vmem:[#allocation3 + $0xb] sm:$0xff]
        %v1142 = vld [vmem:[%s306 + $0x3] sm:$0xff]
        %v1143 = vld [vmem:[%s306 + $0xb] sm:$0xff]
        %s1144 = sld [smem:[#allocation6 + $0x19]]
        %s1145 = sld [smem:[#allocation6 + $0x4a]]
        %v1146 = vstv %s1144
        %v1147 = vmul.f32 %v1140, %v1146
        %v1148 = vmul.f32 %v1141, %v1146
        %v1149 = vstv %s1145
        %v1150 = vmul.f32 %v1142, %v1149
        %v1151 = vmul.f32 %v1143, %v1149
        %v1152 = vadd.f32 %v1147, %v1150
        %v1153 = vadd.f32 %v1148, %v1151
        %v1154 = vadd.f32 %v1138, %v1152
        %v1155 = vadd.f32 %v1139, %v1153
        %v1156 = vld [vmem:[#allocation3 + $0x4] sm:$0xff]
        %v1157 = vld [vmem:[#allocation3 + $0xc] sm:$0xff]
        %v1158 = vld [vmem:[%s306 + $0x4] sm:$0xff]
        %v1159 = vld [vmem:[%s306 + $0xc] sm:$0xff]
        %s1160 = sld [smem:[#allocation6 + $0x20]]
        %s1161 = sld [smem:[#allocation6 + $0x51]]
        %v1162 = vstv %s1160
        %v1163 = vmul.f32 %v1156, %v1162
        %v1164 = vmul.f32 %v1157, %v1162
        %v1165 = vstv %s1161
        %v1166 = vmul.f32 %v1158, %v1165
        %v1167 = vmul.f32 %v1159, %v1165
        %v1168 = vadd.f32 %v1163, %v1166
        %v1169 = vadd.f32 %v1164, %v1167
        %v1170 = vadd.f32 %v1154, %v1168
        %v1171 = vadd.f32 %v1155, %v1169
        %v1172 = vld [vmem:[#allocation3 + $0x5] sm:$0xff]
        %v1173 = vld [vmem:[#allocation3 + $0xd] sm:$0xff]
        %v1174 = vld [vmem:[%s306 + $0x5] sm:$0xff]
        %v1175 = vld [vmem:[%s306 + $0xd] sm:$0xff]
        %s1176 = sld [smem:[#allocation6 + $0x27]]
        %s1177 = sld [smem:[#allocation6 + $0x58]]
        %v1178 = vstv %s1176
        %v1179 = vmul.f32 %v1172, %v1178
        %v1180 = vmul.f32 %v1173, %v1178
        %v1181 = vstv %s1177
        %v1182 = vmul.f32 %v1174, %v1181
        %v1183 = vmul.f32 %v1175, %v1181
        %v1184 = vadd.f32 %v1179, %v1182
        %v1185 = vadd.f32 %v1180, %v1183
        %v1186 = vadd.f32 %v1170, %v1184
        %v1187 = vadd.f32 %v1171, %v1185
        %v1188 = vld [vmem:[#allocation3 + $0x6] sm:$0xff]
        %v1189 = vld [vmem:[#allocation3 + $0xe] sm:$0xff]
        %v1190 = vld [vmem:[%s306 + $0x6] sm:$0xff]
        %v1191 = vld [vmem:[%s306 + $0xe] sm:$0xff]
        %s1192 = sld [smem:[#allocation6 + $0x2e]]
        %s1193 = sld [smem:[#allocation6 + $0x5f]]
        %v1194 = vstv %s1192
        %v1195 = vmul.f32 %v1188, %v1194
        %v1196 = vmul.f32 %v1189, %v1194
        %v1197 = vstv %s1193
        %v1198 = vmul.f32 %v1190, %v1197
        %v1199 = vmul.f32 %v1191, %v1197
        %v1200 = vadd.f32 %v1195, %v1198
        %v1201 = vadd.f32 %v1196, %v1199
        %v1202 = vadd.f32 %v1186, %v1200
        %v1203 = vadd.f32 %v1187, %v1201
        %1204 = vst [vmem:[#allocation4] sm:$0xff] %v1202
        %1205 = vst [vmem:[#allocation4 + $0x8] sm:$0xff] %v1203
        %v1206 = vld [vmem:[#allocation4] sm:$0xff]
        %v1207 = vld [vmem:[#allocation4 + $0x8] sm:$0xff]
        %1210 = vrot.lane.b32.xlu0 %v1206, 124
        %v1211 = vpop.permute.xlu0 %1210
        %1212 = vrot.lane.b32.xlu0 %v1207, 124
        %v1213 = vpop.permute.xlu0 %1212
        %v1216 = vadd.f32 %v1092, %v1211
        %v1217 = vadd.f32 %v1093, %v1213
        %v1218 = vld [vmem:[#allocation3] sm:$0xff]
        %v1219 = vld [vmem:[#allocation3 + $0x8] sm:$0xff]
        %v1220 = vld [vmem:[%s306] sm:$0xff]
        %v1221 = vld [vmem:[%s306 + $0x8] sm:$0xff]
        %s1222 = sld [smem:[#allocation6 + $0x5]]
        %s1223 = sld [smem:[#allocation6 + $0x36]]
        %v1224 = vstv %s1222
        %v1225 = vmul.f32 %v1218, %v1224
        %v1226 = vmul.f32 %v1219, %v1224
        %v1227 = vstv %s1223
        %v1228 = vmul.f32 %v1220, %v1227
        %v1229 = vmul.f32 %v1221, %v1227
        %v1230 = vadd.f32 %v1225, %v1228
        %v1231 = vadd.f32 %v1226, %v1229
        %v1232 = vld [vmem:[#allocation3 + $0x1] sm:$0xff]
        %v1233 = vld [vmem:[#allocation3 + $0x9] sm:$0xff]
        %v1234 = vld [vmem:[%s306 + $0x1] sm:$0xff]
        %v1235 = vld [vmem:[%s306 + $0x9] sm:$0xff]
        %s1236 = sld [smem:[#allocation6 + $0xc]]
        %s1237 = sld [smem:[#allocation6 + $0x3d]]
        %v1238 = vstv %s1236
        %v1239 = vmul.f32 %v1232, %v1238
        %v1240 = vmul.f32 %v1233, %v1238
        %v1241 = vstv %s1237
        %v1242 = vmul.f32 %v1234, %v1241
        %v1243 = vmul.f32 %v1235, %v1241
        %v1244 = vadd.f32 %v1239, %v1242
        %v1245 = vadd.f32 %v1240, %v1243
        %v1246 = vadd.f32 %v1230, %v1244
        %v1247 = vadd.f32 %v1231, %v1245
        %v1248 = vld [vmem:[#allocation3 + $0x2] sm:$0xff]
        %v1249 = vld [vmem:[#allocation3 + $0xa] sm:$0xff]
        %v1250 = vld [vmem:[%s306 + $0x2] sm:$0xff]
        %v1251 = vld [vmem:[%s306 + $0xa] sm:$0xff]
        %s1252 = sld [smem:[#allocation6 + $0x13]]
        %s1253 = sld [smem:[#allocation6 + $0x44]]
        %v1254 = vstv %s1252
        %v1255 = vmul.f32 %v1248, %v1254
        %v1256 = vmul.f32 %v1249, %v1254
        %v1257 = vstv %s1253
        %v1258 = vmul.f32 %v1250, %v1257
        %v1259 = vmul.f32 %v1251, %v1257
        %v1260 = vadd.f32 %v1255, %v1258
        %v1261 = vadd.f32 %v1256, %v1259
        %v1262 = vadd.f32 %v1246, %v1260
        %v1263 = vadd.f32 %v1247, %v1261
        %v1264 = vld [vmem:[#allocation3 + $0x3] sm:$0xff]
        %v1265 = vld [vmem:[#allocation3 + $0xb] sm:$0xff]
        %v1266 = vld [vmem:[%s306 + $0x3] sm:$0xff]
        %v1267 = vld [vmem:[%s306 + $0xb] sm:$0xff]
        %s1268 = sld [smem:[#allocation6 + $0x1a]]
        %s1269 = sld [smem:[#allocation6 + $0x4b]]
        %v1270 = vstv %s1268
        %v1271 = vmul.f32 %v1264, %v1270
        %v1272 = vmul.f32 %v1265, %v1270
        %v1273 = vstv %s1269
        %v1274 = vmul.f32 %v1266, %v1273
        %v1275 = vmul.f32 %v1267, %v1273
        %v1276 = vadd.f32 %v1271, %v1274
        %v1277 = vadd.f32 %v1272, %v1275
        %v1278 = vadd.f32 %v1262, %v1276
        %v1279 = vadd.f32 %v1263, %v1277
        %v1280 = vld [vmem:[#allocation3 + $0x4] sm:$0xff]
        %v1281 = vld [vmem:[#allocation3 + $0xc] sm:$0xff]
        %v1282 = vld [vmem:[%s306 + $0x4] sm:$0xff]
        %v1283 = vld [vmem:[%s306 + $0xc] sm:$0xff]
        %s1284 = sld [smem:[#allocation6 + $0x21]]
        %s1285 = sld [smem:[#allocation6 + $0x52]]
        %v1286 = vstv %s1284
        %v1287 = vmul.f32 %v1280, %v1286
        %v1288 = vmul.f32 %v1281, %v1286
        %v1289 = vstv %s1285
        %v1290 = vmul.f32 %v1282, %v1289
        %v1291 = vmul.f32 %v1283, %v1289
        %v1292 = vadd.f32 %v1287, %v1290
        %v1293 = vadd.f32 %v1288, %v1291
        %v1294 = vadd.f32 %v1278, %v1292
        %v1295 = vadd.f32 %v1279, %v1293
        %v1296 = vld [vmem:[#allocation3 + $0x5] sm:$0xff]
        %v1297 = vld [vmem:[#allocation3 + $0xd] sm:$0xff]
        %v1298 = vld [vmem:[%s306 + $0x5] sm:$0xff]
        %v1299 = vld [vmem:[%s306 + $0xd] sm:$0xff]
        %s1300 = sld [smem:[#allocation6 + $0x28]]
        %s1301 = sld [smem:[#allocation6 + $0x59]]
        %v1302 = vstv %s1300
        %v1303 = vmul.f32 %v1296, %v1302
        %v1304 = vmul.f32 %v1297, %v1302
        %v1305 = vstv %s1301
        %v1306 = vmul.f32 %v1298, %v1305
        %v1307 = vmul.f32 %v1299, %v1305
        %v1308 = vadd.f32 %v1303, %v1306
        %v1309 = vadd.f32 %v1304, %v1307
        %v1310 = vadd.f32 %v1294, %v1308
        %v1311 = vadd.f32 %v1295, %v1309
        %v1312 = vld [vmem:[#allocation3 + $0x6] sm:$0xff]
        %v1313 = vld [vmem:[#allocation3 + $0xe] sm:$0xff]
        %v1314 = vld [vmem:[%s306 + $0x6] sm:$0xff]
        %v1315 = vld [vmem:[%s306 + $0xe] sm:$0xff]
        %s1316 = sld [smem:[#allocation6 + $0x2f]]
        %s1317 = sld [smem:[#allocation6 + $0x60]]
        %v1318 = vstv %s1316
        %v1319 = vmul.f32 %v1312, %v1318
        %v1320 = vmul.f32 %v1313, %v1318
        %v1321 = vstv %s1317
        %v1322 = vmul.f32 %v1314, %v1321
        %v1323 = vmul.f32 %v1315, %v1321
        %v1324 = vadd.f32 %v1319, %v1322
        %v1325 = vadd.f32 %v1320, %v1323
        %v1326 = vadd.f32 %v1310, %v1324
        %v1327 = vadd.f32 %v1311, %v1325
        %1328 = vst [vmem:[#allocation4] sm:$0xff] %v1326
        %1329 = vst [vmem:[#allocation4 + $0x8] sm:$0xff] %v1327
        %v1330 = vld [vmem:[#allocation4] sm:$0xff]
        %v1331 = vld [vmem:[#allocation4 + $0x8] sm:$0xff]
        %1334 = vrot.lane.b32.xlu0 %v1330, 123
        %v1335 = vpop.permute.xlu0 %1334
        %1336 = vrot.lane.b32.xlu0 %v1331, 123
        %v1337 = vpop.permute.xlu0 %1336
        %v1340 = vadd.f32 %v1216, %v1335
        %v1341 = vadd.f32 %v1217, %v1337
        %v1342 = vld [vmem:[#allocation3] sm:$0xff]
        %v1343 = vld [vmem:[#allocation3 + $0x8] sm:$0xff]
        %v1344 = vld [vmem:[%s306] sm:$0xff]
        %v1345 = vld [vmem:[%s306 + $0x8] sm:$0xff]
        %s1346 = sld [smem:[#allocation6 + $0x6]]
        %s1347 = sld [smem:[#allocation6 + $0x37]]
        %v1348 = vstv %s1346
        %v1349 = vmul.f32 %v1342, %v1348
        %v1350 = vmul.f32 %v1343, %v1348
        %v1351 = vstv %s1347
        %v1352 = vmul.f32 %v1344, %v1351
        %v1353 = vmul.f32 %v1345, %v1351
        %v1354 = vadd.f32 %v1349, %v1352
        %v1355 = vadd.f32 %v1350, %v1353
        %v1356 = vld [vmem:[#allocation3 + $0x1] sm:$0xff]
        %v1357 = vld [vmem:[#allocation3 + $0x9] sm:$0xff]
        %v1358 = vld [vmem:[%s306 + $0x1] sm:$0xff]
        %v1359 = vld [vmem:[%s306 + $0x9] sm:$0xff]
        %s1360 = sld [smem:[#allocation6 + $0xd]]
        %s1361 = sld [smem:[#allocation6 + $0x3e]]
        %v1362 = vstv %s1360
        %v1363 = vmul.f32 %v1356, %v1362
        %v1364 = vmul.f32 %v1357, %v1362
        %v1365 = vstv %s1361
        %v1366 = vmul.f32 %v1358, %v1365
        %v1367 = vmul.f32 %v1359, %v1365
        %v1368 = vadd.f32 %v1363, %v1366
        %v1369 = vadd.f32 %v1364, %v1367
        %v1370 = vadd.f32 %v1354, %v1368
        %v1371 = vadd.f32 %v1355, %v1369
        %v1372 = vld [vmem:[#allocation3 + $0x2] sm:$0xff]
        %v1373 = vld [vmem:[#allocation3 + $0xa] sm:$0xff]
        %v1374 = vld [vmem:[%s306 + $0x2] sm:$0xff]
        %v1375 = vld [vmem:[%s306 + $0xa] sm:$0xff]
        %s1376 = sld [smem:[#allocation6 + $0x14]]
        %s1377 = sld [smem:[#allocation6 + $0x45]]
        %v1378 = vstv %s1376
        %v1379 = vmul.f32 %v1372, %v1378
        %v1380 = vmul.f32 %v1373, %v1378
        %v1381 = vstv %s1377
        %v1382 = vmul.f32 %v1374, %v1381
        %v1383 = vmul.f32 %v1375, %v1381
        %v1384 = vadd.f32 %v1379, %v1382
        %v1385 = vadd.f32 %v1380, %v1383
        %v1386 = vadd.f32 %v1370, %v1384
        %v1387 = vadd.f32 %v1371, %v1385
        %v1388 = vld [vmem:[#allocation3 + $0x3] sm:$0xff]
        %v1389 = vld [vmem:[#allocation3 + $0xb] sm:$0xff]
        %v1390 = vld [vmem:[%s306 + $0x3] sm:$0xff]
        %v1391 = vld [vmem:[%s306 + $0xb] sm:$0xff]
        %s1392 = sld [smem:[#allocation6 + $0x1b]]
        %s1393 = sld [smem:[#allocation6 + $0x4c]]
        %v1394 = vstv %s1392
        %v1395 = vmul.f32 %v1388, %v1394
        %v1396 = vmul.f32 %v1389, %v1394
        %v1397 = vstv %s1393
        %v1398 = vmul.f32 %v1390, %v1397
        %v1399 = vmul.f32 %v1391, %v1397
        %v1400 = vadd.f32 %v1395, %v1398
        %v1401 = vadd.f32 %v1396, %v1399
        %v1402 = vadd.f32 %v1386, %v1400
        %v1403 = vadd.f32 %v1387, %v1401
        %v1404 = vld [vmem:[#allocation3 + $0x4] sm:$0xff]
        %v1405 = vld [vmem:[#allocation3 + $0xc] sm:$0xff]
        %v1406 = vld [vmem:[%s306 + $0x4] sm:$0xff]
        %v1407 = vld [vmem:[%s306 + $0xc] sm:$0xff]
        %s1408 = sld [smem:[#allocation6 + $0x22]]
        %s1409 = sld [smem:[#allocation6 + $0x53]]
        %v1410 = vstv %s1408
        %v1411 = vmul.f32 %v1404, %v1410
        %v1412 = vmul.f32 %v1405, %v1410
        %v1413 = vstv %s1409
        %v1414 = vmul.f32 %v1406, %v1413
        %v1415 = vmul.f32 %v1407, %v1413
        %v1416 = vadd.f32 %v1411, %v1414
        %v1417 = vadd.f32 %v1412, %v1415
        %v1418 = vadd.f32 %v1402, %v1416
        %v1419 = vadd.f32 %v1403, %v1417
        %v1420 = vld [vmem:[#allocation3 + $0x5] sm:$0xff]
        %v1421 = vld [vmem:[#allocation3 + $0xd] sm:$0xff]
        %v1422 = vld [vmem:[%s306 + $0x5] sm:$0xff]
        %v1423 = vld [vmem:[%s306 + $0xd] sm:$0xff]
        %s1424 = sld [smem:[#allocation6 + $0x29]]
        %s1425 = sld [smem:[#allocation6 + $0x5a]]
        %v1426 = vstv %s1424
        %v1427 = vmul.f32 %v1420, %v1426
        %v1428 = vmul.f32 %v1421, %v1426
        %v1429 = vstv %s1425
        %v1430 = vmul.f32 %v1422, %v1429
        %v1431 = vmul.f32 %v1423, %v1429
        %v1432 = vadd.f32 %v1427, %v1430
        %v1433 = vadd.f32 %v1428, %v1431
        %v1434 = vadd.f32 %v1418, %v1432
        %v1435 = vadd.f32 %v1419, %v1433
        %v1436 = vld [vmem:[#allocation3 + $0x6] sm:$0xff]
        %v1437 = vld [vmem:[#allocation3 + $0xe] sm:$0xff]
        %v1438 = vld [vmem:[%s306 + $0x6] sm:$0xff]
        %v1439 = vld [vmem:[%s306 + $0xe] sm:$0xff]
        %s1440 = sld [smem:[#allocation6 + $0x30]]
        %s1441 = sld [smem:[#allocation6 + $0x61]]
        %v1442 = vstv %s1440
        %v1443 = vmul.f32 %v1436, %v1442
        %v1444 = vmul.f32 %v1437, %v1442
        %v1445 = vstv %s1441
        %v1446 = vmul.f32 %v1438, %v1445
        %v1447 = vmul.f32 %v1439, %v1445
        %v1448 = vadd.f32 %v1443, %v1446
        %v1449 = vadd.f32 %v1444, %v1447
        %v1450 = vadd.f32 %v1434, %v1448
        %v1451 = vadd.f32 %v1435, %v1449
        %1452 = vst [vmem:[#allocation4] sm:$0xff] %v1450
        %1453 = vst [vmem:[#allocation4 + $0x8] sm:$0xff] %v1451
        %v1454 = vld [vmem:[#allocation4] sm:$0xff]
        %v1455 = vld [vmem:[#allocation4 + $0x8] sm:$0xff]
        %1458 = vrot.lane.b32.xlu0 %v1454, 122
        %v1459 = vpop.permute.xlu0 %1458
        %1460 = vrot.lane.b32.xlu0 %v1455, 122
        %v1461 = vpop.permute.xlu0 %1460
        %v1464 = vadd.f32 %v1340, %v1459
        %v1465 = vadd.f32 %v1341, %v1461
        %s1466 = sld [smem:[#allocation5]]
        %v1467 = vstv %s1466
        %v1468 = vadd.f32 %v1464, %v1467
        %v1469 = vadd.f32 %v1465, %v1467
        %v1470 = vxor.u32 %v1468, 2147483648
        %v1471 = vxor.u32 %v1469, 2147483648
        %v1472 = vmul.f32 %v1470, 1.442695
        %v1473 = vpow.pop %v1472
        %v1474 = vmul.f32 %v1471, 1.442695
        %v1475 = vpow.pop %v1474
        %v1476 = vadd.f32 %v1473, 1.0
        %v1477 = vadd.f32 %v1475, 1.0
        %v1478 = vrcp.pop %v1476
        %v1479 = vmul.f32 1.0, %v1478
        %v1480 = vrcp.pop %v1477
        %v1481 = vmul.f32 1.0, %v1480
        %vm1482 = vcmask 130048
        %1483 = vst.msk [vmem:[#allocation3] sm:$0xff] %vm1482, %v1479
        %1484 = vst.msk [vmem:[#allocation3 + $0x8] sm:$0xff] %vm1482, %v1481
        %v1485 = vld [vmem:[#allocation3] sm:$0x1]
        %vm1486 = vcmask 122880
        %1487 = vst.msk [vmem:[#allocation2] sm:$0x1] %vm1486, %v1485
        %v1488 = vld [vmem:[#allocation3 + $0x1] sm:$0x1]
        %v1491 = vunpack.c.l.s4 1983009808
        %v1492 = vunpack.c.0.s8 %v1491
        %v1493 = vlaneseq
        %v1494 = vshrl.u32 %v1493, 7
        %v1495 = vsub.s32 %v1492, %v1494
        %v1496 = vrot.slane %v1488, %v1495
        %1497 = vrot.lane.b32.xlu0 %v1496, 16
        %v1498 = vpop.permute.xlu0 %1497
        %vm1500 = vcmask 254080
        %1501 = vst.msk [vmem:[#allocation2] sm:$0x1] %vm1500, %v1498
        %v1502 = vld [vmem:[#allocation3 + $0x2] sm:$0x1]
        %v1505 = vunpack.c.l.s4 1983009808
        %v1506 = vunpack.c.0.s8 %v1505
        %v1507 = vlaneseq
        %v1508 = vshrl.u32 %v1507, 7
        %v1509 = vsub.s32 %v1506, %v1508
        %v1510 = vrot.slane %v1502, %v1509
        %1511 = vrot.lane.b32.xlu0 %v1510, 32
        %v1512 = vpop.permute.xlu0 %1511
        %vm1514 = vcmask 385280
        %1515 = vst.msk [vmem:[#allocation2] sm:$0x1] %vm1514, %v1512
        %v1516 = vld [vmem:[#allocation3 + $0x3] sm:$0x1]
        %v1519 = vunpack.c.l.s4 1983009808
        %v1520 = vunpack.c.0.s8 %v1519
        %v1521 = vlaneseq
        %v1522 = vshrl.u32 %v1521, 7
        %v1523 = vsub.s32 %v1520, %v1522
        %v1524 = vrot.slane %v1516, %v1523
        %1525 = vrot.lane.b32.xlu0 %v1524, 48
        %v1526 = vpop.permute.xlu0 %1525
        %vm1528 = vcmask 516480
        %1529 = vst.msk [vmem:[#allocation2] sm:$0x1] %vm1528, %v1526
        %v1530 = vld [vmem:[#allocation3 + $0x4] sm:$0x1]
        %v1533 = vunpack.c.l.s4 1983009808
        %v1534 = vunpack.c.0.s8 %v1533
        %v1535 = vlaneseq
        %v1536 = vshrl.u32 %v1535, 7
        %v1537 = vsub.s32 %v1534, %v1536
        %v1538 = vrot.slane %v1530, %v1537
        %1539 = vrot.lane.b32.xlu0 %v1538, 64
        %v1540 = vpop.permute.xlu0 %1539
        %vm1542 = vcmask 647680
        %1543 = vst.msk [vmem:[#allocation2] sm:$0x1] %vm1542, %v1540
        %v1544 = vld [vmem:[#allocation3 + $0x5] sm:$0x1]
        %v1547 = vunpack.c.l.s4 1983009808
        %v1548 = vunpack.c.0.s8 %v1547
        %v1549 = vlaneseq
        %v1550 = vshrl.u32 %v1549, 7
        %v1551 = vsub.s32 %v1548, %v1550
        %v1552 = vrot.slane %v1544, %v1551
        %1553 = vrot.lane.b32.xlu0 %v1552, 80
        %v1554 = vpop.permute.xlu0 %1553
        %vm1556 = vcmask 778880
        %1557 = vst.msk [vmem:[#allocation2] sm:$0x1] %vm1556, %v1554
        %v1558 = vld [vmem:[#allocation3 + $0x6] sm:$0x1]
        %v1561 = vunpack.c.l.s4 1983009808
        %v1562 = vunpack.c.0.s8 %v1561
        %v1563 = vlaneseq
        %v1564 = vshrl.u32 %v1563, 7
        %v1565 = vsub.s32 %v1562, %v1564
        %v1566 = vrot.slane %v1558, %v1565
        %1567 = vrot.lane.b32.xlu0 %v1566, 96
        %v1568 = vpop.permute.xlu0 %1567
        %vm1570 = vcmask 910080
        %1571 = vst.msk [vmem:[#allocation2] sm:$0x1] %vm1570, %v1568
        %v1572 = vld [vmem:[#allocation3 + $0x7] sm:$0x1]
        %v1575 = vunpack.c.l.s4 1983009808
        %v1576 = vunpack.c.0.s8 %v1575
        %v1577 = vlaneseq
        %v1578 = vshrl.u32 %v1577, 7
        %v1579 = vsub.s32 %v1576, %v1578
        %v1580 = vrot.slane %v1572, %v1579
        %1581 = vrot.lane.b32.xlu0 %v1580, 112
        %v1582 = vpop.permute.xlu0 %1581
        %vm1584 = vcmask 1041280
        %1585 = vst.msk [vmem:[#allocation2] sm:$0x1] %vm1584, %v1582
        %v1586 = vld [vmem:[#allocation3 + $0x8] sm:$0x1]
        %1587 = vst.msk [vmem:[#allocation2 + $0x2] sm:$0x1] %vm1486, %v1586
        %v1588 = vld [vmem:[#allocation3 + $0x9] sm:$0x1]
        %v1591 = vunpack.c.l.s4 1983009808
        %v1592 = vunpack.c.0.s8 %v1591
        %v1593 = vlaneseq
        %v1594 = vshrl.u32 %v1593, 7
        %v1595 = vsub.s32 %v1592, %v1594
        %v1596 = vrot.slane %v1588, %v1595
        %1597 = vrot.lane.b32.xlu0 %v1596, 16
        %v1598 = vpop.permute.xlu0 %1597
        %1600 = vst.msk [vmem:[#allocation2 + $0x2] sm:$0x1] %vm1500, %v1598
        %v1601 = vld [vmem:[#allocation3 + $0xa] sm:$0x1]
        %v1604 = vunpack.c.l.s4 1983009808
        %v1605 = vunpack.c.0.s8 %v1604
        %v1606 = vlaneseq
        %v1607 = vshrl.u32 %v1606, 7
        %v1608 = vsub.s32 %v1605, %v1607
        %v1609 = vrot.slane %v1601, %v1608
        %1610 = vrot.lane.b32.xlu0 %v1609, 32
        %v1611 = vpop.permute.xlu0 %1610
        %1613 = vst.msk [vmem:[#allocation2 + $0x2] sm:$0x1] %vm1514, %v1611
        %v1614 = vld [vmem:[#allocation3 + $0xb] sm:$0x1]
        %v1617 = vunpack.c.l.s4 1983009808
        %v1618 = vunpack.c.0.s8 %v1617
        %v1619 = vlaneseq
        %v1620 = vshrl.u32 %v1619, 7
        %v1621 = vsub.s32 %v1618, %v1620
        %v1622 = vrot.slane %v1614, %v1621
        %1623 = vrot.lane.b32.xlu0 %v1622, 48
        %v1624 = vpop.permute.xlu0 %1623
        %1626 = vst.msk [vmem:[#allocation2 + $0x2] sm:$0x1] %vm1528, %v1624
        %v1627 = vld [vmem:[#allocation3 + $0xc] sm:$0x1]
        %v1630 = vunpack.c.l.s4 1983009808
        %v1631 = vunpack.c.0.s8 %v1630
        %v1632 = vlaneseq
        %v1633 = vshrl.u32 %v1632, 7
        %v1634 = vsub.s32 %v1631, %v1633
        %v1635 = vrot.slane %v1627, %v1634
        %1636 = vrot.lane.b32.xlu0 %v1635, 64
        %v1637 = vpop.permute.xlu0 %1636
        %1639 = vst.msk [vmem:[#allocation2 + $0x2] sm:$0x1] %vm1542, %v1637
        %v1640 = vld [vmem:[#allocation3 + $0xd] sm:$0x1]
        %v1643 = vunpack.c.l.s4 1983009808
        %v1644 = vunpack.c.0.s8 %v1643
        %v1645 = vlaneseq
        %v1646 = vshrl.u32 %v1645, 7
        %v1647 = vsub.s32 %v1644, %v1646
        %v1648 = vrot.slane %v1640, %v1647
        %1649 = vrot.lane.b32.xlu0 %v1648, 80
        %v1650 = vpop.permute.xlu0 %1649
        %1652 = vst.msk [vmem:[#allocation2 + $0x2] sm:$0x1] %vm1556, %v1650
        %v1653 = vld [vmem:[#allocation3 + $0xe] sm:$0x1]
        %v1656 = vunpack.c.l.s4 1983009808
        %v1657 = vunpack.c.0.s8 %v1656
        %v1658 = vlaneseq
        %v1659 = vshrl.u32 %v1658, 7
        %v1660 = vsub.s32 %v1657, %v1659
        %v1661 = vrot.slane %v1653, %v1660
        %1662 = vrot.lane.b32.xlu0 %v1661, 96
        %v1663 = vpop.permute.xlu0 %1662
        %1665 = vst.msk [vmem:[#allocation2 + $0x2] sm:$0x1] %vm1570, %v1663
        %v1666 = vld [vmem:[#allocation3 + $0xf] sm:$0x1]
        %v1669 = vunpack.c.l.s4 1983009808
        %v1670 = vunpack.c.0.s8 %v1669
        %v1671 = vlaneseq
        %v1672 = vshrl.u32 %v1671, 7
        %v1673 = vsub.s32 %v1670, %v1672
        %v1674 = vrot.slane %v1666, %v1673
        %1675 = vrot.lane.b32.xlu0 %v1674, 112
        %v1676 = vpop.permute.xlu0 %1675
        %1678 = vst.msk [vmem:[#allocation2 + $0x2] sm:$0x1] %vm1584, %v1676
        %v1679 = vld [vmem:[#allocation2] ss:$2 sm:$0x3]
        %v1681 = vlaneseq
        %v1682 = vshrl.u32 %v1681, 7
        %v1683 = vsub.s32 0, %v1682
        %v1684 = vrot.slane %v1679, %v1683
        %v1685 = vlaneseq
        %v1686 = vshrl.u32 %v1685, 7
        %v1687 = vsub.s32 1, %v1686
        %v1688 = vrot.slane %v1679, %v1687
        %v1689 = vld [vmem:[%s178] sm:$0xff]
        %v1690 = vcombine.low %v1684, %v1688
        %v1692 = vmul.f32 %v1689, %v1690
        %1693 = vst [vmem:[%s201] sm:$0xff] %v1692
        %s1694 = sand.u32 %s98, 1
        %s1695 = scalar_lea.sflag [#allocation8], %s1694
        %s1696 = sand.u32 %s98, 1
        %s1697 = smul.addr %s1696, 8
        %s1698 = scalar_lea.vmem [#allocation11], %s1697
        // Predicated region
        $region41: #{tpu_custom_call.1} parent=31 // pred_check
          %p1699 = pneg %p108
        $region42: #{tpu_custom_call.1} parent=31 // pred_check_branch
          %1701 = sbr.rel (%p1699) target = $region44
        $region43: #{tpu_custom_call.1} parent=31 // pred_region
          %s1703 = ssub.s32 128, 128
          %1704 = vsyncadd %s1695, %s1703
          %s1705 = smul.addr %s22, 2
          %s1706 = smul.addr %s1705, 64
          %s1707 = scalar_lea.hbm %s3, %s1706
          %s1709 = sshll.u32 %s1698, 4
          %s1710 = int_to_ptr.vmem [resolvable:$true] %s1709
          %1712 = dma.vmem_to_hbm [thread:$0]  %s1710, 128, %s1707, %s1695
        $region44: #{tpu_custom_call.1} parent=31 // pred_fallthru
          _
      $region32: #{tpu_custom_call.1} parent=5 // pred_fallthru
        _
      %p1713 = scmp.le.s32.totalorder 2, %s17
      // Predicated region
      $region45: #{tpu_custom_call.1} parent=5 // pred_check
        %p1714 = pneg %p1713
      $region46: #{tpu_custom_call.1} parent=5 // pred_check_branch
        %1716 = sbr.rel (%p1714) target = $region48
      $region47: #{tpu_custom_call.1} parent=5 // pred_region
        %s1717 = ssub.s32 %s17, 2
        // Predicated region
        $region49: #{tpu_custom_call.1} parent=47 // pred_check
          %p1718 = pneg %p114
        $region50: #{tpu_custom_call.1} parent=47 // pred_check_branch
          %1720 = sbr.rel (%p1718) target = $region52
        $region51: #{tpu_custom_call.1} parent=47 // pred_region
          %s1721 = sand.u32 %s99, 1
          %s1722 = scalar_lea.sflag [#allocation8], %s1721
          %s1723 = sand.u32 %s99, 1
          %s1724 = smul.addr %s1723, 8
          %s1725 = scalar_lea.vmem [#allocation11], %s1724
          %1726 = dma.done %s1722, 128
        $region52: #{tpu_custom_call.1} parent=47 // pred_fallthru
          _
      $region48: #{tpu_custom_call.1} parent=5 // pred_fallthru
        _
    $region6: #{tpu_custom_call.1} parent=1 // loop_footer
      %s21 = sadd.s32 1, %s17
    $region7: #{tpu_custom_call.1} parent=1 // loop_footer_branch
      %16 = sbr.rel target = $region3
    $region8: #{tpu_custom_call.1} parent=1 // loop_exit
      _
    %1727 = vsyncpa [#allocation7], 1
    %s1728 = scalar_lea.sflag [#allocation7], 1
    %1729 = vsyncpa %s1728, 1
    %1730 = vsyncpa [#allocation8], 1
    %s1731 = scalar_lea.sflag [#allocation8], 1
    %1732 = vsyncpa %s1731, 1
    %1733 = vsyncpa [#allocation9], 1
    %s1734 = scalar_lea.sflag [#allocation9], 1
    %1735 = vsyncpa %s1734, 1

</llo_original>
